<compile_context>
chip_gen: v5e
topology: v5e:2x2
jax: 0.10.0
libtpu: 0.0.40
codegen_flags: <defaults>
</compile_context>

<pallas_src>
import functools

import numpy as np
import jax
import jax.numpy as jnp
from jax.experimental import pallas as pl
from jax.experimental.pallas import tpu as pltpu


# ----------------------------------------------------------------------------
# Fused decoder kernel (one grid step per batch element)
# ----------------------------------------------------------------------------
def _decoder_kernel(x_ref,
                    w_r1a_ref, b_r1a_ref, w_r1b_ref, b_r1b_ref,
                    w_r2a_ref, b_r2a_ref, w_r2b_ref, b_r2b_ref,
                    w_ct1_ref, b_ct1_ref, w_ct2_ref, b_ct2_ref,
                    out_ref,
                    pad_ref, gpad_ref,
                    *, H, W, C):
    HW = H * W
    f32 = jnp.float32

    # Zero the padded scratch buffers once per grid step.  Only interiors are
    # rewritten below, so the zero borders provide the conv padding.
    pad_ref[...] = jnp.zeros((H + 2, W + 2, C), f32)
    gpad_ref[...] = jnp.zeros((2, 2, H + 2, W + 2, C), f32)

    def mm(a, b):
        return jnp.dot(a, b, preferred_element_type=f32)

    def im2col3x3():
        # 3x3 taps over the zero-padded activation held in pad_ref -> (HW, 9C)
        blocks = []
        for dy in range(3):
            for dx in range(3):
                blocks.append(pad_ref[dy:dy + H, dx:dx + W, :].reshape(HW, C))
        return jnp.concatenate(blocks, axis=-1)

    def residual(h2d, w1_ref, b1_ref, w2_ref, b2_ref):
        # relu( conv1x1( relu( conv3x3(h) ) ) + h ) ; h2d is (HW, C)
        pad_ref[1:H + 1, 1:W + 1, :] = h2d.reshape(H, W, C)
        m = im2col3x3()                                        # (HW, 9C)
        t = jnp.maximum(mm(m, w1_ref[...]) + b1_ref[0], 0.0)   # conv3x3 + ReLU
        t = mm(t, w2_ref[...]) + b2_ref[0]                     # conv1x1
        return jnp.maximum(t + h2d, 0.0)

    # ---------------- residual blocks (all VMEM resident) -------------------
    h = x_ref[0].reshape(HW, C)
    h = residual(h, w_r1a_ref, b_r1a_ref, w_r1b_ref, b_r1b_ref)
    h = residual(h, w_r2a_ref, b_r2a_ref, w_r2b_ref, b_r2b_ref)

    # ---------------- ConvTranspose2d(4, s2, p1) + ReLU ---------------------
    # Phase decomposition: y1[2i+py, 2j+px, :] = relu( im2col[i,j] @ Wct1[py,px] + b ).
    # The four parity phases are stored phase-major (and zero padded by 1) in
    # gpad so the second transposed conv can tap them with static slices only.
    pad_ref[1:H + 1, 1:W + 1, :] = h.reshape(H, W, C)
    m = im2col3x3()                                            # (HW, 9C)
    for py in range(2):
        for px in range(2):
            g = jnp.maximum(mm(m, w_ct1_ref[2 * py + px]) + b_ct1_ref[0], 0.0)
            gpad_ref[py, px, 1:H + 1, 1:W + 1, :] = g.reshape(H, W, C)

    # ---------------- ConvTranspose2d(4, s2, p1)  (final, no ReLU) ----------
    # Output index: (4m + 2uy + qy, 4n + 2vx + qx).  For each input parity
    # (uy, vx) a single (HW, 9C) @ (9C, 4*Cout) matmul emits all output
    # parities (qy, qx) folded into the channel axis.
    outs = []
    for uy in range(2):
        for vx in range(2):
            blocks = []
            for ti in range(3):
                t_ = uy - 1 + ti
                r0 = 1 + (t_ // 2)          # python floor-div: t_=-1 -> row 0 (zero pad)
                rp = t_ % 2
                for si in range(3):
                    s_ = vx - 1 + si
                    c0 = 1 + (s_ // 2)
                    sp = s_ % 2
                    blocks.append(
                        gpad_ref[rp, sp, r0:r0 + H, c0:c0 + W, :].reshape(HW, C))
            m2 = jnp.concatenate(blocks, axis=-1)               # (HW, 9C)
            outs.append(mm(m2, w_ct2_ref[...]) + b_ct2_ref[0])  # (HW, 4*Cout)

    # columns: (uy*2+vx)*4*Cout + (qy*2+qx)*Cout + c   (un-folded in the wrapper)
    out_ref[0] = jnp.concatenate(outs, axis=-1)


# ----------------------------------------------------------------------------
# One-time weight preprocessing (hoisted out of the forward path)
# ----------------------------------------------------------------------------
def _embed_deconv_weight(wt, phase_major):
    """ConvTranspose2d(k=4, s=2, p=1) weight (Cin, Cout, 4, 4) -> weight for a
    3x3 'valid' conv over the 1-zero-padded compact input that emits the four
    output-parity phases:
        y[2i+py, 2j+px, co] = sum_{dy,dx,ci} xpad[i+dy, j+dx, ci] * W[dy,dx,ci,py,px,co]
    Returned as (4, 9*Cin, Cout) if phase_major else (9*Cin, 4*Cout)."""
    wt = np.asarray(wt)
    Cin, Cout = wt.shape[0], wt.shape[1]
    wf = np.transpose(wt[:, :, ::-1, ::-1], (2, 3, 0, 1))   # flipped -> (ky,kx,ci,co)
    w = np.zeros((3, 3, Cin, 2, 2, Cout), np.float32)
    for dy in range(3):
        for dx in range(3):
            for py in range(2):
                for px in range(2):
                    if dy - py in (0, 1) and dx - px in (0, 1):
                        w[dy, dx, :, py, px, :] = wf[2 * dy - py, 2 * dx - px]
    if phase_major:
        w = np.transpose(w, (3, 4, 0, 1, 2, 5))             # (py,px,dy,dx,ci,co)
        return jnp.asarray(w.reshape(4, 9 * Cin, Cout))
    return jnp.asarray(w.reshape(9 * Cin, 4 * Cout))


def preprocess_params(params):
    """Call once when parameters are loaded; the forward path reuses the result."""
    def res(w1, b1, w2, b2):
        C = w1.shape[0]
        w1c = jnp.transpose(w1, (2, 3, 1, 0)).reshape(9 * C, C)   # (dy,dx,ci) x co
        w2c = jnp.transpose(w2[:, :, 0, 0], (1, 0))               # (ci, co)
        return (w1c, b1.reshape(1, C), w2c, b2.reshape(1, C))

    wt1, bt1 = params["ct1"]
    wt2, bt2 = params["ct2"]
    C = wt1.shape[0]
    C2 = wt2.shape[1]
    return (res(*params["res1"]) + res(*params["res2"]) +
            (_embed_deconv_weight(wt1, phase_major=True), bt1.reshape(1, C)) +
            (_embed_deconv_weight(wt2, phase_major=False),
             jnp.tile(bt2, 4).reshape(1, 4 * C2)))


# ----------------------------------------------------------------------------
# Forward pass (NCHW in / NCHW out, like PyTorch)
# ----------------------------------------------------------------------------
@jax.jit
def decoder_forward(x_nchw, prep):
    B, C, H, W = x_nchw.shape
    C2 = prep[-1].shape[-1] // 4
    x = jnp.transpose(x_nchw, (0, 2, 3, 1))                       # NCHW -> NHWC

    kernel = functools.partial(_decoder_kernel, H=H, W=W, C=C)
    y = pl.pallas_call(
        kernel,
        out_shape=jax.ShapeDtypeStruct((B, H * W, 16 * C2), jnp.float32),
        grid=(B,),
        in_specs=[
            pl.BlockSpec((1, H, W, C), lambda b: (b, 0, 0, 0)),
            pl.BlockSpec((9 * C, C), lambda b: (0, 0)),
            pl.BlockSpec((1, C), lambda b: (0, 0)),
            pl.BlockSpec((C, C), lambda b: (0, 0)),
            pl.BlockSpec((1, C), lambda b: (0, 0)),
            pl.BlockSpec((9 * C, C), lambda b: (0, 0)),
            pl.BlockSpec((1, C), lambda b: (0, 0)),
            pl.BlockSpec((C, C), lambda b: (0, 0)),
            pl.BlockSpec((1, C), lambda b: (0, 0)),
            pl.BlockSpec((4, 9 * C, C), lambda b: (0, 0, 0)),
            pl.BlockSpec((1, C), lambda b: (0, 0)),
            pl.BlockSpec((9 * C, 4 * C2), lambda b: (0, 0)),
            pl.BlockSpec((1, 4 * C2), lambda b: (0, 0)),
        ],
        out_specs=pl.BlockSpec((1, H * W, 16 * C2), lambda b: (b, 0, 0)),
        scratch_shapes=[
            pltpu.VMEM((H + 2, W + 2, C), jnp.float32),            # padded activations
            pltpu.VMEM((2, 2, H + 2, W + 2, C), jnp.float32),      # ct1 output, phase-major
        ],
        compiler_params=pltpu.CompilerParams(
            dimension_semantics=("parallel",)),
    )(x, *prep)

    # Un-fold the parity phases:
    #   row = m*W + n,  col = (uy*2+vx)*4*C2 + (qy*2+qx)*C2 + c
    #   -> out[b, c, 4m+2uy+qy, 4n+2vx+qx]
    y = y.reshape(B, H, W, 2, 2, 2, 2, C2)                 # (b, m, n, uy, vx, qy, qx, c)
    y = jnp.transpose(y, (0, 7, 1, 3, 5, 2, 4, 6))         # (b, c, m, uy, qy, n, vx, qx)
    return y.reshape(B, C2, 4 * H, 4 * W)                  # NCHW, like PyTorch


# ----------------------------------------------------------------------------
# Pure-JAX reference (mirrors PyTorch semantics exactly)
# ----------------------------------------------------------------------------
def _conv2d_ref(x, w, b, padding):
    y = jax.lax.conv_general_dilated(
        x, w, (1, 1), [(padding, padding)] * 2,
        dimension_numbers=("NCHW", "OIHW", "NCHW"))
    return y + b[None, :, None, None]


def _convT2d_ref(x, wt, b):
    w = jnp.transpose(jnp.flip(wt, (2, 3)), (1, 0, 2, 3))         # (Cout, Cin, K, K)
    y = jax.lax.conv_general_dilated(
        x, w, (1, 1), [(2, 2), (2, 2)], lhs_dilation=(2, 2),
        dimension_numbers=("NCHW", "OIHW", "NCHW"))
    return y + b[None, :, None, None]


def decoder_ref(x, params):
    def res(h, w1, b1, w2, b2):
        y = jax.nn.relu(_conv2d_ref(h, w1, b1, 1))
        y = _conv2d_ref(y, w2, b2, 0)
        return jax.nn.relu(y + h)
    r1 = res(x, *params["res1"])
    r2 = res(r1, *params["res2"])
    h = jax.nn.relu(_convT2d_ref(r2, *params["ct1"]))
    return _convT2d_ref(h, *params["ct2"])


# ----------------------------------------------------------------------------
# Deterministic parameter init (shapes from the module's __init__)
# ----------------------------------------------------------------------------
def init_params(key, hidden_dim, channel_size, scale=0.05):
    ks = jax.random.split(key, 12)
    n = lambda k, s: scale * jax.random.normal(k, s, jnp.float32)
    return {
        "res1": (n(ks[0], (hidden_dim, hidden_dim, 3, 3)), n(ks[1], (hidden_dim,)),
                 n(ks[2], (hidden_dim, hidden_dim, 1, 1)), n(ks[3], (hidden_dim,))),
        "res2": (n(ks[4], (hidden_dim, hidden_dim, 3, 3)), n(ks[5], (hidden_dim,)),
                 n(ks[6], (hidden_dim, hidden_dim, 1, 1)), n(ks[7], (hidden_dim,))),
        "ct1": (n(ks[8], (hidden_dim, hidden_dim, 4, 4)), n(ks[9], (hidden_dim,))),
        "ct2": (n(ks[10], (hidden_dim, channel_size, 4, 4)), n(ks[11], (channel_size,))),
    }


if __name__ == "__main__":
    B, hidden_dim, channel_size, H, W = 2, 32, 4, 8, 8
    key = jax.random.PRNGKey(0)
    pkey, xkey = jax.random.split(key)
    params = init_params(pkey, hidden_dim, channel_size)
    x = jax.random.normal(xkey, (B, hidden_dim, H, W), jnp.float32)   # NCHW, like PyTorch

    prep = preprocess_params(params)          # one-time, outside the forward path
    out = decoder_forward(x, prep)
    out = jax.block_until_ready(out)

    assert out.shape == (B, channel_size, 4 * H, 4 * W), out.shape
    ref = decoder_ref(x, params)
    np.testing.assert_allclose(np.asarray(out), np.asarray(ref), rtol=1e-4, atol=1e-4)
    print("KERNEL_OK")
</pallas_src>

<mosaic_0001>
module attributes {stable_mosaic.version = 11 : i64} {
  func.func @_decoder_kernel(%arg0: i32, %arg1: memref<1x8x8x32xf32, #tpu.memory_space<vmem>>, %arg2: memref<288x32xf32, #tpu.memory_space<vmem>>, %arg3: memref<1x32xf32, #tpu.memory_space<vmem>>, %arg4: memref<32x32xf32, #tpu.memory_space<vmem>>, %arg5: memref<1x32xf32, #tpu.memory_space<vmem>>, %arg6: memref<288x32xf32, #tpu.memory_space<vmem>>, %arg7: memref<1x32xf32, #tpu.memory_space<vmem>>, %arg8: memref<32x32xf32, #tpu.memory_space<vmem>>, %arg9: memref<1x32xf32, #tpu.memory_space<vmem>>, %arg10: memref<4x288x32xf32, #tpu.memory_space<vmem>>, %arg11: memref<1x32xf32, #tpu.memory_space<vmem>>, %arg12: memref<288x16xf32, #tpu.memory_space<vmem>>, %arg13: memref<1x16xf32, #tpu.memory_space<vmem>>, %arg14: memref<1x64x64xf32, #tpu.memory_space<vmem>>, %arg15: memref<10x10x32xf32, #tpu.memory_space<vmem>>, %arg16: memref<2x2x10x10x32xf32, #tpu.memory_space<vmem>>) attributes {dimension_semantics = [#tpu.dimension_semantics<parallel>], iteration_bounds = array<i64: 2>, scalar_prefetch = 0 : i64, scratch_operands = 2 : i64, tpu.core_type = #tpu.core_type<tc>, window_params = [{transform_indices = @transform_0, window_bounds = array<i64: 1, 8, 8, 32>}, {pipeline_mode = #tpu.pipeline_mode<synchronous>, transform_indices = @transform_1, window_bounds = array<i64: 288, 32>}, {pipeline_mode = #tpu.pipeline_mode<synchronous>, transform_indices = @transform_2, window_bounds = array<i64: 1, 32>}, {pipeline_mode = #tpu.pipeline_mode<synchronous>, transform_indices = @transform_3, window_bounds = array<i64: 32, 32>}, {pipeline_mode = #tpu.pipeline_mode<synchronous>, transform_indices = @transform_4, window_bounds = array<i64: 1, 32>}, {pipeline_mode = #tpu.pipeline_mode<synchronous>, transform_indices = @transform_5, window_bounds = array<i64: 288, 32>}, {pipeline_mode = #tpu.pipeline_mode<synchronous>, transform_indices = @transform_6, window_bounds = array<i64: 1, 32>}, {pipeline_mode = #tpu.pipeline_mode<synchronous>, transform_indices = @transform_7, window_bounds = array<i64: 32, 32>}, {pipeline_mode = #tpu.pipeline_mode<synchronous>, transform_indices = @transform_8, window_bounds = array<i64: 1, 32>}, {pipeline_mode = #tpu.pipeline_mode<synchronous>, transform_indices = @transform_9, window_bounds = array<i64: 4, 288, 32>}, {pipeline_mode = #tpu.pipeline_mode<synchronous>, transform_indices = @transform_10, window_bounds = array<i64: 1, 32>}, {pipeline_mode = #tpu.pipeline_mode<synchronous>, transform_indices = @transform_11, window_bounds = array<i64: 288, 16>}, {pipeline_mode = #tpu.pipeline_mode<synchronous>, transform_indices = @transform_12, window_bounds = array<i64: 1, 16>}, {transform_indices = @transform_13, window_bounds = array<i64: 1, 64, 64>}]} {
    %cst = arith.constant 0.000000e+00 : f32
    %0 = vector.broadcast %cst : f32 to vector<10x10x32xf32>
    %c0 = arith.constant 0 : index
    %c0_0 = arith.constant 0 : index
    %c0_1 = arith.constant 0 : index
    %1 = vector.load %arg15[%c0, %c0_0, %c0_1] : memref<10x10x32xf32, #tpu.memory_space<vmem>>, vector<10x10x32xf32>
    tpu.vector_store %arg15[%c0, %c0_0, %c0_1], %0 {strides = array<i32>} : memref<10x10x32xf32, #tpu.memory_space<vmem>>, vector<10x10x32xf32>,
    %cst_2 = arith.constant 0.000000e+00 : f32
    %2 = vector.broadcast %cst_2 : f32 to vector<2x2x10x10x32xf32>
    %c0_3 = arith.constant 0 : index
    %c0_4 = arith.constant 0 : index
    %c0_5 = arith.constant 0 : index
    %c0_6 = arith.constant 0 : index
    %c0_7 = arith.constant 0 : index
    %3 = vector.load %arg16[%c0_3, %c0_4, %c0_5, %c0_6, %c0_7] : memref<2x2x10x10x32xf32, #tpu.memory_space<vmem>>, vector<2x2x10x10x32xf32>
    tpu.vector_store %arg16[%c0_3, %c0_4, %c0_5, %c0_6, %c0_7], %2 {strides = array<i32>} : memref<2x2x10x10x32xf32, #tpu.memory_space<vmem>>, vector<2x2x10x10x32xf32>,
    %c0_8 = arith.constant 0 : index
    %c0_9 = arith.constant 0 : index
    %c0_10 = arith.constant 0 : index
    %c0_11 = arith.constant 0 : index
    %4 = vector.load %arg1[%c0_8, %c0_9, %c0_10, %c0_11] : memref<1x8x8x32xf32, #tpu.memory_space<vmem>>, vector<1x8x8x32xf32>
    %5 = vector.shape_cast %4 : vector<1x8x8x32xf32> to vector<8x8x32xf32>
    %6 = vector.shape_cast %5 : vector<8x8x32xf32> to vector<64x32xf32>
    %7 = vector.shape_cast %6 : vector<64x32xf32> to vector<8x8x32xf32>
    %c1 = arith.constant 1 : index
    %c1_12 = arith.constant 1 : index
    %c0_13 = arith.constant 0 : index
    %8 = vector.load %arg15[%c1, %c1_12, %c0_13] : memref<10x10x32xf32, #tpu.memory_space<vmem>>, vector<8x8x32xf32>
    tpu.vector_store %arg15[%c1, %c1_12, %c0_13], %7 {strides = array<i32>} : memref<10x10x32xf32, #tpu.memory_space<vmem>>, vector<8x8x32xf32>,
    %c0_14 = arith.constant 0 : index
    %c0_15 = arith.constant 0 : index
    %c0_16 = arith.constant 0 : index
    %9 = vector.load %arg15[%c0_14, %c0_15, %c0_16] : memref<10x10x32xf32, #tpu.memory_space<vmem>>, vector<8x8x32xf32>
    %10 = vector.shape_cast %9 : vector<8x8x32xf32> to vector<64x32xf32>
    %c0_17 = arith.constant 0 : index
    %c1_18 = arith.constant 1 : index
    %c0_19 = arith.constant 0 : index
    %11 = vector.load %arg15[%c0_17, %c1_18, %c0_19] : memref<10x10x32xf32, #tpu.memory_space<vmem>>, vector<8x8x32xf32>
    %12 = vector.shape_cast %11 : vector<8x8x32xf32> to vector<64x32xf32>
    %c0_20 = arith.constant 0 : index
    %c2 = arith.constant 2 : index
    %c0_21 = arith.constant 0 : index
    %13 = vector.load %arg15[%c0_20, %c2, %c0_21] : memref<10x10x32xf32, #tpu.memory_space<vmem>>, vector<8x8x32xf32>
    %14 = vector.shape_cast %13 : vector<8x8x32xf32> to vector<64x32xf32>
    %c1_22 = arith.constant 1 : index
    %c0_23 = arith.constant 0 : index
    %c0_24 = arith.constant 0 : index
    %15 = vector.load %arg15[%c1_22, %c0_23, %c0_24] : memref<10x10x32xf32, #tpu.memory_space<vmem>>, vector<8x8x32xf32>
    %16 = vector.shape_cast %15 : vector<8x8x32xf32> to vector<64x32xf32>
    %c1_25 = arith.constant 1 : index
    %c1_26 = arith.constant 1 : index
    %c0_27 = arith.constant 0 : index
    %17 = vector.load %arg15[%c1_25, %c1_26, %c0_27] : memref<10x10x32xf32, #tpu.memory_space<vmem>>, vector<8x8x32xf32>
    %18 = vector.shape_cast %17 : vector<8x8x32xf32> to vector<64x32xf32>
    %c1_28 = arith.constant 1 : index
    %c2_29 = arith.constant 2 : index
    %c0_30 = arith.constant 0 : index
    %19 = vector.load %arg15[%c1_28, %c2_29, %c0_30] : memref<10x10x32xf32, #tpu.memory_space<vmem>>, vector<8x8x32xf32>
    %20 = vector.shape_cast %19 : vector<8x8x32xf32> to vector<64x32xf32>
    %c2_31 = arith.constant 2 : index
    %c0_32 = arith.constant 0 : index
    %c0_33 = arith.constant 0 : index
    %21 = vector.load %arg15[%c2_31, %c0_32, %c0_33] : memref<10x10x32xf32, #tpu.memory_space<vmem>>, vector<8x8x32xf32>
    %22 = vector.shape_cast %21 : vector<8x8x32xf32> to vector<64x32xf32>
    %c2_34 = arith.constant 2 : index
    %c1_35 = arith.constant 1 : index
    %c0_36 = arith.constant 0 : index
    %23 = vector.load %arg15[%c2_34, %c1_35, %c0_36] : memref<10x10x32xf32, #tpu.memory_space<vmem>>, vector<8x8x32xf32>
    %24 = vector.shape_cast %23 : vector<8x8x32xf32> to vector<64x32xf32>
    %c2_37 = arith.constant 2 : index
    %c2_38 = arith.constant 2 : index
    %c0_39 = arith.constant 0 : index
    %25 = vector.load %arg15[%c2_37, %c2_38, %c0_39] : memref<10x10x32xf32, #tpu.memory_space<vmem>>, vector<8x8x32xf32>
    %26 = vector.shape_cast %25 : vector<8x8x32xf32> to vector<64x32xf32>
    %27 = tpu.concatenate %10, %12, %14, %16, %18, %20, %22, %24, %26 in 1 : vector<64x32xf32>, vector<64x32xf32>, vector<64x32xf32>, vector<64x32xf32>, vector<64x32xf32>, vector<64x32xf32>, vector<64x32xf32>, vector<64x32xf32>, vector<64x32xf32> -> vector<64x288xf32>
    %c0_40 = arith.constant 0 : index
    %c0_41 = arith.constant 0 : index
    %28 = vector.load %arg2[%c0_40, %c0_41] : memref<288x32xf32, #tpu.memory_space<vmem>>, vector<288x32xf32>
    %cst_42 = arith.constant dense<0.000000e+00> : vector<64x32xf32>
    %29 = tpu.matmul %27, %28, %cst_42 {dimension_numbers = #tpu.dot_dimension_numbers<[1], [0], [0], [1], [0, 0, 1, 1], [], []>} : vector<64x288xf32>, vector<288x32xf32>, vector<64x32xf32> -> vector<64x32xf32>
    %c0_43 = arith.constant 0 : index
    %c0_44 = arith.constant 0 : index
    %30 = vector.load %arg3[%c0_43, %c0_44] : memref<1x32xf32, #tpu.memory_space<vmem>>, vector<1x32xf32>
    %31 = vector.shape_cast %30 : vector<1x32xf32> to vector<32xf32>
    %32 = vector.shape_cast %31 : vector<32xf32> to vector<1x32xf32>
    %33 = vector.broadcast %32 : vector<1x32xf32> to vector<64x32xf32>
    %34 = arith.addf %29, %33 : vector<64x32xf32>
    %cst_45 = arith.constant 0.000000e+00 : f32
    %35 = vector.broadcast %cst_45 : f32 to vector<64x32xf32>
    %36 = arith.maximumf %34, %35 : vector<64x32xf32>
    %c0_46 = arith.constant 0 : index
    %c0_47 = arith.constant 0 : index
    %37 = vector.load %arg4[%c0_46, %c0_47] : memref<32x32xf32, #tpu.memory_space<vmem>>, vector<32x32xf32>
    %cst_48 = arith.constant dense<0.000000e+00> : vector<64x32xf32>
    %38 = tpu.matmul %36, %37, %cst_48 {dimension_numbers = #tpu.dot_dimension_numbers<[1], [0], [0], [1], [0, 0, 1, 1], [], []>} : vector<64x32xf32>, vector<32x32xf32>, vector<64x32xf32> -> vector<64x32xf32>
    %c0_49 = arith.constant 0 : index
    %c0_50 = arith.constant 0 : index
    %39 = vector.load %arg5[%c0_49, %c0_50] : memref<1x32xf32, #tpu.memory_space<vmem>>, vector<1x32xf32>
    %40 = vector.shape_cast %39 : vector<1x32xf32> to vector<32xf32>
    %41 = vector.shape_cast %40 : vector<32xf32> to vector<1x32xf32>
    %42 = vector.broadcast %41 : vector<1x32xf32> to vector<64x32xf32>
    %43 = arith.addf %38, %42 : vector<64x32xf32>
    %44 = arith.addf %43, %6 : vector<64x32xf32>
    %cst_51 = arith.constant 0.000000e+00 : f32
    %45 = vector.broadcast %cst_51 : f32 to vector<64x32xf32>
    %46 = arith.maximumf %44, %45 : vector<64x32xf32>
    %47 = vector.shape_cast %46 : vector<64x32xf32> to vector<8x8x32xf32>
    %c1_52 = arith.constant 1 : index
    %c1_53 = arith.constant 1 : index
    %c0_54 = arith.constant 0 : index
    %48 = vector.load %arg15[%c1_52, %c1_53, %c0_54] : memref<10x10x32xf32, #tpu.memory_space<vmem>>, vector<8x8x32xf32>
    tpu.vector_store %arg15[%c1_52, %c1_53, %c0_54], %47 {strides = array<i32>} : memref<10x10x32xf32, #tpu.memory_space<vmem>>, vector<8x8x32xf32>,
    %c0_55 = arith.constant 0 : index
    %c0_56 = arith.constant 0 : index
    %c0_57 = arith.constant 0 : index
    %49 = vector.load %arg15[%c0_55, %c0_56, %c0_57] : memref<10x10x32xf32, #tpu.memory_space<vmem>>, vector<8x8x32xf32>
    %50 = vector.shape_cast %49 : vector<8x8x32xf32> to vector<64x32xf32>
    %c0_58 = arith.constant 0 : index
    %c1_59 = arith.constant 1 : index
    %c0_60 = arith.constant 0 : index
    %51 = vector.load %arg15[%c0_58, %c1_59, %c0_60] : memref<10x10x32xf32, #tpu.memory_space<vmem>>, vector<8x8x32xf32>
    %52 = vector.shape_cast %51 : vector<8x8x32xf32> to vector<64x32xf32>
    %c0_61 = arith.constant 0 : index
    %c2_62 = arith.constant 2 : index
    %c0_63 = arith.constant 0 : index
    %53 = vector.load %arg15[%c0_61, %c2_62, %c0_63] : memref<10x10x32xf32, #tpu.memory_space<vmem>>, vector<8x8x32xf32>
    %54 = vector.shape_cast %53 : vector<8x8x32xf32> to vector<64x32xf32>
    %c1_64 = arith.constant 1 : index
    %c0_65 = arith.constant 0 : index
    %c0_66 = arith.constant 0 : index
    %55 = vector.load %arg15[%c1_64, %c0_65, %c0_66] : memref<10x10x32xf32, #tpu.memory_space<vmem>>, vector<8x8x32xf32>
    %56 = vector.shape_cast %55 : vector<8x8x32xf32> to vector<64x32xf32>
    %c1_67 = arith.constant 1 : index
    %c1_68 = arith.constant 1 : index
    %c0_69 = arith.constant 0 : index
    %57 = vector.load %arg15[%c1_67, %c1_68, %c0_69] : memref<10x10x32xf32, #tpu.memory_space<vmem>>, vector<8x8x32xf32>
    %58 = vector.shape_cast %57 : vector<8x8x32xf32> to vector<64x32xf32>
    %c1_70 = arith.constant 1 : index
    %c2_71 = arith.constant 2 : index
    %c0_72 = arith.constant 0 : index
    %59 = vector.load %arg15[%c1_70, %c2_71, %c0_72] : memref<10x10x32xf32, #tpu.memory_space<vmem>>, vector<8x8x32xf32>
    %60 = vector.shape_cast %59 : vector<8x8x32xf32> to vector<64x32xf32>
    %c2_73 = arith.constant 2 : index
    %c0_74 = arith.constant 0 : index
    %c0_75 = arith.constant 0 : index
    %61 = vector.load %arg15[%c2_73, %c0_74, %c0_75] : memref<10x10x32xf32, #tpu.memory_space<vmem>>, vector<8x8x32xf32>
    %62 = vector.shape_cast %61 : vector<8x8x32xf32> to vector<64x32xf32>
    %c2_76 = arith.constant 2 : index
    %c1_77 = arith.constant 1 : index
    %c0_78 = arith.constant 0 : index
    %63 = vector.load %arg15[%c2_76, %c1_77, %c0_78] : memref<10x10x32xf32, #tpu.memory_space<vmem>>, vector<8x8x32xf32>
    %64 = vector.shape_cast %63 : vector<8x8x32xf32> to vector<64x32xf32>
    %c2_79 = arith.constant 2 : index
    %c2_80 = arith.constant 2 : index
    %c0_81 = arith.constant 0 : index
    %65 = vector.load %arg15[%c2_79, %c2_80, %c0_81] : memref<10x10x32xf32, #tpu.memory_space<vmem>>, vector<8x8x32xf32>
    %66 = vector.shape_cast %65 : vector<8x8x32xf32> to vector<64x32xf32>
    %67 = tpu.concatenate %50, %52, %54, %56, %58, %60, %62, %64, %66 in 1 : vector<64x32xf32>, vector<64x32xf32>, vector<64x32xf32>, vector<64x32xf32>, vector<64x32xf32>, vector<64x32xf32>, vector<64x32xf32>, vector<64x32xf32>, vector<64x32xf32> -> vector<64x288xf32>
    %c0_82 = arith.constant 0 : index
    %c0_83 = arith.constant 0 : index
    %68 = vector.load %arg6[%c0_82, %c0_83] : memref<288x32xf32, #tpu.memory_space<vmem>>, vector<288x32xf32>
    %cst_84 = arith.constant dense<0.000000e+00> : vector<64x32xf32>
    %69 = tpu.matmul %67, %68, %cst_84 {dimension_numbers = #tpu.dot_dimension_numbers<[1], [0], [0], [1], [0, 0, 1, 1], [], []>} : vector<64x288xf32>, vector<288x32xf32>, vector<64x32xf32> -> vector<64x32xf32>
    %c0_85 = arith.constant 0 : index
    %c0_86 = arith.constant 0 : index
    %70 = vector.load %arg7[%c0_85, %c0_86] : memref<1x32xf32, #tpu.memory_space<vmem>>, vector<1x32xf32>
    %71 = vector.shape_cast %70 : vector<1x32xf32> to vector<32xf32>
    %72 = vector.shape_cast %71 : vector<32xf32> to vector<1x32xf32>
    %73 = vector.broadcast %72 : vector<1x32xf32> to vector<64x32xf32>
    %74 = arith.addf %69, %73 : vector<64x32xf32>
    %cst_87 = arith.constant 0.000000e+00 : f32
    %75 = vector.broadcast %cst_87 : f32 to vector<64x32xf32>
    %76 = arith.maximumf %74, %75 : vector<64x32xf32>
    %c0_88 = arith.constant 0 : index
    %c0_89 = arith.constant 0 : index
    %77 = vector.load %arg8[%c0_88, %c0_89] : memref<32x32xf32, #tpu.memory_space<vmem>>, vector<32x32xf32>
    %cst_90 = arith.constant dense<0.000000e+00> : vector<64x32xf32>
    %78 = tpu.matmul %76, %77, %cst_90 {dimension_numbers = #tpu.dot_dimension_numbers<[1], [0], [0], [1], [0, 0, 1, 1], [], []>} : vector<64x32xf32>, vector<32x32xf32>, vector<64x32xf32> -> vector<64x32xf32>
    %c0_91 = arith.constant 0 : index
    %c0_92 = arith.constant 0 : index
    %79 = vector.load %arg9[%c0_91, %c0_92] : memref<1x32xf32, #tpu.memory_space<vmem>>, vector<1x32xf32>
    %80 = vector.shape_cast %79 : vector<1x32xf32> to vector<32xf32>
    %81 = vector.shape_cast %80 : vector<32xf32> to vector<1x32xf32>
    %82 = vector.broadcast %81 : vector<1x32xf32> to vector<64x32xf32>
    %83 = arith.addf %78, %82 : vector<64x32xf32>
    %84 = arith.addf %83, %46 : vector<64x32xf32>
    %cst_93 = arith.constant 0.000000e+00 : f32
    %85 = vector.broadcast %cst_93 : f32 to vector<64x32xf32>
    %86 = arith.maximumf %84, %85 : vector<64x32xf32>
    %87 = vector.shape_cast %86 : vector<64x32xf32> to vector<8x8x32xf32>
    %c1_94 = arith.constant 1 : index
    %c1_95 = arith.constant 1 : index
    %c0_96 = arith.constant 0 : index
    %88 = vector.load %arg15[%c1_94, %c1_95, %c0_96] : memref<10x10x32xf32, #tpu.memory_space<vmem>>, vector<8x8x32xf32>
    tpu.vector_store %arg15[%c1_94, %c1_95, %c0_96], %87 {strides = array<i32>} : memref<10x10x32xf32, #tpu.memory_space<vmem>>, vector<8x8x32xf32>,
    %c0_97 = arith.constant 0 : index
    %c0_98 = arith.constant 0 : index
    %c0_99 = arith.constant 0 : index
    %89 = vector.load %arg15[%c0_97, %c0_98, %c0_99] : memref<10x10x32xf32, #tpu.memory_space<vmem>>, vector<8x8x32xf32>
    %90 = vector.shape_cast %89 : vector<8x8x32xf32> to vector<64x32xf32>
    %c0_100 = arith.constant 0 : index
    %c1_101 = arith.constant 1 : index
    %c0_102 = arith.constant 0 : index
    %91 = vector.load %arg15[%c0_100, %c1_101, %c0_102] : memref<10x10x32xf32, #tpu.memory_space<vmem>>, vector<8x8x32xf32>
    %92 = vector.shape_cast %91 : vector<8x8x32xf32> to vector<64x32xf32>
    %c0_103 = arith.constant 0 : index
    %c2_104 = arith.constant 2 : index
    %c0_105 = arith.constant 0 : index
    %93 = vector.load %arg15[%c0_103, %c2_104, %c0_105] : memref<10x10x32xf32, #tpu.memory_space<vmem>>, vector<8x8x32xf32>
    %94 = vector.shape_cast %93 : vector<8x8x32xf32> to vector<64x32xf32>
    %c1_106 = arith.constant 1 : index
    %c0_107 = arith.constant 0 : index
    %c0_108 = arith.constant 0 : index
    %95 = vector.load %arg15[%c1_106, %c0_107, %c0_108] : memref<10x10x32xf32, #tpu.memory_space<vmem>>, vector<8x8x32xf32>
    %96 = vector.shape_cast %95 : vector<8x8x32xf32> to vector<64x32xf32>
    %c1_109 = arith.constant 1 : index
    %c1_110 = arith.constant 1 : index
    %c0_111 = arith.constant 0 : index
    %97 = vector.load %arg15[%c1_109, %c1_110, %c0_111] : memref<10x10x32xf32, #tpu.memory_space<vmem>>, vector<8x8x32xf32>
    %98 = vector.shape_cast %97 : vector<8x8x32xf32> to vector<64x32xf32>
    %c1_112 = arith.constant 1 : index
    %c2_113 = arith.constant 2 : index
    %c0_114 = arith.constant 0 : index
    %99 = vector.load %arg15[%c1_112, %c2_113, %c0_114] : memref<10x10x32xf32, #tpu.memory_space<vmem>>, vector<8x8x32xf32>
    %100 = vector.shape_cast %99 : vector<8x8x32xf32> to vector<64x32xf32>
    %c2_115 = arith.constant 2 : index
    %c0_116 = arith.constant 0 : index
    %c0_117 = arith.constant 0 : index
    %101 = vector.load %arg15[%c2_115, %c0_116, %c0_117] : memref<10x10x32xf32, #tpu.memory_space<vmem>>, vector<8x8x32xf32>
    %102 = vector.shape_cast %101 : vector<8x8x32xf32> to vector<64x32xf32>
    %c2_118 = arith.constant 2 : index
    %c1_119 = arith.constant 1 : index
    %c0_120 = arith.constant 0 : index
    %103 = vector.load %arg15[%c2_118, %c1_119, %c0_120] : memref<10x10x32xf32, #tpu.memory_space<vmem>>, vector<8x8x32xf32>
    %104 = vector.shape_cast %103 : vector<8x8x32xf32> to vector<64x32xf32>
    %c2_121 = arith.constant 2 : index
    %c2_122 = arith.constant 2 : index
    %c0_123 = arith.constant 0 : index
    %105 = vector.load %arg15[%c2_121, %c2_122, %c0_123] : memref<10x10x32xf32, #tpu.memory_space<vmem>>, vector<8x8x32xf32>
    %106 = vector.shape_cast %105 : vector<8x8x32xf32> to vector<64x32xf32>
    %107 = tpu.concatenate %90, %92, %94, %96, %98, %100, %102, %104, %106 in 1 : vector<64x32xf32>, vector<64x32xf32>, vector<64x32xf32>, vector<64x32xf32>, vector<64x32xf32>, vector<64x32xf32>, vector<64x32xf32>, vector<64x32xf32>, vector<64x32xf32> -> vector<64x288xf32>
    %c0_124 = arith.constant 0 : index
    %c0_125 = arith.constant 0 : index
    %c0_126 = arith.constant 0 : index
    %108 = vector.load %arg10[%c0_124, %c0_125, %c0_126] : memref<4x288x32xf32, #tpu.memory_space<vmem>>, vector<1x288x32xf32>
    %109 = vector.shape_cast %108 : vector<1x288x32xf32> to vector<288x32xf32>
    %cst_127 = arith.constant dense<0.000000e+00> : vector<64x32xf32>
    %110 = tpu.matmul %107, %109, %cst_127 {dimension_numbers = #tpu.dot_dimension_numbers<[1], [0], [0], [1], [0, 0, 1, 1], [], []>} : vector<64x288xf32>, vector<288x32xf32>, vector<64x32xf32> -> vector<64x32xf32>
    %c0_128 = arith.constant 0 : index
    %c0_129 = arith.constant 0 : index
    %111 = vector.load %arg11[%c0_128, %c0_129] : memref<1x32xf32, #tpu.memory_space<vmem>>, vector<1x32xf32>
    %112 = vector.shape_cast %111 : vector<1x32xf32> to vector<32xf32>
    %113 = vector.shape_cast %112 : vector<32xf32> to vector<1x32xf32>
    %114 = vector.broadcast %113 : vector<1x32xf32> to vector<64x32xf32>
    %115 = arith.addf %110, %114 : vector<64x32xf32>
    %cst_130 = arith.constant 0.000000e+00 : f32
    %116 = vector.broadcast %cst_130 : f32 to vector<64x32xf32>
    %117 = arith.maximumf %115, %116 : vector<64x32xf32>
    %118 = vector.shape_cast %117 : vector<64x32xf32> to vector<8x8x32xf32>
    %c0_131 = arith.constant 0 : index
    %c0_132 = arith.constant 0 : index
    %c1_133 = arith.constant 1 : index
    %c1_134 = arith.constant 1 : index
    %c0_135 = arith.constant 0 : index
    %119 = vector.load %arg16[%c0_131, %c0_132, %c1_133, %c1_134, %c0_135] : memref<2x2x10x10x32xf32, #tpu.memory_space<vmem>>, vector<1x1x8x8x32xf32>
    %120 = vector.shape_cast %119 : vector<1x1x8x8x32xf32> to vector<8x8x32xf32>
    %121 = vector.shape_cast %118 : vector<8x8x32xf32> to vector<1x1x8x8x32xf32>
    tpu.vector_store %arg16[%c0_131, %c0_132, %c1_133, %c1_134, %c0_135], %121 {strides = array<i32>} : memref<2x2x10x10x32xf32, #tpu.memory_space<vmem>>, vector<1x1x8x8x32xf32>,
    %c1_136 = arith.constant 1 : index
    %c0_137 = arith.constant 0 : index
    %c0_138 = arith.constant 0 : index
    %122 = vector.load %arg10[%c1_136, %c0_137, %c0_138] : memref<4x288x32xf32, #tpu.memory_space<vmem>>, vector<1x288x32xf32>
    %123 = vector.shape_cast %122 : vector<1x288x32xf32> to vector<288x32xf32>
    %cst_139 = arith.constant dense<0.000000e+00> : vector<64x32xf32>
    %124 = tpu.matmul %107, %123, %cst_139 {dimension_numbers = #tpu.dot_dimension_numbers<[1], [0], [0], [1], [0, 0, 1, 1], [], []>} : vector<64x288xf32>, vector<288x32xf32>, vector<64x32xf32> -> vector<64x32xf32>
    %c0_140 = arith.constant 0 : index
    %c0_141 = arith.constant 0 : index
    %125 = vector.load %arg11[%c0_140, %c0_141] : memref<1x32xf32, #tpu.memory_space<vmem>>, vector<1x32xf32>
    %126 = vector.shape_cast %125 : vector<1x32xf32> to vector<32xf32>
    %127 = vector.shape_cast %126 : vector<32xf32> to vector<1x32xf32>
    %128 = vector.broadcast %127 : vector<1x32xf32> to vector<64x32xf32>
    %129 = arith.addf %124, %128 : vector<64x32xf32>
    %cst_142 = arith.constant 0.000000e+00 : f32
    %130 = vector.broadcast %cst_142 : f32 to vector<64x32xf32>
    %131 = arith.maximumf %129, %130 : vector<64x32xf32>
    %132 = vector.shape_cast %131 : vector<64x32xf32> to vector<8x8x32xf32>
    %c0_143 = arith.constant 0 : index
    %c1_144 = arith.constant 1 : index
    %c1_145 = arith.constant 1 : index
    %c1_146 = arith.constant 1 : index
    %c0_147 = arith.constant 0 : index
    %133 = vector.load %arg16[%c0_143, %c1_144, %c1_145, %c1_146, %c0_147] : memref<2x2x10x10x32xf32, #tpu.memory_space<vmem>>, vector<1x1x8x8x32xf32>
    %134 = vector.shape_cast %133 : vector<1x1x8x8x32xf32> to vector<8x8x32xf32>
    %135 = vector.shape_cast %132 : vector<8x8x32xf32> to vector<1x1x8x8x32xf32>
    tpu.vector_store %arg16[%c0_143, %c1_144, %c1_145, %c1_146, %c0_147], %135 {strides = array<i32>} : memref<2x2x10x10x32xf32, #tpu.memory_space<vmem>>, vector<1x1x8x8x32xf32>,
    %c2_148 = arith.constant 2 : index
    %c0_149 = arith.constant 0 : index
    %c0_150 = arith.constant 0 : index
    %136 = vector.load %arg10[%c2_148, %c0_149, %c0_150] : memref<4x288x32xf32, #tpu.memory_space<vmem>>, vector<1x288x32xf32>
    %137 = vector.shape_cast %136 : vector<1x288x32xf32> to vector<288x32xf32>
    %cst_151 = arith.constant dense<0.000000e+00> : vector<64x32xf32>
    %138 = tpu.matmul %107, %137, %cst_151 {dimension_numbers = #tpu.dot_dimension_numbers<[1], [0], [0], [1], [0, 0, 1, 1], [], []>} : vector<64x288xf32>, vector<288x32xf32>, vector<64x32xf32> -> vector<64x32xf32>
    %c0_152 = arith.constant 0 : index
    %c0_153 = arith.constant 0 : index
    %139 = vector.load %arg11[%c0_152, %c0_153] : memref<1x32xf32, #tpu.memory_space<vmem>>, vector<1x32xf32>
    %140 = vector.shape_cast %139 : vector<1x32xf32> to vector<32xf32>
    %141 = vector.shape_cast %140 : vector<32xf32> to vector<1x32xf32>
    %142 = vector.broadcast %141 : vector<1x32xf32> to vector<64x32xf32>
    %143 = arith.addf %138, %142 : vector<64x32xf32>
    %cst_154 = arith.constant 0.000000e+00 : f32
    %144 = vector.broadcast %cst_154 : f32 to vector<64x32xf32>
    %145 = arith.maximumf %143, %144 : vector<64x32xf32>
    %146 = vector.shape_cast %145 : vector<64x32xf32> to vector<8x8x32xf32>
    %c1_155 = arith.constant 1 : index
    %c0_156 = arith.constant 0 : index
    %c1_157 = arith.constant 1 : index
    %c1_158 = arith.constant 1 : index
    %c0_159 = arith.constant 0 : index
    %147 = vector.load %arg16[%c1_155, %c0_156, %c1_157, %c1_158, %c0_159] : memref<2x2x10x10x32xf32, #tpu.memory_space<vmem>>, vector<1x1x8x8x32xf32>
    %148 = vector.shape_cast %147 : vector<1x1x8x8x32xf32> to vector<8x8x32xf32>
    %149 = vector.shape_cast %146 : vector<8x8x32xf32> to vector<1x1x8x8x32xf32>
    tpu.vector_store %arg16[%c1_155, %c0_156, %c1_157, %c1_158, %c0_159], %149 {strides = array<i32>} : memref<2x2x10x10x32xf32, #tpu.memory_space<vmem>>, vector<1x1x8x8x32xf32>,
    %c3 = arith.constant 3 : index
    %c0_160 = arith.constant 0 : index
    %c0_161 = arith.constant 0 : index
    %150 = vector.load %arg10[%c3, %c0_160, %c0_161] : memref<4x288x32xf32, #tpu.memory_space<vmem>>, vector<1x288x32xf32>
    %151 = vector.shape_cast %150 : vector<1x288x32xf32> to vector<288x32xf32>
    %cst_162 = arith.constant dense<0.000000e+00> : vector<64x32xf32>
    %152 = tpu.matmul %107, %151, %cst_162 {dimension_numbers = #tpu.dot_dimension_numbers<[1], [0], [0], [1], [0, 0, 1, 1], [], []>} : vector<64x288xf32>, vector<288x32xf32>, vector<64x32xf32> -> vector<64x32xf32>
    %c0_163 = arith.constant 0 : index
    %c0_164 = arith.constant 0 : index
    %153 = vector.load %arg11[%c0_163, %c0_164] : memref<1x32xf32, #tpu.memory_space<vmem>>, vector<1x32xf32>
    %154 = vector.shape_cast %153 : vector<1x32xf32> to vector<32xf32>
    %155 = vector.shape_cast %154 : vector<32xf32> to vector<1x32xf32>
    %156 = vector.broadcast %155 : vector<1x32xf32> to vector<64x32xf32>
    %157 = arith.addf %152, %156 : vector<64x32xf32>
    %cst_165 = arith.constant 0.000000e+00 : f32
    %158 = vector.broadcast %cst_165 : f32 to vector<64x32xf32>
    %159 = arith.maximumf %157, %158 : vector<64x32xf32>
    %160 = vector.shape_cast %159 : vector<64x32xf32> to vector<8x8x32xf32>
    %c1_166 = arith.constant 1 : index
    %c1_167 = arith.constant 1 : index
    %c1_168 = arith.constant 1 : index
    %c1_169 = arith.constant 1 : index
    %c0_170 = arith.constant 0 : index
    %161 = vector.load %arg16[%c1_166, %c1_167, %c1_168, %c1_169, %c0_170] : memref<2x2x10x10x32xf32, #tpu.memory_space<vmem>>, vector<1x1x8x8x32xf32>
    %162 = vector.shape_cast %161 : vector<1x1x8x8x32xf32> to vector<8x8x32xf32>
    %163 = vector.shape_cast %160 : vector<8x8x32xf32> to vector<1x1x8x8x32xf32>
    tpu.vector_store %arg16[%c1_166, %c1_167, %c1_168, %c1_169, %c0_170], %163 {strides = array<i32>} : memref<2x2x10x10x32xf32, #tpu.memory_space<vmem>>, vector<1x1x8x8x32xf32>,
    %c1_171 = arith.constant 1 : index
    %c1_172 = arith.constant 1 : index
    %c0_173 = arith.constant 0 : index
    %c0_174 = arith.constant 0 : index
    %c0_175 = arith.constant 0 : index
    %164 = vector.load %arg16[%c1_171, %c1_172, %c0_173, %c0_174, %c0_175] : memref<2x2x10x10x32xf32, #tpu.memory_space<vmem>>, vector<1x1x8x8x32xf32>
    %165 = vector.shape_cast %164 : vector<1x1x8x8x32xf32> to vector<8x8x32xf32>
    %166 = vector.shape_cast %165 : vector<8x8x32xf32> to vector<64x32xf32>
    %c1_176 = arith.constant 1 : index
    %c0_177 = arith.constant 0 : index
    %c0_178 = arith.constant 0 : index
    %c1_179 = arith.constant 1 : index
    %c0_180 = arith.constant 0 : index
    %167 = vector.load %arg16[%c1_176, %c0_177, %c0_178, %c1_179, %c0_180] : memref<2x2x10x10x32xf32, #tpu.memory_space<vmem>>, vector<1x1x8x8x32xf32>
    %168 = vector.shape_cast %167 : vector<1x1x8x8x32xf32> to vector<8x8x32xf32>
    %169 = vector.shape_cast %168 : vector<8x8x32xf32> to vector<64x32xf32>
    %c1_181 = arith.constant 1 : index
    %c1_182 = arith.constant 1 : index
    %c0_183 = arith.constant 0 : index
    %c1_184 = arith.constant 1 : index
    %c0_185 = arith.constant 0 : index
    %170 = vector.load %arg16[%c1_181, %c1_182, %c0_183, %c1_184, %c0_185] : memref<2x2x10x10x32xf32, #tpu.memory_space<vmem>>, vector<1x1x8x8x32xf32>
    %171 = vector.shape_cast %170 : vector<1x1x8x8x32xf32> to vector<8x8x32xf32>
    %172 = vector.shape_cast %171 : vector<8x8x32xf32> to vector<64x32xf32>
    %c0_186 = arith.constant 0 : index
    %c1_187 = arith.constant 1 : index
    %c1_188 = arith.constant 1 : index
    %c0_189 = arith.constant 0 : index
    %c0_190 = arith.constant 0 : index
    %173 = vector.load %arg16[%c0_186, %c1_187, %c1_188, %c0_189, %c0_190] : memref<2x2x10x10x32xf32, #tpu.memory_space<vmem>>, vector<1x1x8x8x32xf32>
    %174 = vector.shape_cast %173 : vector<1x1x8x8x32xf32> to vector<8x8x32xf32>
    %175 = vector.shape_cast %174 : vector<8x8x32xf32> to vector<64x32xf32>
    %c0_191 = arith.constant 0 : index
    %c0_192 = arith.constant 0 : index
    %c1_193 = arith.constant 1 : index
    %c1_194 = arith.constant 1 : index
    %c0_195 = arith.constant 0 : index
    %176 = vector.load %arg16[%c0_191, %c0_192, %c1_193, %c1_194, %c0_195] : memref<2x2x10x10x32xf32, #tpu.memory_space<vmem>>, vector<1x1x8x8x32xf32>
    %177 = vector.shape_cast %176 : vector<1x1x8x8x32xf32> to vector<8x8x32xf32>
    %178 = vector.shape_cast %177 : vector<8x8x32xf32> to vector<64x32xf32>
    %c0_196 = arith.constant 0 : index
    %c1_197 = arith.constant 1 : index
    %c1_198 = arith.constant 1 : index
    %c1_199 = arith.constant 1 : index
    %c0_200 = arith.constant 0 : index
    %179 = vector.load %arg16[%c0_196, %c1_197, %c1_198, %c1_199, %c0_200] : memref<2x2x10x10x32xf32, #tpu.memory_space<vmem>>, vector<1x1x8x8x32xf32>
    %180 = vector.shape_cast %179 : vector<1x1x8x8x32xf32> to vector<8x8x32xf32>
    %181 = vector.shape_cast %180 : vector<8x8x32xf32> to vector<64x32xf32>
    %c1_201 = arith.constant 1 : index
    %c1_202 = arith.constant 1 : index
    %c1_203 = arith.constant 1 : index
    %c0_204 = arith.constant 0 : index
    %c0_205 = arith.constant 0 : index
    %182 = vector.load %arg16[%c1_201, %c1_202, %c1_203, %c0_204, %c0_205] : memref<2x2x10x10x32xf32, #tpu.memory_space<vmem>>, vector<1x1x8x8x32xf32>
    %183 = vector.shape_cast %182 : vector<1x1x8x8x32xf32> to vector<8x8x32xf32>
    %184 = vector.shape_cast %183 : vector<8x8x32xf32> to vector<64x32xf32>
    %c1_206 = arith.constant 1 : index
    %c0_207 = arith.constant 0 : index
    %c1_208 = arith.constant 1 : index
    %c1_209 = arith.constant 1 : index
    %c0_210 = arith.constant 0 : index
    %185 = vector.load %arg16[%c1_206, %c0_207, %c1_208, %c1_209, %c0_210] : memref<2x2x10x10x32xf32, #tpu.memory_space<vmem>>, vector<1x1x8x8x32xf32>
    %186 = vector.shape_cast %185 : vector<1x1x8x8x32xf32> to vector<8x8x32xf32>
    %187 = vector.shape_cast %186 : vector<8x8x32xf32> to vector<64x32xf32>
    %c1_211 = arith.constant 1 : index
    %c1_212 = arith.constant 1 : index
    %c1_213 = arith.constant 1 : index
    %c1_214 = arith.constant 1 : index
    %c0_215 = arith.constant 0 : index
    %188 = vector.load %arg16[%c1_211, %c1_212, %c1_213, %c1_214, %c0_215] : memref<2x2x10x10x32xf32, #tpu.memory_space<vmem>>, vector<1x1x8x8x32xf32>
    %189 = vector.shape_cast %188 : vector<1x1x8x8x32xf32> to vector<8x8x32xf32>
    %190 = vector.shape_cast %189 : vector<8x8x32xf32> to vector<64x32xf32>
    %191 = tpu.concatenate %166, %169, %172, %175, %178, %181, %184, %187, %190 in 1 : vector<64x32xf32>, vector<64x32xf32>, vector<64x32xf32>, vector<64x32xf32>, vector<64x32xf32>, vector<64x32xf32>, vector<64x32xf32>, vector<64x32xf32>, vector<64x32xf32> -> vector<64x288xf32>
    %c0_216 = arith.constant 0 : index
    %c0_217 = arith.constant 0 : index
    %192 = vector.load %arg12[%c0_216, %c0_217] : memref<288x16xf32, #tpu.memory_space<vmem>>, vector<288x16xf32>
    %cst_218 = arith.constant dense<0.000000e+00> : vector<64x16xf32>
    %193 = tpu.matmul %191, %192, %cst_218 {dimension_numbers = #tpu.dot_dimension_numbers<[1], [0], [0], [1], [0, 0, 1, 1], [], []>} : vector<64x288xf32>, vector<288x16xf32>, vector<64x16xf32> -> vector<64x16xf32>
    %c0_219 = arith.constant 0 : index
    %c0_220 = arith.constant 0 : index
    %194 = vector.load %arg13[%c0_219, %c0_220] : memref<1x16xf32, #tpu.memory_space<vmem>>, vector<1x16xf32>
    %195 = vector.shape_cast %194 : vector<1x16xf32> to vector<16xf32>
    %196 = vector.shape_cast %195 : vector<16xf32> to vector<1x16xf32>
    %197 = vector.broadcast %196 : vector<1x16xf32> to vector<64x16xf32>
    %198 = arith.addf %193, %197 : vector<64x16xf32>
    %c1_221 = arith.constant 1 : index
    %c0_222 = arith.constant 0 : index
    %c0_223 = arith.constant 0 : index
    %c1_224 = arith.constant 1 : index
    %c0_225 = arith.constant 0 : index
    %199 = vector.load %arg16[%c1_221, %c0_222, %c0_223, %c1_224, %c0_225] : memref<2x2x10x10x32xf32, #tpu.memory_space<vmem>>, vector<1x1x8x8x32xf32>
    %200 = vector.shape_cast %199 : vector<1x1x8x8x32xf32> to vector<8x8x32xf32>
    %201 = vector.shape_cast %200 : vector<8x8x32xf32> to vector<64x32xf32>
    %c1_226 = arith.constant 1 : index
    %c1_227 = arith.constant 1 : index
    %c0_228 = arith.constant 0 : index
    %c1_229 = arith.constant 1 : index
    %c0_230 = arith.constant 0 : index
    %202 = vector.load %arg16[%c1_226, %c1_227, %c0_228, %c1_229, %c0_230] : memref<2x2x10x10x32xf32, #tpu.memory_space<vmem>>, vector<1x1x8x8x32xf32>
    %203 = vector.shape_cast %202 : vector<1x1x8x8x32xf32> to vector<8x8x32xf32>
    %204 = vector.shape_cast %203 : vector<8x8x32xf32> to vector<64x32xf32>
    %c1_231 = arith.constant 1 : index
    %c0_232 = arith.constant 0 : index
    %c0_233 = arith.constant 0 : index
    %c2_234 = arith.constant 2 : index
    %c0_235 = arith.constant 0 : index
    %205 = vector.load %arg16[%c1_231, %c0_232, %c0_233, %c2_234, %c0_235] : memref<2x2x10x10x32xf32, #tpu.memory_space<vmem>>, vector<1x1x8x8x32xf32>
    %206 = vector.shape_cast %205 : vector<1x1x8x8x32xf32> to vector<8x8x32xf32>
    %207 = vector.shape_cast %206 : vector<8x8x32xf32> to vector<64x32xf32>
    %c0_236 = arith.constant 0 : index
    %c0_237 = arith.constant 0 : index
    %c1_238 = arith.constant 1 : index
    %c1_239 = arith.constant 1 : index
    %c0_240 = arith.constant 0 : index
    %208 = vector.load %arg16[%c0_236, %c0_237, %c1_238, %c1_239, %c0_240] : memref<2x2x10x10x32xf32, #tpu.memory_space<vmem>>, vector<1x1x8x8x32xf32>
    %209 = vector.shape_cast %208 : vector<1x1x8x8x32xf32> to vector<8x8x32xf32>
    %210 = vector.shape_cast %209 : vector<8x8x32xf32> to vector<64x32xf32>
    %c0_241 = arith.constant 0 : index
    %c1_242 = arith.constant 1 : index
    %c1_243 = arith.constant 1 : index
    %c1_244 = arith.constant 1 : index
    %c0_245 = arith.constant 0 : index
    %211 = vector.load %arg16[%c0_241, %c1_242, %c1_243, %c1_244, %c0_245] : memref<2x2x10x10x32xf32, #tpu.memory_space<vmem>>, vector<1x1x8x8x32xf32>
    %212 = vector.shape_cast %211 : vector<1x1x8x8x32xf32> to vector<8x8x32xf32>
    %213 = vector.shape_cast %212 : vector<8x8x32xf32> to vector<64x32xf32>
    %c0_246 = arith.constant 0 : index
    %c0_247 = arith.constant 0 : index
    %c1_248 = arith.constant 1 : index
    %c2_249 = arith.constant 2 : index
    %c0_250 = arith.constant 0 : index
    %214 = vector.load %arg16[%c0_246, %c0_247, %c1_248, %c2_249, %c0_250] : memref<2x2x10x10x32xf32, #tpu.memory_space<vmem>>, vector<1x1x8x8x32xf32>
    %215 = vector.shape_cast %214 : vector<1x1x8x8x32xf32> to vector<8x8x32xf32>
    %216 = vector.shape_cast %215 : vector<8x8x32xf32> to vector<64x32xf32>
    %c1_251 = arith.constant 1 : index
    %c0_252 = arith.constant 0 : index
    %c1_253 = arith.constant 1 : index
    %c1_254 = arith.constant 1 : index
    %c0_255 = arith.constant 0 : index
    %217 = vector.load %arg16[%c1_251, %c0_252, %c1_253, %c1_254, %c0_255] : memref<2x2x10x10x32xf32, #tpu.memory_space<vmem>>, vector<1x1x8x8x32xf32>
    %218 = vector.shape_cast %217 : vector<1x1x8x8x32xf32> to vector<8x8x32xf32>
    %219 = vector.shape_cast %218 : vector<8x8x32xf32> to vector<64x32xf32>
    %c1_256 = arith.constant 1 : index
    %c1_257 = arith.constant 1 : index
    %c1_258 = arith.constant 1 : index
    %c1_259 = arith.constant 1 : index
    %c0_260 = arith.constant 0 : index
    %220 = vector.load %arg16[%c1_256, %c1_257, %c1_258, %c1_259, %c0_260] : memref<2x2x10x10x32xf32, #tpu.memory_space<vmem>>, vector<1x1x8x8x32xf32>
    %221 = vector.shape_cast %220 : vector<1x1x8x8x32xf32> to vector<8x8x32xf32>
    %222 = vector.shape_cast %221 : vector<8x8x32xf32> to vector<64x32xf32>
    %c1_261 = arith.constant 1 : index
    %c0_262 = arith.constant 0 : index
    %c1_263 = arith.constant 1 : index
    %c2_264 = arith.constant 2 : index
    %c0_265 = arith.constant 0 : index
    %223 = vector.load %arg16[%c1_261, %c0_262, %c1_263, %c2_264, %c0_265] : memref<2x2x10x10x32xf32, #tpu.memory_space<vmem>>, vector<1x1x8x8x32xf32>
    %224 = vector.shape_cast %223 : vector<1x1x8x8x32xf32> to vector<8x8x32xf32>
    %225 = vector.shape_cast %224 : vector<8x8x32xf32> to vector<64x32xf32>
    %226 = tpu.concatenate %201, %204, %207, %210, %213, %216, %219, %222, %225 in 1 : vector<64x32xf32>, vector<64x32xf32>, vector<64x32xf32>, vector<64x32xf32>, vector<64x32xf32>, vector<64x32xf32>, vector<64x32xf32>, vector<64x32xf32>, vector<64x32xf32> -> vector<64x288xf32>
    %c0_266 = arith.constant 0 : index
    %c0_267 = arith.constant 0 : index
    %227 = vector.load %arg12[%c0_266, %c0_267] : memref<288x16xf32, #tpu.memory_space<vmem>>, vector<288x16xf32>
    %cst_268 = arith.constant dense<0.000000e+00> : vector<64x16xf32>
    %228 = tpu.matmul %226, %227, %cst_268 {dimension_numbers = #tpu.dot_dimension_numbers<[1], [0], [0], [1], [0, 0, 1, 1], [], []>} : vector<64x288xf32>, vector<288x16xf32>, vector<64x16xf32> -> vector<64x16xf32>
    %c0_269 = arith.constant 0 : index
    %c0_270 = arith.constant 0 : index
    %229 = vector.load %arg13[%c0_269, %c0_270] : memref<1x16xf32, #tpu.memory_space<vmem>>, vector<1x16xf32>
    %230 = vector.shape_cast %229 : vector<1x16xf32> to vector<16xf32>
    %231 = vector.shape_cast %230 : vector<16xf32> to vector<1x16xf32>
    %232 = vector.broadcast %231 : vector<1x16xf32> to vector<64x16xf32>
    %233 = arith.addf %228, %232 : vector<64x16xf32>
    %c0_271 = arith.constant 0 : index
    %c1_272 = arith.constant 1 : index
    %c1_273 = arith.constant 1 : index
    %c0_274 = arith.constant 0 : index
    %c0_275 = arith.constant 0 : index
    %234 = vector.load %arg16[%c0_271, %c1_272, %c1_273, %c0_274, %c0_275] : memref<2x2x10x10x32xf32, #tpu.memory_space<vmem>>, vector<1x1x8x8x32xf32>
    %235 = vector.shape_cast %234 : vector<1x1x8x8x32xf32> to vector<8x8x32xf32>
    %236 = vector.shape_cast %235 : vector<8x8x32xf32> to vector<64x32xf32>
    %c0_276 = arith.constant 0 : index
    %c0_277 = arith.constant 0 : index
    %c1_278 = arith.constant 1 : index
    %c1_279 = arith.constant 1 : index
    %c0_280 = arith.constant 0 : index
    %237 = vector.load %arg16[%c0_276, %c0_277, %c1_278, %c1_279, %c0_280] : memref<2x2x10x10x32xf32, #tpu.memory_space<vmem>>, vector<1x1x8x8x32xf32>
    %238 = vector.shape_cast %237 : vector<1x1x8x8x32xf32> to vector<8x8x32xf32>
    %239 = vector.shape_cast %238 : vector<8x8x32xf32> to vector<64x32xf32>
    %c0_281 = arith.constant 0 : index
    %c1_282 = arith.constant 1 : index
    %c1_283 = arith.constant 1 : index
    %c1_284 = arith.constant 1 : index
    %c0_285 = arith.constant 0 : index
    %240 = vector.load %arg16[%c0_281, %c1_282, %c1_283, %c1_284, %c0_285] : memref<2x2x10x10x32xf32, #tpu.memory_space<vmem>>, vector<1x1x8x8x32xf32>
    %241 = vector.shape_cast %240 : vector<1x1x8x8x32xf32> to vector<8x8x32xf32>
    %242 = vector.shape_cast %241 : vector<8x8x32xf32> to vector<64x32xf32>
    %c1_286 = arith.constant 1 : index
    %c1_287 = arith.constant 1 : index
    %c1_288 = arith.constant 1 : index
    %c0_289 = arith.constant 0 : index
    %c0_290 = arith.constant 0 : index
    %243 = vector.load %arg16[%c1_286, %c1_287, %c1_288, %c0_289, %c0_290] : memref<2x2x10x10x32xf32, #tpu.memory_space<vmem>>, vector<1x1x8x8x32xf32>
    %244 = vector.shape_cast %243 : vector<1x1x8x8x32xf32> to vector<8x8x32xf32>
    %245 = vector.shape_cast %244 : vector<8x8x32xf32> to vector<64x32xf32>
    %c1_291 = arith.constant 1 : index
    %c0_292 = arith.constant 0 : index
    %c1_293 = arith.constant 1 : index
    %c1_294 = arith.constant 1 : index
    %c0_295 = arith.constant 0 : index
    %246 = vector.load %arg16[%c1_291, %c0_292, %c1_293, %c1_294, %c0_295] : memref<2x2x10x10x32xf32, #tpu.memory_space<vmem>>, vector<1x1x8x8x32xf32>
    %247 = vector.shape_cast %246 : vector<1x1x8x8x32xf32> to vector<8x8x32xf32>
    %248 = vector.shape_cast %247 : vector<8x8x32xf32> to vector<64x32xf32>
    %c1_296 = arith.constant 1 : index
    %c1_297 = arith.constant 1 : index
    %c1_298 = arith.constant 1 : index
    %c1_299 = arith.constant 1 : index
    %c0_300 = arith.constant 0 : index
    %249 = vector.load %arg16[%c1_296, %c1_297, %c1_298, %c1_299, %c0_300] : memref<2x2x10x10x32xf32, #tpu.memory_space<vmem>>, vector<1x1x8x8x32xf32>
    %250 = vector.shape_cast %249 : vector<1x1x8x8x32xf32> to vector<8x8x32xf32>
    %251 = vector.shape_cast %250 : vector<8x8x32xf32> to vector<64x32xf32>
    %c0_301 = arith.constant 0 : index
    %c1_302 = arith.constant 1 : index
    %c2_303 = arith.constant 2 : index
    %c0_304 = arith.constant 0 : index
    %c0_305 = arith.constant 0 : index
    %252 = vector.load %arg16[%c0_301, %c1_302, %c2_303, %c0_304, %c0_305] : memref<2x2x10x10x32xf32, #tpu.memory_space<vmem>>, vector<1x1x8x8x32xf32>
    %253 = vector.shape_cast %252 : vector<1x1x8x8x32xf32> to vector<8x8x32xf32>
    %254 = vector.shape_cast %253 : vector<8x8x32xf32> to vector<64x32xf32>
    %c0_306 = arith.constant 0 : index
    %c0_307 = arith.constant 0 : index
    %c2_308 = arith.constant 2 : index
    %c1_309 = arith.constant 1 : index
    %c0_310 = arith.constant 0 : index
    %255 = vector.load %arg16[%c0_306, %c0_307, %c2_308, %c1_309, %c0_310] : memref<2x2x10x10x32xf32, #tpu.memory_space<vmem>>, vector<1x1x8x8x32xf32>
    %256 = vector.shape_cast %255 : vector<1x1x8x8x32xf32> to vector<8x8x32xf32>
    %257 = vector.shape_cast %256 : vector<8x8x32xf32> to vector<64x32xf32>
    %c0_311 = arith.constant 0 : index
    %c1_312 = arith.constant 1 : index
    %c2_313 = arith.constant 2 : index
    %c1_314 = arith.constant 1 : index
    %c0_315 = arith.constant 0 : index
    %258 = vector.load %arg16[%c0_311, %c1_312, %c2_313, %c1_314, %c0_315] : memref<2x2x10x10x32xf32, #tpu.memory_space<vmem>>, vector<1x1x8x8x32xf32>
    %259 = vector.shape_cast %258 : vector<1x1x8x8x32xf32> to vector<8x8x32xf32>
    %260 = vector.shape_cast %259 : vector<8x8x32xf32> to vector<64x32xf32>
    %261 = tpu.concatenate %236, %239, %242, %245, %248, %251, %254, %257, %260 in 1 : vector<64x32xf32>, vector<64x32xf32>, vector<64x32xf32>, vector<64x32xf32>, vector<64x32xf32>, vector<64x32xf32>, vector<64x32xf32>, vector<64x32xf32>, vector<64x32xf32> -> vector<64x288xf32>
    %c0_316 = arith.constant 0 : index
    %c0_317 = arith.constant 0 : index
    %262 = vector.load %arg12[%c0_316, %c0_317] : memref<288x16xf32, #tpu.memory_space<vmem>>, vector<288x16xf32>
    %cst_318 = arith.constant dense<0.000000e+00> : vector<64x16xf32>
    %263 = tpu.matmul %261, %262, %cst_318 {dimension_numbers = #tpu.dot_dimension_numbers<[1], [0], [0], [1], [0, 0, 1, 1], [], []>} : vector<64x288xf32>, vector<288x16xf32>, vector<64x16xf32> -> vector<64x16xf32>
    %c0_319 = arith.constant 0 : index
    %c0_320 = arith.constant 0 : index
    %264 = vector.load %arg13[%c0_319, %c0_320] : memref<1x16xf32, #tpu.memory_space<vmem>>, vector<1x16xf32>
    %265 = vector.shape_cast %264 : vector<1x16xf32> to vector<16xf32>
    %266 = vector.shape_cast %265 : vector<16xf32> to vector<1x16xf32>
    %267 = vector.broadcast %266 : vector<1x16xf32> to vector<64x16xf32>
    %268 = arith.addf %263, %267 : vector<64x16xf32>
    %c0_321 = arith.constant 0 : index
    %c0_322 = arith.constant 0 : index
    %c1_323 = arith.constant 1 : index
    %c1_324 = arith.constant 1 : index
    %c0_325 = arith.constant 0 : index
    %269 = vector.load %arg16[%c0_321, %c0_322, %c1_323, %c1_324, %c0_325] : memref<2x2x10x10x32xf32, #tpu.memory_space<vmem>>, vector<1x1x8x8x32xf32>
    %270 = vector.shape_cast %269 : vector<1x1x8x8x32xf32> to vector<8x8x32xf32>
    %271 = vector.shape_cast %270 : vector<8x8x32xf32> to vector<64x32xf32>
    %c0_326 = arith.constant 0 : index
    %c1_327 = arith.constant 1 : index
    %c1_328 = arith.constant 1 : index
    %c1_329 = arith.constant 1 : index
    %c0_330 = arith.constant 0 : index
    %272 = vector.load %arg16[%c0_326, %c1_327, %c1_328, %c1_329, %c0_330] : memref<2x2x10x10x32xf32, #tpu.memory_space<vmem>>, vector<1x1x8x8x32xf32>
    %273 = vector.shape_cast %272 : vector<1x1x8x8x32xf32> to vector<8x8x32xf32>
    %274 = vector.shape_cast %273 : vector<8x8x32xf32> to vector<64x32xf32>
    %c0_331 = arith.constant 0 : index
    %c0_332 = arith.constant 0 : index
    %c1_333 = arith.constant 1 : index
    %c2_334 = arith.constant 2 : index
    %c0_335 = arith.constant 0 : index
    %275 = vector.load %arg16[%c0_331, %c0_332, %c1_333, %c2_334, %c0_335] : memref<2x2x10x10x32xf32, #tpu.memory_space<vmem>>, vector<1x1x8x8x32xf32>
    %276 = vector.shape_cast %275 : vector<1x1x8x8x32xf32> to vector<8x8x32xf32>
    %277 = vector.shape_cast %276 : vector<8x8x32xf32> to vector<64x32xf32>
    %c1_336 = arith.constant 1 : index
    %c0_337 = arith.constant 0 : index
    %c1_338 = arith.constant 1 : index
    %c1_339 = arith.constant 1 : index
    %c0_340 = arith.constant 0 : index
    %278 = vector.load %arg16[%c1_336, %c0_337, %c1_338, %c1_339, %c0_340] : memref<2x2x10x10x32xf32, #tpu.memory_space<vmem>>, vector<1x1x8x8x32xf32>
    %279 = vector.shape_cast %278 : vector<1x1x8x8x32xf32> to vector<8x8x32xf32>
    %280 = vector.shape_cast %279 : vector<8x8x32xf32> to vector<64x32xf32>
    %c1_341 = arith.constant 1 : index
    %c1_342 = arith.constant 1 : index
    %c1_343 = arith.constant 1 : index
    %c1_344 = arith.constant 1 : index
    %c0_345 = arith.constant 0 : index
    %281 = vector.load %arg16[%c1_341, %c1_342, %c1_343, %c1_344, %c0_345] : memref<2x2x10x10x32xf32, #tpu.memory_space<vmem>>, vector<1x1x8x8x32xf32>
    %282 = vector.shape_cast %281 : vector<1x1x8x8x32xf32> to vector<8x8x32xf32>
    %283 = vector.shape_cast %282 : vector<8x8x32xf32> to vector<64x32xf32>
    %c1_346 = arith.constant 1 : index
    %c0_347 = arith.constant 0 : index
    %c1_348 = arith.constant 1 : index
    %c2_349 = arith.constant 2 : index
    %c0_350 = arith.constant 0 : index
    %284 = vector.load %arg16[%c1_346, %c0_347, %c1_348, %c2_349, %c0_350] : memref<2x2x10x10x32xf32, #tpu.memory_space<vmem>>, vector<1x1x8x8x32xf32>
    %285 = vector.shape_cast %284 : vector<1x1x8x8x32xf32> to vector<8x8x32xf32>
    %286 = vector.shape_cast %285 : vector<8x8x32xf32> to vector<64x32xf32>
    %c0_351 = arith.constant 0 : index
    %c0_352 = arith.constant 0 : index
    %c2_353 = arith.constant 2 : index
    %c1_354 = arith.constant 1 : index
    %c0_355 = arith.constant 0 : index
    %287 = vector.load %arg16[%c0_351, %c0_352, %c2_353, %c1_354, %c0_355] : memref<2x2x10x10x32xf32, #tpu.memory_space<vmem>>, vector<1x1x8x8x32xf32>
    %288 = vector.shape_cast %287 : vector<1x1x8x8x32xf32> to vector<8x8x32xf32>
    %289 = vector.shape_cast %288 : vector<8x8x32xf32> to vector<64x32xf32>
    %c0_356 = arith.constant 0 : index
    %c1_357 = arith.constant 1 : index
    %c2_358 = arith.constant 2 : index
    %c1_359 = arith.constant 1 : index
    %c0_360 = arith.constant 0 : index
    %290 = vector.load %arg16[%c0_356, %c1_357, %c2_358, %c1_359, %c0_360] : memref<2x2x10x10x32xf32, #tpu.memory_space<vmem>>, vector<1x1x8x8x32xf32>
    %291 = vector.shape_cast %290 : vector<1x1x8x8x32xf32> to vector<8x8x32xf32>
    %292 = vector.shape_cast %291 : vector<8x8x32xf32> to vector<64x32xf32>
    %c0_361 = arith.constant 0 : index
    %c0_362 = arith.constant 0 : index
    %c2_363 = arith.constant 2 : index
    %c2_364 = arith.constant 2 : index
    %c0_365 = arith.constant 0 : index
    %293 = vector.load %arg16[%c0_361, %c0_362, %c2_363, %c2_364, %c0_365] : memref<2x2x10x10x32xf32, #tpu.memory_space<vmem>>, vector<1x1x8x8x32xf32>
    %294 = vector.shape_cast %293 : vector<1x1x8x8x32xf32> to vector<8x8x32xf32>
    %295 = vector.shape_cast %294 : vector<8x8x32xf32> to vector<64x32xf32>
    %296 = tpu.concatenate %271, %274, %277, %280, %283, %286, %289, %292, %295 in 1 : vector<64x32xf32>, vector<64x32xf32>, vector<64x32xf32>, vector<64x32xf32>, vector<64x32xf32>, vector<64x32xf32>, vector<64x32xf32>, vector<64x32xf32>, vector<64x32xf32> -> vector<64x288xf32>
    %c0_366 = arith.constant 0 : index
    %c0_367 = arith.constant 0 : index
    %297 = vector.load %arg12[%c0_366, %c0_367] : memref<288x16xf32, #tpu.memory_space<vmem>>, vector<288x16xf32>
    %cst_368 = arith.constant dense<0.000000e+00> : vector<64x16xf32>
    %298 = tpu.matmul %296, %297, %cst_368 {dimension_numbers = #tpu.dot_dimension_numbers<[1], [0], [0], [1], [0, 0, 1, 1], [], []>} : vector<64x288xf32>, vector<288x16xf32>, vector<64x16xf32> -> vector<64x16xf32>
    %c0_369 = arith.constant 0 : index
    %c0_370 = arith.constant 0 : index
    %299 = vector.load %arg13[%c0_369, %c0_370] : memref<1x16xf32, #tpu.memory_space<vmem>>, vector<1x16xf32>
    %300 = vector.shape_cast %299 : vector<1x16xf32> to vector<16xf32>
    %301 = vector.shape_cast %300 : vector<16xf32> to vector<1x16xf32>
    %302 = vector.broadcast %301 : vector<1x16xf32> to vector<64x16xf32>
    %303 = arith.addf %298, %302 : vector<64x16xf32>
    %304 = tpu.concatenate %198, %233, %268, %303 in 1 : vector<64x16xf32>, vector<64x16xf32>, vector<64x16xf32>, vector<64x16xf32> -> vector<64x64xf32>
    %c0_371 = arith.constant 0 : index
    %c0_372 = arith.constant 0 : index
    %c0_373 = arith.constant 0 : index
    %305 = vector.load %arg14[%c0_371, %c0_372, %c0_373] : memref<1x64x64xf32, #tpu.memory_space<vmem>>, vector<1x64x64xf32>
    %306 = vector.shape_cast %305 : vector<1x64x64xf32> to vector<64x64xf32>
    %307 = vector.shape_cast %304 : vector<64x64xf32> to vector<1x64x64xf32>
    tpu.vector_store %arg14[%c0_371, %c0_372, %c0_373], %307 {strides = array<i32>} : memref<1x64x64xf32, #tpu.memory_space<vmem>>, vector<1x64x64xf32>,
    return
  }
  func.func @transform_0(%arg0: i32) -> (i32, i32, i32, i32) {
    %c0_i32 = arith.constant 0 : i32
    %c0_i32_0 = arith.constant 0 : i32
    %c0_i32_1 = arith.constant 0 : i32
    %c0_i32_2 = arith.constant 0 : i32
    return %arg0, %c0_i32, %c0_i32_0, %c0_i32_1 : i32, i32, i32, i32
  }
  func.func @transform_1(%arg0: i32) -> (i32, i32) {
    %c0_i32 = arith.constant 0 : i32
    %c0_i32_0 = arith.constant 0 : i32
    %c0_i32_1 = arith.constant 0 : i32
    return %c0_i32, %c0_i32_0 : i32, i32
  }
  func.func @transform_2(%arg0: i32) -> (i32, i32) {
    %c0_i32 = arith.constant 0 : i32
    %c0_i32_0 = arith.constant 0 : i32
    %c0_i32_1 = arith.constant 0 : i32
    return %c0_i32, %c0_i32_0 : i32, i32
  }
  func.func @transform_3(%arg0: i32) -> (i32, i32) {
    %c0_i32 = arith.constant 0 : i32
    %c0_i32_0 = arith.constant 0 : i32
    %c0_i32_1 = arith.constant 0 : i32
    return %c0_i32, %c0_i32_0 : i32, i32
  }
  func.func @transform_4(%arg0: i32) -> (i32, i32) {
    %c0_i32 = arith.constant 0 : i32
    %c0_i32_0 = arith.constant 0 : i32
    %c0_i32_1 = arith.constant 0 : i32
    return %c0_i32, %c0_i32_0 : i32, i32
  }
  func.func @transform_5(%arg0: i32) -> (i32, i32) {
    %c0_i32 = arith.constant 0 : i32
    %c0_i32_0 = arith.constant 0 : i32
    %c0_i32_1 = arith.constant 0 : i32
    return %c0_i32, %c0_i32_0 : i32, i32
  }
  func.func @transform_6(%arg0: i32) -> (i32, i32) {
    %c0_i32 = arith.constant 0 : i32
    %c0_i32_0 = arith.constant 0 : i32
    %c0_i32_1 = arith.constant 0 : i32
    return %c0_i32, %c0_i32_0 : i32, i32
  }
  func.func @transform_7(%arg0: i32) -> (i32, i32) {
    %c0_i32 = arith.constant 0 : i32
    %c0_i32_0 = arith.constant 0 : i32
    %c0_i32_1 = arith.constant 0 : i32
    return %c0_i32, %c0_i32_0 : i32, i32
  }
  func.func @transform_8(%arg0: i32) -> (i32, i32) {
    %c0_i32 = arith.constant 0 : i32
    %c0_i32_0 = arith.constant 0 : i32
    %c0_i32_1 = arith.constant 0 : i32
    return %c0_i32, %c0_i32_0 : i32, i32
  }
  func.func @transform_9(%arg0: i32) -> (i32, i32, i32) {
    %c0_i32 = arith.constant 0 : i32
    %c0_i32_0 = arith.constant 0 : i32
    %c0_i32_1 = arith.constant 0 : i32
    %c0_i32_2 = arith.constant 0 : i32
    return %c0_i32, %c0_i32_0, %c0_i32_1 : i32, i32, i32
  }
  func.func @transform_10(%arg0: i32) -> (i32, i32) {
    %c0_i32 = arith.constant 0 : i32
    %c0_i32_0 = arith.constant 0 : i32
    %c0_i32_1 = arith.constant 0 : i32
    return %c0_i32, %c0_i32_0 : i32, i32
  }
  func.func @transform_11(%arg0: i32) -> (i32, i32) {
    %c0_i32 = arith.constant 0 : i32
    %c0_i32_0 = arith.constant 0 : i32
    %c0_i32_1 = arith.constant 0 : i32
    return %c0_i32, %c0_i32_0 : i32, i32
  }
  func.func @transform_12(%arg0: i32) -> (i32, i32) {
    %c0_i32 = arith.constant 0 : i32
    %c0_i32_0 = arith.constant 0 : i32
    %c0_i32_1 = arith.constant 0 : i32
    return %c0_i32, %c0_i32_0 : i32, i32
  }
  func.func @transform_13(%arg0: i32) -> (i32, i32, i32) {
    %c0_i32 = arith.constant 0 : i32
    %c0_i32_0 = arith.constant 0 : i32
    %c0_i32_1 = arith.constant 0 : i32
    return %arg0, %c0_i32, %c0_i32_0 : i32, i32, i32
  }
}

</mosaic_0001>

<llo_original>
// kernel: decoder_forward.1
$region0: #{decoder_forward.1}
  #allocation0 [shape = 'u32[]', space=smem, size = 0x4, offset = 0x4, fixed_abs, tag = 'smem constant byte address 0x4 - core index']
  #allocation1 [shape = 'u32[72,128]{1,0:T(1,128)}', space=vmem, size = 0x9000, scoped, tag = 'internal scratch']
  #allocation2 [shape = 'f32[10,10,32]{2,1,0:T(8,128)}', space=vmem, size = 0x14000, scoped, tag = 'scratch operand']
  #allocation3 [shape = 'f32[2,2,10,10,32]{4,3,2,1,0:T(8,128)}', space=vmem, size = 0x50000, scoped, tag = 'scratch operand']
  %s0 = inlined_call_operand.vmem [shape: f32[2,8,8,32], index: 0, kind: input, shape index: {}]
  %s1 = inlined_call_operand.vmem [shape: f32[288,32], index: 1, kind: input, shape index: {}]
  %s2 = inlined_call_operand.vmem [shape: f32[1,32], index: 2, kind: input, shape index: {}]
  %s3 = inlined_call_operand.vmem [shape: f32[32,32], index: 3, kind: input, shape index: {}]
  %s4 = inlined_call_operand.vmem [shape: f32[1,32], index: 4, kind: input, shape index: {}]
  %s5 = inlined_call_operand.vmem [shape: f32[288,32], index: 5, kind: input, shape index: {}]
  %s6 = inlined_call_operand.vmem [shape: f32[1,32], index: 6, kind: input, shape index: {}]
  %s7 = inlined_call_operand.vmem [shape: f32[32,32], index: 7, kind: input, shape index: {}]
  %s8 = inlined_call_operand.vmem [shape: f32[1,32], index: 8, kind: input, shape index: {}]
  %s9 = inlined_call_operand.vmem [shape: f32[4,288,32], index: 9, kind: input, shape index: {}]
  %s10 = inlined_call_operand.vmem [shape: f32[1,32], index: 10, kind: input, shape index: {}]
  %s11 = inlined_call_operand.vmem [shape: f32[288,16], index: 11, kind: input, shape index: {}]
  %s12 = inlined_call_operand.vmem [shape: f32[1,16], index: 12, kind: input, shape index: {}]
  %s13 = inlined_call_operand.vmem [shape: f32[2,64,64], index: 13, kind: output, shape index: {}]
  %s14 = sld [smem:[#allocation0]]
  $region85: #{decoder_forward.1} parent=0
    _
  %s16 = ssub.s32 1, %s14
  %s17 = scalar_select 0, %s16, %s14
  loop: start=0, step=1, limit=4
  $region2: #{decoder_forward.1} parent=0 // loop_pre_header
    _
  $region3: #{decoder_forward.1} parent=0 // loop_header
    %s19 = sphi 0, %s23
    %p20 = scmp.ge.s32.totalorder %s19, 4
    %s29 = sphi 0, %s31
    %s32 = sphi 0, %s29
    %s33 = sphi 0, %s32
    %s49 = sphi 0, %s33
    %s53 = sphi 0, %s53
    %s55 = sphi 0, %s53
    %s56 = sphi 0, %s55
    %s70 = sphi 0, %s56
    %s74 = sphi 0, %s74
    %s76 = sphi 0, %s74
    %s77 = sphi 0, %s76
    %s91 = sphi 0, %s77
    %s95 = sphi 0, %s95
    %s97 = sphi 0, %s95
    %s98 = sphi 0, %s97
    %s112 = sphi 0, %s98
    %s116 = sphi 0, %s116
    %s118 = sphi 0, %s116
    %s119 = sphi 0, %s118
    %s133 = sphi 0, %s119
    %s137 = sphi 0, %s137
    %s139 = sphi 0, %s137
    %s140 = sphi 0, %s139
    %s154 = sphi 0, %s140
    %s158 = sphi 0, %s158
    %s160 = sphi 0, %s158
    %s161 = sphi 0, %s160
    %s175 = sphi 0, %s161
    %s179 = sphi 0, %s179
    %s181 = sphi 0, %s179
    %s182 = sphi 0, %s181
    %s196 = sphi 0, %s182
    %s200 = sphi 0, %s200
    %s202 = sphi 0, %s200
    %s203 = sphi 0, %s202
    %s217 = sphi 0, %s203
    %s221 = sphi 0, %s221
    %s223 = sphi 0, %s221
    %s224 = sphi 0, %s223
    %s238 = sphi 0, %s224
    %s242 = sphi 0, %s242
    %s244 = sphi 0, %s242
    %s245 = sphi 0, %s244
    %s259 = sphi 0, %s245
    %s263 = sphi 0, %s263
    %s265 = sphi 0, %s263
    %s266 = sphi 0, %s265
    %s280 = sphi 0, %s266
    %s284 = sphi 0, %s284
    %s286 = sphi 0, %s284
    %s287 = sphi 0, %s286
    %s301 = sphi 0, %s287
    %s307 = sphi 0, %s309
    %s310 = sphi 0, %s307
    %s311 = sphi 0, %s310
    %s327 = sphi 0, %s311
  $region4: #{decoder_forward.1} parent=0 // loop_header_branch
    %22 = sbr.rel (%p20) target = $region8
  $region5: #{decoder_forward.1} parent=0 // loop_body
    %s24 = ssub.s32 %s19, 1
    %s25 = ssub.s32 %s19, 2
    %s26 = sadd.s32 %s19, 1
    %s27 = ssub.s32 %s19, %s26
    %p28 = scmp.eq.s32.totalorder %s27, 0
    %s30 = sadd.s32 %s29, 1
    %s31 = scalar_select %p28, %s29, %s30
    %p34 = pneg %p28
    %p35 = scmp.eq.s32.totalorder %s19, 1
    %p36 = por %p34, %p35
    %p37 = scmp.ne.s32.totalorder %s29, %s32
    %p38 = scmp.eq.s32.totalorder %s19, 0
    %p39 = por %p37, %p38
    %p40 = scmp.ne.s32.totalorder %s29, %s32
    %p41 = scmp.eq.s32.totalorder %s24, 1
    %p42 = por %p40, %p41
    %p43 = scmp.ne.s32.totalorder %s32, %s33
    %p44 = scmp.eq.s32.totalorder %s24, 0
    %p45 = por %p43, %p44
    %p46 = scmp.ne.s32.totalorder %s32, %s33
    %p47 = scmp.eq.s32.totalorder %s25, 1
    %p48 = por %p46, %p47
    %p50 = scmp.ne.s32.totalorder %s33, %s49
    %p51 = scmp.eq.s32.totalorder %s25, 0
    %p52 = por %p50, %p51
    %s54 = sadd.s32 %s53, 1
    %p57 = scmp.eq.s32.totalorder %s19, 1
    %p58 = scmp.ne.s32.totalorder %s53, %s55
    %p59 = scmp.eq.s32.totalorder %s19, 0
    %p60 = por %p58, %p59
    %p61 = scmp.ne.s32.totalorder %s53, %s55
    %p62 = scmp.eq.s32.totalorder %s24, 1
    %p63 = por %p61, %p62
    %p64 = scmp.ne.s32.totalorder %s55, %s56
    %p65 = scmp.eq.s32.totalorder %s24, 0
    %p66 = por %p64, %p65
    %p67 = scmp.ne.s32.totalorder %s55, %s56
    %p68 = scmp.eq.s32.totalorder %s25, 1
    %p69 = por %p67, %p68
    %p71 = scmp.ne.s32.totalorder %s56, %s70
    %p72 = scmp.eq.s32.totalorder %s25, 0
    %p73 = por %p71, %p72
    %s75 = sadd.s32 %s74, 1
    %p78 = scmp.eq.s32.totalorder %s19, 1
    %p79 = scmp.ne.s32.totalorder %s74, %s76
    %p80 = scmp.eq.s32.totalorder %s19, 0
    %p81 = por %p79, %p80
    %p82 = scmp.ne.s32.totalorder %s74, %s76
    %p83 = scmp.eq.s32.totalorder %s24, 1
    %p84 = por %p82, %p83
    %p85 = scmp.ne.s32.totalorder %s76, %s77
    %p86 = scmp.eq.s32.totalorder %s24, 0
    %p87 = por %p85, %p86
    %p88 = scmp.ne.s32.totalorder %s76, %s77
    %p89 = scmp.eq.s32.totalorder %s25, 1
    %p90 = por %p88, %p89
    %p92 = scmp.ne.s32.totalorder %s77, %s91
    %p93 = scmp.eq.s32.totalorder %s25, 0
    %p94 = por %p92, %p93
    %s96 = sadd.s32 %s95, 1
    %p99 = scmp.eq.s32.totalorder %s19, 1
    %p100 = scmp.ne.s32.totalorder %s95, %s97
    %p101 = scmp.eq.s32.totalorder %s19, 0
    %p102 = por %p100, %p101
    %p103 = scmp.ne.s32.totalorder %s95, %s97
    %p104 = scmp.eq.s32.totalorder %s24, 1
    %p105 = por %p103, %p104
    %p106 = scmp.ne.s32.totalorder %s97, %s98
    %p107 = scmp.eq.s32.totalorder %s24, 0
    %p108 = por %p106, %p107
    %p109 = scmp.ne.s32.totalorder %s97, %s98
    %p110 = scmp.eq.s32.totalorder %s25, 1
    %p111 = por %p109, %p110
    %p113 = scmp.ne.s32.totalorder %s98, %s112
    %p114 = scmp.eq.s32.totalorder %s25, 0
    %p115 = por %p113, %p114
    %s117 = sadd.s32 %s116, 1
    %p120 = scmp.eq.s32.totalorder %s19, 1
    %p121 = scmp.ne.s32.totalorder %s116, %s118
    %p122 = scmp.eq.s32.totalorder %s19, 0
    %p123 = por %p121, %p122
    %p124 = scmp.ne.s32.totalorder %s116, %s118
    %p125 = scmp.eq.s32.totalorder %s24, 1
    %p126 = por %p124, %p125
    %p127 = scmp.ne.s32.totalorder %s118, %s119
    %p128 = scmp.eq.s32.totalorder %s24, 0
    %p129 = por %p127, %p128
    %p130 = scmp.ne.s32.totalorder %s118, %s119
    %p131 = scmp.eq.s32.totalorder %s25, 1
    %p132 = por %p130, %p131
    %p134 = scmp.ne.s32.totalorder %s119, %s133
    %p135 = scmp.eq.s32.totalorder %s25, 0
    %p136 = por %p134, %p135
    %s138 = sadd.s32 %s137, 1
    %p141 = scmp.eq.s32.totalorder %s19, 1
    %p142 = scmp.ne.s32.totalorder %s137, %s139
    %p143 = scmp.eq.s32.totalorder %s19, 0
    %p144 = por %p142, %p143
    %p145 = scmp.ne.s32.totalorder %s137, %s139
    %p146 = scmp.eq.s32.totalorder %s24, 1
    %p147 = por %p145, %p146
    %p148 = scmp.ne.s32.totalorder %s139, %s140
    %p149 = scmp.eq.s32.totalorder %s24, 0
    %p150 = por %p148, %p149
    %p151 = scmp.ne.s32.totalorder %s139, %s140
    %p152 = scmp.eq.s32.totalorder %s25, 1
    %p153 = por %p151, %p152
    %p155 = scmp.ne.s32.totalorder %s140, %s154
    %p156 = scmp.eq.s32.totalorder %s25, 0
    %p157 = por %p155, %p156
    %s159 = sadd.s32 %s158, 1
    %p162 = scmp.eq.s32.totalorder %s19, 1
    %p163 = scmp.ne.s32.totalorder %s158, %s160
    %p164 = scmp.eq.s32.totalorder %s19, 0
    %p165 = por %p163, %p164
    %p166 = scmp.ne.s32.totalorder %s158, %s160
    %p167 = scmp.eq.s32.totalorder %s24, 1
    %p168 = por %p166, %p167
    %p169 = scmp.ne.s32.totalorder %s160, %s161
    %p170 = scmp.eq.s32.totalorder %s24, 0
    %p171 = por %p169, %p170
    %p172 = scmp.ne.s32.totalorder %s160, %s161
    %p173 = scmp.eq.s32.totalorder %s25, 1
    %p174 = por %p172, %p173
    %p176 = scmp.ne.s32.totalorder %s161, %s175
    %p177 = scmp.eq.s32.totalorder %s25, 0
    %p178 = por %p176, %p177
    %s180 = sadd.s32 %s179, 1
    %p183 = scmp.eq.s32.totalorder %s19, 1
    %p184 = scmp.ne.s32.totalorder %s179, %s181
    %p185 = scmp.eq.s32.totalorder %s19, 0
    %p186 = por %p184, %p185
    %p187 = scmp.ne.s32.totalorder %s179, %s181
    %p188 = scmp.eq.s32.totalorder %s24, 1
    %p189 = por %p187, %p188
    %p190 = scmp.ne.s32.totalorder %s181, %s182
    %p191 = scmp.eq.s32.totalorder %s24, 0
    %p192 = por %p190, %p191
    %p193 = scmp.ne.s32.totalorder %s181, %s182
    %p194 = scmp.eq.s32.totalorder %s25, 1
    %p195 = por %p193, %p194
    %p197 = scmp.ne.s32.totalorder %s182, %s196
    %p198 = scmp.eq.s32.totalorder %s25, 0
    %p199 = por %p197, %p198
    %s201 = sadd.s32 %s200, 1
    %p204 = scmp.eq.s32.totalorder %s19, 1
    %p205 = scmp.ne.s32.totalorder %s200, %s202
    %p206 = scmp.eq.s32.totalorder %s19, 0
    %p207 = por %p205, %p206
    %p208 = scmp.ne.s32.totalorder %s200, %s202
    %p209 = scmp.eq.s32.totalorder %s24, 1
    %p210 = por %p208, %p209
    %p211 = scmp.ne.s32.totalorder %s202, %s203
    %p212 = scmp.eq.s32.totalorder %s24, 0
    %p213 = por %p211, %p212
    %p214 = scmp.ne.s32.totalorder %s202, %s203
    %p215 = scmp.eq.s32.totalorder %s25, 1
    %p216 = por %p214, %p215
    %p218 = scmp.ne.s32.totalorder %s203, %s217
    %p219 = scmp.eq.s32.totalorder %s25, 0
    %p220 = por %p218, %p219
    %s222 = sadd.s32 %s221, 1
    %p225 = scmp.eq.s32.totalorder %s19, 1
    %p226 = scmp.ne.s32.totalorder %s221, %s223
    %p227 = scmp.eq.s32.totalorder %s19, 0
    %p228 = por %p226, %p227
    %p229 = scmp.ne.s32.totalorder %s221, %s223
    %p230 = scmp.eq.s32.totalorder %s24, 1
    %p231 = por %p229, %p230
    %p232 = scmp.ne.s32.totalorder %s223, %s224
    %p233 = scmp.eq.s32.totalorder %s24, 0
    %p234 = por %p232, %p233
    %p235 = scmp.ne.s32.totalorder %s223, %s224
    %p236 = scmp.eq.s32.totalorder %s25, 1
    %p237 = por %p235, %p236
    %p239 = scmp.ne.s32.totalorder %s224, %s238
    %p240 = scmp.eq.s32.totalorder %s25, 0
    %p241 = por %p239, %p240
    %s243 = sadd.s32 %s242, 1
    %p246 = scmp.eq.s32.totalorder %s19, 1
    %p247 = scmp.ne.s32.totalorder %s242, %s244
    %p248 = scmp.eq.s32.totalorder %s19, 0
    %p249 = por %p247, %p248
    %p250 = scmp.ne.s32.totalorder %s242, %s244
    %p251 = scmp.eq.s32.totalorder %s24, 1
    %p252 = por %p250, %p251
    %p253 = scmp.ne.s32.totalorder %s244, %s245
    %p254 = scmp.eq.s32.totalorder %s24, 0
    %p255 = por %p253, %p254
    %p256 = scmp.ne.s32.totalorder %s244, %s245
    %p257 = scmp.eq.s32.totalorder %s25, 1
    %p258 = por %p256, %p257
    %p260 = scmp.ne.s32.totalorder %s245, %s259
    %p261 = scmp.eq.s32.totalorder %s25, 0
    %p262 = por %p260, %p261
    %s264 = sadd.s32 %s263, 1
    %p267 = scmp.eq.s32.totalorder %s19, 1
    %p268 = scmp.ne.s32.totalorder %s263, %s265
    %p269 = scmp.eq.s32.totalorder %s19, 0
    %p270 = por %p268, %p269
    %p271 = scmp.ne.s32.totalorder %s263, %s265
    %p272 = scmp.eq.s32.totalorder %s24, 1
    %p273 = por %p271, %p272
    %p274 = scmp.ne.s32.totalorder %s265, %s266
    %p275 = scmp.eq.s32.totalorder %s24, 0
    %p276 = por %p274, %p275
    %p277 = scmp.ne.s32.totalorder %s265, %s266
    %p278 = scmp.eq.s32.totalorder %s25, 1
    %p279 = por %p277, %p278
    %p281 = scmp.ne.s32.totalorder %s266, %s280
    %p282 = scmp.eq.s32.totalorder %s25, 0
    %p283 = por %p281, %p282
    %s285 = sadd.s32 %s284, 1
    %p288 = scmp.eq.s32.totalorder %s19, 1
    %p289 = scmp.ne.s32.totalorder %s284, %s286
    %p290 = scmp.eq.s32.totalorder %s19, 0
    %p291 = por %p289, %p290
    %p292 = scmp.ne.s32.totalorder %s284, %s286
    %p293 = scmp.eq.s32.totalorder %s24, 1
    %p294 = por %p292, %p293
    %p295 = scmp.ne.s32.totalorder %s286, %s287
    %p296 = scmp.eq.s32.totalorder %s24, 0
    %p297 = por %p295, %p296
    %p298 = scmp.ne.s32.totalorder %s286, %s287
    %p299 = scmp.eq.s32.totalorder %s25, 1
    %p300 = por %p298, %p299
    %p302 = scmp.ne.s32.totalorder %s287, %s301
    %p303 = scmp.eq.s32.totalorder %s25, 0
    %p304 = por %p302, %p303
    %s305 = ssub.s32 %s19, %s26
    %p306 = scmp.eq.s32.totalorder %s305, 0
    %s308 = sadd.s32 %s307, 1
    %s309 = scalar_select %p306, %s307, %s308
    %p312 = pneg %p306
    %p313 = scmp.eq.s32.totalorder %s19, 1
    %p314 = por %p312, %p313
    %p315 = scmp.ne.s32.totalorder %s307, %s310
    %p316 = scmp.eq.s32.totalorder %s19, 0
    %p317 = por %p315, %p316
    %p318 = scmp.ne.s32.totalorder %s307, %s310
    %p319 = scmp.eq.s32.totalorder %s24, 1
    %p320 = por %p318, %p319
    %p321 = scmp.ne.s32.totalorder %s310, %s311
    %p322 = scmp.eq.s32.totalorder %s24, 0
    %p323 = por %p321, %p322
    %p324 = scmp.ne.s32.totalorder %s310, %s311
    %p325 = scmp.eq.s32.totalorder %s25, 1
    %p326 = por %p324, %p325
    %p328 = scmp.ne.s32.totalorder %s311, %s327
    %p329 = scmp.eq.s32.totalorder %s25, 0
    %p330 = por %p328, %p329
    %p331 = scmp.le.s32.totalorder 1, %s19
    %p332 = scmp.lt.s32.totalorder %s19, 3
    %p333 = pnand %p331, %p332
    %p334 = pneg %p333
    // Predicated region
    $region9: #{decoder_forward.1} parent=5 // pred_check
      _
    $region10: #{decoder_forward.1} parent=5 // pred_check_branch
      %336 = sbr.rel (%p333) target = $region12
    $region11: #{decoder_forward.1} parent=5 // pred_region
      %s337 = ssub.s32 %s19, 1
      // Predicated region
      $region13: #{decoder_forward.1} parent=11 // pred_check
        %p338 = pneg %p66
      $region14: #{decoder_forward.1} parent=11 // pred_check_branch
        %340 = sbr.rel (%p338) target = $region16
      $region15: #{decoder_forward.1} parent=11 // pred_region
        _
      $region16: #{decoder_forward.1} parent=11 // pred_fallthru
        _
      // Predicated region
      $region17: #{decoder_forward.1} parent=11 // pred_check
        %p341 = pneg %p87
      $region18: #{decoder_forward.1} parent=11 // pred_check_branch
        %343 = sbr.rel (%p341) target = $region20
      $region19: #{decoder_forward.1} parent=11 // pred_region
        _
      $region20: #{decoder_forward.1} parent=11 // pred_fallthru
        _
      // Predicated region
      $region21: #{decoder_forward.1} parent=11 // pred_check
        %p344 = pneg %p108
      $region22: #{decoder_forward.1} parent=11 // pred_check_branch
        %346 = sbr.rel (%p344) target = $region24
      $region23: #{decoder_forward.1} parent=11 // pred_region
        _
      $region24: #{decoder_forward.1} parent=11 // pred_fallthru
        _
      // Predicated region
      $region25: #{decoder_forward.1} parent=11 // pred_check
        %p347 = pneg %p129
      $region26: #{decoder_forward.1} parent=11 // pred_check_branch
        %349 = sbr.rel (%p347) target = $region28
      $region27: #{decoder_forward.1} parent=11 // pred_region
        _
      $region28: #{decoder_forward.1} parent=11 // pred_fallthru
        _
      // Predicated region
      $region29: #{decoder_forward.1} parent=11 // pred_check
        %p350 = pneg %p150
      $region30: #{decoder_forward.1} parent=11 // pred_check_branch
        %352 = sbr.rel (%p350) target = $region32
      $region31: #{decoder_forward.1} parent=11 // pred_region
        _
      $region32: #{decoder_forward.1} parent=11 // pred_fallthru
        _
      // Predicated region
      $region33: #{decoder_forward.1} parent=11 // pred_check
        %p353 = pneg %p171
      $region34: #{decoder_forward.1} parent=11 // pred_check_branch
        %355 = sbr.rel (%p353) target = $region36
      $region35: #{decoder_forward.1} parent=11 // pred_region
        _
      $region36: #{decoder_forward.1} parent=11 // pred_fallthru
        _
      // Predicated region
      $region37: #{decoder_forward.1} parent=11 // pred_check
        %p356 = pneg %p192
      $region38: #{decoder_forward.1} parent=11 // pred_check_branch
        %358 = sbr.rel (%p356) target = $region40
      $region39: #{decoder_forward.1} parent=11 // pred_region
        _
      $region40: #{decoder_forward.1} parent=11 // pred_fallthru
        _
      // Predicated region
      $region41: #{decoder_forward.1} parent=11 // pred_check
        %p359 = pneg %p213
      $region42: #{decoder_forward.1} parent=11 // pred_check_branch
        %361 = sbr.rel (%p359) target = $region44
      $region43: #{decoder_forward.1} parent=11 // pred_region
        _
      $region44: #{decoder_forward.1} parent=11 // pred_fallthru
        _
      // Predicated region
      $region45: #{decoder_forward.1} parent=11 // pred_check
        %p362 = pneg %p234
      $region46: #{decoder_forward.1} parent=11 // pred_check_branch
        %364 = sbr.rel (%p362) target = $region48
      $region47: #{decoder_forward.1} parent=11 // pred_region
        _
      $region48: #{decoder_forward.1} parent=11 // pred_fallthru
        _
      // Predicated region
      $region49: #{decoder_forward.1} parent=11 // pred_check
        %p365 = pneg %p255
      $region50: #{decoder_forward.1} parent=11 // pred_check_branch
        %367 = sbr.rel (%p365) target = $region52
      $region51: #{decoder_forward.1} parent=11 // pred_region
        _
      $region52: #{decoder_forward.1} parent=11 // pred_fallthru
        _
      // Predicated region
      $region53: #{decoder_forward.1} parent=11 // pred_check
        %p368 = pneg %p276
      $region54: #{decoder_forward.1} parent=11 // pred_check_branch
        %370 = sbr.rel (%p368) target = $region56
      $region55: #{decoder_forward.1} parent=11 // pred_region
        _
      $region56: #{decoder_forward.1} parent=11 // pred_fallthru
        _
      // Predicated region
      $region57: #{decoder_forward.1} parent=11 // pred_check
        %p371 = pneg %p297
      $region58: #{decoder_forward.1} parent=11 // pred_check_branch
        %373 = sbr.rel (%p371) target = $region60
      $region59: #{decoder_forward.1} parent=11 // pred_region
        _
      $region60: #{decoder_forward.1} parent=11 // pred_fallthru
        _
    $region12: #{decoder_forward.1} parent=5 // pred_fallthru
      _
    %p374 = scmp.lt.s32.totalorder %s19, 2
    // Predicated region
    $region61: #{decoder_forward.1} parent=5 // pred_check
      %p375 = pneg %p374
    $region62: #{decoder_forward.1} parent=5 // pred_check_branch
      %377 = sbr.rel (%p375) target = $region64
    $region63: #{decoder_forward.1} parent=5 // pred_region
      // Predicated region
      $region65: #{decoder_forward.1} parent=63 // pred_check
        %p378 = pneg %p39
      $region66: #{decoder_forward.1} parent=63 // pred_check_branch
        %380 = sbr.rel (%p378) target = $region68
      $region67: #{decoder_forward.1} parent=63 // pred_region
        %p381 = scmp.lt.s32.totalorder %s19, 1
        %s382 = scalar_select %p381, %s19, 1
        %s383 = smul.addr %s382, 8
        %s384 = smul.addr %s383, 8
        %s385 = scalar_lea.vmem %s0, %s384
      $region68: #{decoder_forward.1} parent=63 // pred_fallthru
        _
    $region64: #{decoder_forward.1} parent=5 // pred_fallthru
      _
    %p386 = scmp.le.s32.totalorder 1, %s19
    %p387 = scmp.lt.s32.totalorder %s19, 3
    %p388 = pnand %p386, %p387
    %p389 = pneg %p388
    // Predicated region
    $region69: #{decoder_forward.1} parent=5 // pred_check
      _
    $region70: #{decoder_forward.1} parent=5 // pred_check_branch
      %391 = sbr.rel (%p388) target = $region72
    $region71: #{decoder_forward.1} parent=5 // pred_region
      %s392 = ssub.s32 %s19, 1
      %p393 = scmp.lt.s32.totalorder %s24, 1
      %s394 = scalar_select %p393, %s24, 1
      %s395 = smul.addr %s394, 8
      %s396 = smul.addr %s395, 8
      %s397 = scalar_lea.vmem %s0, %s396
      %p398 = pneg %p45
      %p399 = pneg %p42
      %p400 = pneg %p66
      %p401 = pneg %p63
      %p402 = pneg %p87
      %p403 = pneg %p84
      %p404 = pneg %p108
      %p405 = pneg %p105
      %p406 = pneg %p129
      %p407 = pneg %p126
      %p408 = pneg %p150
      %p409 = pneg %p147
      %p410 = pneg %p171
      %p411 = pneg %p168
      %p412 = pneg %p192
      %p413 = pneg %p189
      %p414 = pneg %p213
      %p415 = pneg %p210
      %p416 = pneg %p234
      %p417 = pneg %p231
      %p418 = pneg %p255
      %p419 = pneg %p252
      %p420 = pneg %p276
      %p421 = pneg %p273
      %p422 = pneg %p297
      %p423 = pneg %p294
      %p424 = pneg %p323
      %p425 = pneg %p320
      %p426 = scmp.lt.s32.totalorder %s24, 1
      %s427 = scalar_select %p426, %s24, 1
      %s428 = smul.addr %s427, 8
      %s429 = smul.addr %s428, 8
      %s430 = scalar_lea.vmem %s13, %s429
      %p431 = scmp.lt.s32.totalorder %s24, 1
      %s432 = scalar_select %p431, %s24, 1
      %s433 = smul.addr %s432, 8
      %s434 = smul.addr %s433, 8
      %s435 = scalar_lea.vmem %s0, %s434
      %p436 = scmp.lt.s32.totalorder %s24, 1
      %s437 = scalar_select %p436, %s24, 1
      %s438 = smul.addr %s437, 8
      %s439 = smul.addr %s438, 8
      %s440 = scalar_lea.vmem %s13, %s439
      %vm441 = vcmask 261120
      %442 = vst.msk [vmem:[#allocation2] sm:$0xff] %vm441, 0.0
      %vm443 = vcmask 254976
      %444 = vst.msk [vmem:[#allocation2 + $0x8] sm:$0x3] %vm443, 0.0
      %445 = vst.msk [vmem:[#allocation2 + $0x10] sm:$0xff] %vm441, 0.0
      %446 = vst.msk [vmem:[#allocation2 + $0x18] sm:$0x3] %vm443, 0.0
      %447 = vst.msk [vmem:[#allocation2 + $0x20] sm:$0xff] %vm441, 0.0
      %448 = vst.msk [vmem:[#allocation2 + $0x28] sm:$0x3] %vm443, 0.0
      %449 = vst.msk [vmem:[#allocation2 + $0x30] sm:$0xff] %vm441, 0.0
      %450 = vst.msk [vmem:[#allocation2 + $0x38] sm:$0x3] %vm443, 0.0
      %451 = vst.msk [vmem:[#allocation2 + $0x40] sm:$0xff] %vm441, 0.0
      %452 = vst.msk [vmem:[#allocation2 + $0x48] sm:$0x3] %vm443, 0.0
      %453 = vst.msk [vmem:[#allocation2 + $0x50] sm:$0xff] %vm441, 0.0
      %454 = vst.msk [vmem:[#allocation2 + $0x58] sm:$0x3] %vm443, 0.0
      %455 = vst.msk [vmem:[#allocation2 + $0x60] sm:$0xff] %vm441, 0.0
      %456 = vst.msk [vmem:[#allocation2 + $0x68] sm:$0x3] %vm443, 0.0
      %457 = vst.msk [vmem:[#allocation2 + $0x70] sm:$0xff] %vm441, 0.0
      %458 = vst.msk [vmem:[#allocation2 + $0x78] sm:$0x3] %vm443, 0.0
      %459 = vst.msk [vmem:[#allocation2 + $0x80] sm:$0xff] %vm441, 0.0
      %460 = vst.msk [vmem:[#allocation2 + $0x88] sm:$0x3] %vm443, 0.0
      %461 = vst.msk [vmem:[#allocation2 + $0x90] sm:$0xff] %vm441, 0.0
      %462 = vst.msk [vmem:[#allocation2 + $0x98] sm:$0x3] %vm443, 0.0
      %463 = vst.msk [vmem:[#allocation3] sm:$0xff] %vm441, 0.0
      %464 = vst.msk [vmem:[#allocation3 + $0x8] sm:$0x3] %vm443, 0.0
      %465 = vst.msk [vmem:[#allocation3 + $0x10] sm:$0xff] %vm441, 0.0
      %466 = vst.msk [vmem:[#allocation3 + $0x18] sm:$0x3] %vm443, 0.0
      %467 = vst.msk [vmem:[#allocation3 + $0x20] sm:$0xff] %vm441, 0.0
      %468 = vst.msk [vmem:[#allocation3 + $0x28] sm:$0x3] %vm443, 0.0
      %469 = vst.msk [vmem:[#allocation3 + $0x30] sm:$0xff] %vm441, 0.0
      %470 = vst.msk [vmem:[#allocation3 + $0x38] sm:$0x3] %vm443, 0.0
      %471 = vst.msk [vmem:[#allocation3 + $0x40] sm:$0xff] %vm441, 0.0
      %472 = vst.msk [vmem:[#allocation3 + $0x48] sm:$0x3] %vm443, 0.0
      %473 = vst.msk [vmem:[#allocation3 + $0x50] sm:$0xff] %vm441, 0.0
      %474 = vst.msk [vmem:[#allocation3 + $0x58] sm:$0x3] %vm443, 0.0
      %475 = vst.msk [vmem:[#allocation3 + $0x60] sm:$0xff] %vm441, 0.0
      %476 = vst.msk [vmem:[#allocation3 + $0x68] sm:$0x3] %vm443, 0.0
      %477 = vst.msk [vmem:[#allocation3 + $0x70] sm:$0xff] %vm441, 0.0
      %478 = vst.msk [vmem:[#allocation3 + $0x78] sm:$0x3] %vm443, 0.0
      %479 = vst.msk [vmem:[#allocation3 + $0x80] sm:$0xff] %vm441, 0.0
      %480 = vst.msk [vmem:[#allocation3 + $0x88] sm:$0x3] %vm443, 0.0
      %481 = vst.msk [vmem:[#allocation3 + $0x90] sm:$0xff] %vm441, 0.0
      %482 = vst.msk [vmem:[#allocation3 + $0x98] sm:$0x3] %vm443, 0.0
      %483 = vst.msk [vmem:[#allocation3 + $0xa0] sm:$0xff] %vm441, 0.0
      %484 = vst.msk [vmem:[#allocation3 + $0xa8] sm:$0x3] %vm443, 0.0
      %485 = vst.msk [vmem:[#allocation3 + $0xb0] sm:$0xff] %vm441, 0.0
      %486 = vst.msk [vmem:[#allocation3 + $0xb8] sm:$0x3] %vm443, 0.0
      %487 = vst.msk [vmem:[#allocation3 + $0xc0] sm:$0xff] %vm441, 0.0
      %488 = vst.msk [vmem:[#allocation3 + $0xc8] sm:$0x3] %vm443, 0.0
      %489 = vst.msk [vmem:[#allocation3 + $0xd0] sm:$0xff] %vm441, 0.0
      %490 = vst.msk [vmem:[#allocation3 + $0xd8] sm:$0x3] %vm443, 0.0
      %491 = vst.msk [vmem:[#allocation3 + $0xe0] sm:$0xff] %vm441, 0.0
      %492 = vst.msk [vmem:[#allocation3 + $0xe8] sm:$0x3] %vm443, 0.0
      %493 = vst.msk [vmem:[#allocation3 + $0xf0] sm:$0xff] %vm441, 0.0
      %494 = vst.msk [vmem:[#allocation3 + $0xf8] sm:$0x3] %vm443, 0.0
      %495 = vst.msk [vmem:[#allocation3 + $0x100] sm:$0xff] %vm441, 0.0
      %496 = vst.msk [vmem:[#allocation3 + $0x108] sm:$0x3] %vm443, 0.0
      %497 = vst.msk [vmem:[#allocation3 + $0x110] sm:$0xff] %vm441, 0.0
      %498 = vst.msk [vmem:[#allocation3 + $0x118] sm:$0x3] %vm443, 0.0
      %499 = vst.msk [vmem:[#allocation3 + $0x120] sm:$0xff] %vm441, 0.0
      %500 = vst.msk [vmem:[#allocation3 + $0x128] sm:$0x3] %vm443, 0.0
      %501 = vst.msk [vmem:[#allocation3 + $0x130] sm:$0xff] %vm441, 0.0
      %502 = vst.msk [vmem:[#allocation3 + $0x138] sm:$0x3] %vm443, 0.0
      %503 = vst.msk [vmem:[#allocation3 + $0x140] sm:$0xff] %vm441, 0.0
      %504 = vst.msk [vmem:[#allocation3 + $0x148] sm:$0x3] %vm443, 0.0
      %505 = vst.msk [vmem:[#allocation3 + $0x150] sm:$0xff] %vm441, 0.0
      %506 = vst.msk [vmem:[#allocation3 + $0x158] sm:$0x3] %vm443, 0.0
      %507 = vst.msk [vmem:[#allocation3 + $0x160] sm:$0xff] %vm441, 0.0
      %508 = vst.msk [vmem:[#allocation3 + $0x168] sm:$0x3] %vm443, 0.0
      %509 = vst.msk [vmem:[#allocation3 + $0x170] sm:$0xff] %vm441, 0.0
      %510 = vst.msk [vmem:[#allocation3 + $0x178] sm:$0x3] %vm443, 0.0
      %511 = vst.msk [vmem:[#allocation3 + $0x180] sm:$0xff] %vm441, 0.0
      %512 = vst.msk [vmem:[#allocation3 + $0x188] sm:$0x3] %vm443, 0.0
      %513 = vst.msk [vmem:[#allocation3 + $0x190] sm:$0xff] %vm441, 0.0
      %514 = vst.msk [vmem:[#allocation3 + $0x198] sm:$0x3] %vm443, 0.0
      %515 = vst.msk [vmem:[#allocation3 + $0x1a0] sm:$0xff] %vm441, 0.0
      %516 = vst.msk [vmem:[#allocation3 + $0x1a8] sm:$0x3] %vm443, 0.0
      %517 = vst.msk [vmem:[#allocation3 + $0x1b0] sm:$0xff] %vm441, 0.0
      %518 = vst.msk [vmem:[#allocation3 + $0x1b8] sm:$0x3] %vm443, 0.0
      %519 = vst.msk [vmem:[#allocation3 + $0x1c0] sm:$0xff] %vm441, 0.0
      %520 = vst.msk [vmem:[#allocation3 + $0x1c8] sm:$0x3] %vm443, 0.0
      %521 = vst.msk [vmem:[#allocation3 + $0x1d0] sm:$0xff] %vm441, 0.0
      %522 = vst.msk [vmem:[#allocation3 + $0x1d8] sm:$0x3] %vm443, 0.0
      %523 = vst.msk [vmem:[#allocation3 + $0x1e0] sm:$0xff] %vm441, 0.0
      %524 = vst.msk [vmem:[#allocation3 + $0x1e8] sm:$0x3] %vm443, 0.0
      %525 = vst.msk [vmem:[#allocation3 + $0x1f0] sm:$0xff] %vm441, 0.0
      %526 = vst.msk [vmem:[#allocation3 + $0x1f8] sm:$0x3] %vm443, 0.0
      %527 = vst.msk [vmem:[#allocation3 + $0x200] sm:$0xff] %vm441, 0.0
      %528 = vst.msk [vmem:[#allocation3 + $0x208] sm:$0x3] %vm443, 0.0
      %529 = vst.msk [vmem:[#allocation3 + $0x210] sm:$0xff] %vm441, 0.0
      %530 = vst.msk [vmem:[#allocation3 + $0x218] sm:$0x3] %vm443, 0.0
      %531 = vst.msk [vmem:[#allocation3 + $0x220] sm:$0xff] %vm441, 0.0
      %532 = vst.msk [vmem:[#allocation3 + $0x228] sm:$0x3] %vm443, 0.0
      %533 = vst.msk [vmem:[#allocation3 + $0x230] sm:$0xff] %vm441, 0.0
      %534 = vst.msk [vmem:[#allocation3 + $0x238] sm:$0x3] %vm443, 0.0
      %535 = vst.msk [vmem:[#allocation3 + $0x240] sm:$0xff] %vm441, 0.0
      %536 = vst.msk [vmem:[#allocation3 + $0x248] sm:$0x3] %vm443, 0.0
      %537 = vst.msk [vmem:[#allocation3 + $0x250] sm:$0xff] %vm441, 0.0
      %538 = vst.msk [vmem:[#allocation3 + $0x258] sm:$0x3] %vm443, 0.0
      %539 = vst.msk [vmem:[#allocation3 + $0x260] sm:$0xff] %vm441, 0.0
      %540 = vst.msk [vmem:[#allocation3 + $0x268] sm:$0x3] %vm443, 0.0
      %541 = vst.msk [vmem:[#allocation3 + $0x270] sm:$0xff] %vm441, 0.0
      %542 = vst.msk [vmem:[#allocation3 + $0x278] sm:$0x3] %vm443, 0.0
      %v543 = vld [vmem:[%s435] sm:$0xff]
      %v544 = vld [vmem:[%s435 + $0x8] sm:$0xff]
      %v545 = vld [vmem:[%s435 + $0x10] sm:$0xff]
      %v546 = vld [vmem:[%s435 + $0x18] sm:$0xff]
      %v547 = vld [vmem:[%s435 + $0x20] sm:$0xff]
      %v548 = vld [vmem:[%s435 + $0x28] sm:$0xff]
      %v549 = vld [vmem:[%s435 + $0x30] sm:$0xff]
      %v550 = vld [vmem:[%s435 + $0x38] sm:$0xff]
      %s551 = scalar_lea.vmem [#allocation2], 16
      %552 = vst.msk [vmem:[%s551 + $0x1] sm:$0xff] %vm441, %v543
      %553 = vst.msk [vmem:[%s551 + $0x11] sm:$0xff] %vm441, %v544
      %554 = vst.msk [vmem:[%s551 + $0x21] sm:$0xff] %vm441, %v545
      %555 = vst.msk [vmem:[%s551 + $0x31] sm:$0xff] %vm441, %v546
      %556 = vst.msk [vmem:[%s551 + $0x41] sm:$0xff] %vm441, %v547
      %557 = vst.msk [vmem:[%s551 + $0x51] sm:$0xff] %vm441, %v548
      %558 = vst.msk [vmem:[%s551 + $0x61] sm:$0xff] %vm441, %v549
      %559 = vst.msk [vmem:[%s551 + $0x71] sm:$0xff] %vm441, %v550
      %v560 = vld [vmem:[#allocation2] sm:$0xff]
      %v561 = vld [vmem:[#allocation2 + $0x10] sm:$0xff]
      %v562 = vld [vmem:[#allocation2 + $0x20] sm:$0xff]
      %v563 = vld [vmem:[#allocation2 + $0x30] sm:$0xff]
      %v564 = vld [vmem:[#allocation2 + $0x40] sm:$0xff]
      %v565 = vld [vmem:[#allocation2 + $0x50] sm:$0xff]
      %v566 = vld [vmem:[#allocation2 + $0x60] sm:$0xff]
      %v567 = vld [vmem:[#allocation2 + $0x70] sm:$0xff]
      %v568 = vld [vmem:[#allocation2 + $0x1] sm:$0xff]
      %v569 = vld [vmem:[#allocation2 + $0x11] sm:$0xff]
      %v570 = vld [vmem:[#allocation2 + $0x21] sm:$0xff]
      %v571 = vld [vmem:[#allocation2 + $0x31] sm:$0xff]
      %v572 = vld [vmem:[#allocation2 + $0x41] sm:$0xff]
      %v573 = vld [vmem:[#allocation2 + $0x51] sm:$0xff]
      %v574 = vld [vmem:[#allocation2 + $0x61] sm:$0xff]
      %v575 = vld [vmem:[#allocation2 + $0x71] sm:$0xff]
      %v576 = vld [vmem:[#allocation2 + $0x2] sm:$0xff]
      %v577 = vld [vmem:[#allocation2 + $0x12] sm:$0xff]
      %v578 = vld [vmem:[#allocation2 + $0x22] sm:$0xff]
      %v579 = vld [vmem:[#allocation2 + $0x32] sm:$0xff]
      %v580 = vld [vmem:[#allocation2 + $0x42] sm:$0xff]
      %v581 = vld [vmem:[#allocation2 + $0x52] sm:$0xff]
      %v582 = vld [vmem:[#allocation2 + $0x62] sm:$0xff]
      %v583 = vld [vmem:[#allocation2 + $0x72] sm:$0xff]
      %v584 = vld [vmem:[%s551] sm:$0xff]
      %v585 = vld [vmem:[%s551 + $0x10] sm:$0xff]
      %v586 = vld [vmem:[%s551 + $0x20] sm:$0xff]
      %v587 = vld [vmem:[%s551 + $0x30] sm:$0xff]
      %v588 = vld [vmem:[%s551 + $0x40] sm:$0xff]
      %v589 = vld [vmem:[%s551 + $0x50] sm:$0xff]
      %v590 = vld [vmem:[%s551 + $0x60] sm:$0xff]
      %v591 = vld [vmem:[%s551 + $0x70] sm:$0xff]
      %v592 = vld [vmem:[%s551 + $0x1] sm:$0xff]
      %v593 = vld [vmem:[%s551 + $0x11] sm:$0xff]
      %v594 = vld [vmem:[%s551 + $0x21] sm:$0xff]
      %v595 = vld [vmem:[%s551 + $0x31] sm:$0xff]
      %v596 = vld [vmem:[%s551 + $0x41] sm:$0xff]
      %v597 = vld [vmem:[%s551 + $0x51] sm:$0xff]
      %v598 = vld [vmem:[%s551 + $0x61] sm:$0xff]
      %v599 = vld [vmem:[%s551 + $0x71] sm:$0xff]
      %v600 = vld [vmem:[%s551 + $0x2] sm:$0xff]
      %v601 = vld [vmem:[%s551 + $0x12] sm:$0xff]
      %v602 = vld [vmem:[%s551 + $0x22] sm:$0xff]
      %v603 = vld [vmem:[%s551 + $0x32] sm:$0xff]
      %v604 = vld [vmem:[%s551 + $0x42] sm:$0xff]
      %v605 = vld [vmem:[%s551 + $0x52] sm:$0xff]
      %v606 = vld [vmem:[%s551 + $0x62] sm:$0xff]
      %v607 = vld [vmem:[%s551 + $0x72] sm:$0xff]
      %s608 = scalar_lea.vmem [#allocation2], 32
      %v609 = vld [vmem:[%s608] sm:$0xff]
      %v610 = vld [vmem:[%s608 + $0x10] sm:$0xff]
      %v611 = vld [vmem:[%s608 + $0x20] sm:$0xff]
      %v612 = vld [vmem:[%s608 + $0x30] sm:$0xff]
      %v613 = vld [vmem:[%s608 + $0x40] sm:$0xff]
      %v614 = vld [vmem:[%s608 + $0x50] sm:$0xff]
      %v615 = vld [vmem:[%s608 + $0x60] sm:$0xff]
      %v616 = vld [vmem:[%s608 + $0x70] sm:$0xff]
      %v617 = vld [vmem:[%s608 + $0x1] sm:$0xff]
      %v618 = vld [vmem:[%s608 + $0x11] sm:$0xff]
      %v619 = vld [vmem:[%s608 + $0x21] sm:$0xff]
      %v620 = vld [vmem:[%s608 + $0x31] sm:$0xff]
      %v621 = vld [vmem:[%s608 + $0x41] sm:$0xff]
      %v622 = vld [vmem:[%s608 + $0x51] sm:$0xff]
      %v623 = vld [vmem:[%s608 + $0x61] sm:$0xff]
      %v624 = vld [vmem:[%s608 + $0x71] sm:$0xff]
      %v625 = vld [vmem:[%s608 + $0x2] sm:$0xff]
      %v626 = vld [vmem:[%s608 + $0x12] sm:$0xff]
      %v627 = vld [vmem:[%s608 + $0x22] sm:$0xff]
      %v628 = vld [vmem:[%s608 + $0x32] sm:$0xff]
      %v629 = vld [vmem:[%s608 + $0x42] sm:$0xff]
      %v630 = vld [vmem:[%s608 + $0x52] sm:$0xff]
      %v631 = vld [vmem:[%s608 + $0x62] sm:$0xff]
      %v632 = vld [vmem:[%s608 + $0x72] sm:$0xff]
      %641 = vrot.lane.b32.xlu0 %v568, 32
      %v642 = vpop.permute.xlu0 %641
      %643 = vrot.lane.b32.xlu0 %v569, 32
      %v644 = vpop.permute.xlu0 %643
      %645 = vrot.lane.b32.xlu0 %v570, 32
      %v646 = vpop.permute.xlu0 %645
      %647 = vrot.lane.b32.xlu0 %v571, 32
      %v648 = vpop.permute.xlu0 %647
      %649 = vrot.lane.b32.xlu0 %v572, 32
      %v650 = vpop.permute.xlu0 %649
      %651 = vrot.lane.b32.xlu0 %v573, 32
      %v652 = vpop.permute.xlu0 %651
      %653 = vrot.lane.b32.xlu0 %v574, 32
      %v654 = vpop.permute.xlu0 %653
      %655 = vrot.lane.b32.xlu0 %v575, 32
      %v656 = vpop.permute.xlu0 %655
      %673 = vrot.lane.b32.xlu0 %v576, 64
      %v674 = vpop.permute.xlu0 %673
      %675 = vrot.lane.b32.xlu0 %v577, 64
      %v676 = vpop.permute.xlu0 %675
      %677 = vrot.lane.b32.xlu0 %v578, 64
      %v678 = vpop.permute.xlu0 %677
      %679 = vrot.lane.b32.xlu0 %v579, 64
      %v680 = vpop.permute.xlu0 %679
      %681 = vrot.lane.b32.xlu0 %v580, 64
      %v682 = vpop.permute.xlu0 %681
      %683 = vrot.lane.b32.xlu0 %v581, 64
      %v684 = vpop.permute.xlu0 %683
      %685 = vrot.lane.b32.xlu0 %v582, 64
      %v686 = vpop.permute.xlu0 %685
      %687 = vrot.lane.b32.xlu0 %v583, 64
      %v688 = vpop.permute.xlu0 %687
      %705 = vrot.lane.b32.xlu0 %v584, 96
      %v706 = vpop.permute.xlu0 %705
      %707 = vrot.lane.b32.xlu0 %v585, 96
      %v708 = vpop.permute.xlu0 %707
      %709 = vrot.lane.b32.xlu0 %v586, 96
      %v710 = vpop.permute.xlu0 %709
      %711 = vrot.lane.b32.xlu0 %v587, 96
      %v712 = vpop.permute.xlu0 %711
      %713 = vrot.lane.b32.xlu0 %v588, 96
      %v714 = vpop.permute.xlu0 %713
      %715 = vrot.lane.b32.xlu0 %v589, 96
      %v716 = vpop.permute.xlu0 %715
      %717 = vrot.lane.b32.xlu0 %v590, 96
      %v718 = vpop.permute.xlu0 %717
      %719 = vrot.lane.b32.xlu0 %v591, 96
      %v720 = vpop.permute.xlu0 %719
      %737 = vrot.lane.b32.xlu0 %v600, 32
      %v738 = vpop.permute.xlu0 %737
      %739 = vrot.lane.b32.xlu0 %v601, 32
      %v740 = vpop.permute.xlu0 %739
      %741 = vrot.lane.b32.xlu0 %v602, 32
      %v742 = vpop.permute.xlu0 %741
      %743 = vrot.lane.b32.xlu0 %v603, 32
      %v744 = vpop.permute.xlu0 %743
      %745 = vrot.lane.b32.xlu0 %v604, 32
      %v746 = vpop.permute.xlu0 %745
      %747 = vrot.lane.b32.xlu0 %v605, 32
      %v748 = vpop.permute.xlu0 %747
      %749 = vrot.lane.b32.xlu0 %v606, 32
      %v750 = vpop.permute.xlu0 %749
      %751 = vrot.lane.b32.xlu0 %v607, 32
      %v752 = vpop.permute.xlu0 %751
      %769 = vrot.lane.b32.xlu0 %v609, 64
      %v770 = vpop.permute.xlu0 %769
      %771 = vrot.lane.b32.xlu0 %v610, 64
      %v772 = vpop.permute.xlu0 %771
      %773 = vrot.lane.b32.xlu0 %v611, 64
      %v774 = vpop.permute.xlu0 %773
      %775 = vrot.lane.b32.xlu0 %v612, 64
      %v776 = vpop.permute.xlu0 %775
      %777 = vrot.lane.b32.xlu0 %v613, 64
      %v778 = vpop.permute.xlu0 %777
      %779 = vrot.lane.b32.xlu0 %v614, 64
      %v780 = vpop.permute.xlu0 %779
      %781 = vrot.lane.b32.xlu0 %v615, 64
      %v782 = vpop.permute.xlu0 %781
      %783 = vrot.lane.b32.xlu0 %v616, 64
      %v784 = vpop.permute.xlu0 %783
      %801 = vrot.lane.b32.xlu0 %v617, 96
      %v802 = vpop.permute.xlu0 %801
      %803 = vrot.lane.b32.xlu0 %v618, 96
      %v804 = vpop.permute.xlu0 %803
      %805 = vrot.lane.b32.xlu0 %v619, 96
      %v806 = vpop.permute.xlu0 %805
      %807 = vrot.lane.b32.xlu0 %v620, 96
      %v808 = vpop.permute.xlu0 %807
      %809 = vrot.lane.b32.xlu0 %v621, 96
      %v810 = vpop.permute.xlu0 %809
      %811 = vrot.lane.b32.xlu0 %v622, 96
      %v812 = vpop.permute.xlu0 %811
      %813 = vrot.lane.b32.xlu0 %v623, 96
      %v814 = vpop.permute.xlu0 %813
      %815 = vrot.lane.b32.xlu0 %v624, 96
      %v816 = vpop.permute.xlu0 %815
      %v825 = vsel %vm441, %v560, %v642
      %v826 = vsel %vm441, %v561, %v644
      %v827 = vsel %vm441, %v562, %v646
      %v828 = vsel %vm441, %v563, %v648
      %v829 = vsel %vm441, %v564, %v650
      %v830 = vsel %vm441, %v565, %v652
      %v831 = vsel %vm441, %v566, %v654
      %v832 = vsel %vm441, %v567, %v656
      %vm833 = vcmask 523264
      %v834 = vsel %vm833, %v825, %v674
      %v835 = vsel %vm833, %v826, %v676
      %v836 = vsel %vm833, %v827, %v678
      %v837 = vsel %vm833, %v828, %v680
      %v838 = vsel %vm833, %v829, %v682
      %v839 = vsel %vm833, %v830, %v684
      %v840 = vsel %vm833, %v831, %v686
      %v841 = vsel %vm833, %v832, %v688
      %vm842 = vcmask 785408
      %v843 = vsel %vm842, %v834, %v706
      %v844 = vsel %vm842, %v835, %v708
      %v845 = vsel %vm842, %v836, %v710
      %v846 = vsel %vm842, %v837, %v712
      %v847 = vsel %vm842, %v838, %v714
      %v848 = vsel %vm842, %v839, %v716
      %v849 = vsel %vm842, %v840, %v718
      %v850 = vsel %vm842, %v841, %v720
      %v851 = vsel %vm441, %v592, %v738
      %v852 = vsel %vm441, %v593, %v740
      %v853 = vsel %vm441, %v594, %v742
      %v854 = vsel %vm441, %v595, %v744
      %v855 = vsel %vm441, %v596, %v746
      %v856 = vsel %vm441, %v597, %v748
      %v857 = vsel %vm441, %v598, %v750
      %v858 = vsel %vm441, %v599, %v752
      %v859 = vsel %vm833, %v851, %v770
      %v860 = vsel %vm833, %v852, %v772
      %v861 = vsel %vm833, %v853, %v774
      %v862 = vsel %vm833, %v854, %v776
      %v863 = vsel %vm833, %v855, %v778
      %v864 = vsel %vm833, %v856, %v780
      %v865 = vsel %vm833, %v857, %v782
      %v866 = vsel %vm833, %v858, %v784
      %v867 = vsel %vm842, %v859, %v802
      %v868 = vsel %vm842, %v860, %v804
      %v869 = vsel %vm842, %v861, %v806
      %v870 = vsel %vm842, %v862, %v808
      %v871 = vsel %vm842, %v863, %v810
      %v872 = vsel %vm842, %v864, %v812
      %v873 = vsel %vm842, %v865, %v814
      %v874 = vsel %vm842, %v866, %v816
      %v875 = vld [vmem:[%s1] sm:$0xff]
      %v876 = vld [vmem:[%s1 + $0x8] sm:$0xff]
      %v877 = vld [vmem:[%s1 + $0x10] sm:$0xff]
      %v878 = vld [vmem:[%s1 + $0x18] sm:$0xff]
      %v879 = vld [vmem:[%s1 + $0x20] sm:$0xff]
      %v880 = vld [vmem:[%s1 + $0x28] sm:$0xff]
      %v881 = vld [vmem:[%s1 + $0x30] sm:$0xff]
      %v882 = vld [vmem:[%s1 + $0x38] sm:$0xff]
      %v883 = vld [vmem:[%s1 + $0x40] sm:$0xff]
      %v884 = vld [vmem:[%s1 + $0x48] sm:$0xff]
      %v885 = vld [vmem:[%s1 + $0x50] sm:$0xff]
      %v886 = vld [vmem:[%s1 + $0x58] sm:$0xff]
      %v887 = vld [vmem:[%s1 + $0x60] sm:$0xff]
      %v888 = vld [vmem:[%s1 + $0x68] sm:$0xff]
      %v889 = vld [vmem:[%s1 + $0x70] sm:$0xff]
      %v890 = vld [vmem:[%s1 + $0x78] sm:$0xff]
      %v891 = vld [vmem:[%s1 + $0x80] sm:$0xff]
      %v892 = vld [vmem:[%s1 + $0x88] sm:$0xff]
      %v893 = vld [vmem:[%s1 + $0x90] sm:$0xff]
      %v894 = vld [vmem:[%s1 + $0x98] sm:$0xff]
      %v895 = vld [vmem:[%s1 + $0xa0] sm:$0xff]
      %v896 = vld [vmem:[%s1 + $0xa8] sm:$0xff]
      %v897 = vld [vmem:[%s1 + $0xb0] sm:$0xff]
      %v898 = vld [vmem:[%s1 + $0xb8] sm:$0xff]
      %v899 = vld [vmem:[%s1 + $0xc0] sm:$0xff]
      %v900 = vld [vmem:[%s1 + $0xc8] sm:$0xff]
      %v901 = vld [vmem:[%s1 + $0xd0] sm:$0xff]
      %v902 = vld [vmem:[%s1 + $0xd8] sm:$0xff]
      %v903 = vld [vmem:[%s1 + $0xe0] sm:$0xff]
      %v904 = vld [vmem:[%s1 + $0xe8] sm:$0xff]
      %v905 = vld [vmem:[%s1 + $0xf0] sm:$0xff]
      %v906 = vld [vmem:[%s1 + $0xf8] sm:$0xff]
      %v907 = vld [vmem:[%s1 + $0x100] sm:$0xff]
      %v908 = vld [vmem:[%s1 + $0x108] sm:$0xff]
      %v909 = vld [vmem:[%s1 + $0x110] sm:$0xff]
      %v910 = vld [vmem:[%s1 + $0x118] sm:$0xff]
      %v911 = vld [vmem:[%s2] sm:$0x1]
      %v913 = vperm.slane %v911, 0
      %v916 = vsel %vm441, %v625, 0
      %v919 = vsel %vm441, %v626, 0
      %v922 = vsel %vm441, %v627, 0
      %v925 = vsel %vm441, %v628, 0
      %v928 = vsel %vm441, %v629, 0
      %v931 = vsel %vm441, %v630, 0
      %v934 = vsel %vm441, %v631, 0
      %v937 = vsel %vm441, %v632, 0
      %939 = vmatpush.msra.mxu0 %v890
      %940 = vmatpush.msra.mxu0 %v889
      %941 = vmatpush.msra.mxu0 %v888
      %942 = vmatpush.msra.mxu0 %v887
      %943 = vmatpush.msra.mxu0 %v886
      %944 = vmatpush.msra.mxu0 %v885
      %945 = vmatpush.msra.mxu0 %v884
      %946 = vmatpush.msra.mxu0 %v883
      %947 = vmatpush.msra.mxu0 %v882
      %948 = vmatpush.msra.mxu0 %v881
      %949 = vmatpush.msra.mxu0 %v880
      %950 = vmatpush.msra.mxu0 %v879
      %951 = vmatpush.msra.mxu0 %v878
      %952 = vmatpush.msra.mxu0 %v877
      %953 = vmatpush.msra.mxu0 %v876
      %954 = vmatpush.msra.mxu0 %v875
      %955 = vmatmul.f32.gmra.mxu0 %v843
      %v956 = vpop.f32.mrf.mxu0
      %v957 = vadd.f32 %v913, %v956
      %958 = vmatmul.f32.gmra.mxu0 %v844
      %v959 = vpop.f32.mrf.mxu0
      %v960 = vadd.f32 %v913, %v959
      %961 = vmatmul.f32.gmra.mxu0 %v845
      %v962 = vpop.f32.mrf.mxu0
      %v963 = vadd.f32 %v913, %v962
      %964 = vmatmul.f32.gmra.mxu0 %v846
      %v965 = vpop.f32.mrf.mxu0
      %v966 = vadd.f32 %v913, %v965
      %967 = vmatmul.f32.gmra.mxu0 %v847
      %v968 = vpop.f32.mrf.mxu0
      %v969 = vadd.f32 %v913, %v968
      %970 = vmatmul.f32.gmra.mxu0 %v848
      %v971 = vpop.f32.mrf.mxu0
      %v972 = vadd.f32 %v913, %v971
      %973 = vmatmul.f32.gmra.mxu0 %v849
      %v974 = vpop.f32.mrf.mxu0
      %v975 = vadd.f32 %v913, %v974
      %976 = vmatmul.f32.gmra.mxu0 %v850
      %v977 = vpop.f32.mrf.mxu0
      %v978 = vadd.f32 %v913, %v977
      %979 = vdwg.mxu0
      %980 = vmatpush.msra.mxu0 %v906
      %981 = vmatpush.msra.mxu0 %v905
      %982 = vmatpush.msra.mxu0 %v904
      %983 = vmatpush.msra.mxu0 %v903
      %984 = vmatpush.msra.mxu0 %v902
      %985 = vmatpush.msra.mxu0 %v901
      %986 = vmatpush.msra.mxu0 %v900
      %987 = vmatpush.msra.mxu0 %v899
      %988 = vmatpush.msra.mxu0 %v898
      %989 = vmatpush.msra.mxu0 %v897
      %990 = vmatpush.msra.mxu0 %v896
      %991 = vmatpush.msra.mxu0 %v895
      %992 = vmatpush.msra.mxu0 %v894
      %993 = vmatpush.msra.mxu0 %v893
      %994 = vmatpush.msra.mxu0 %v892
      %995 = vmatpush.msra.mxu0 %v891
      %996 = vmatmul.f32.gmra.mxu0 %v867
      %v997 = vpop.f32.mrf.mxu0
      %v998 = vadd.f32 %v957, %v997
      %999 = vmatmul.f32.gmra.mxu0 %v868
      %v1000 = vpop.f32.mrf.mxu0
      %v1001 = vadd.f32 %v960, %v1000
      %1002 = vmatmul.f32.gmra.mxu0 %v869
      %v1003 = vpop.f32.mrf.mxu0
      %v1004 = vadd.f32 %v963, %v1003
      %1005 = vmatmul.f32.gmra.mxu0 %v870
      %v1006 = vpop.f32.mrf.mxu0
      %v1007 = vadd.f32 %v966, %v1006
      %1008 = vmatmul.f32.gmra.mxu0 %v871
      %v1009 = vpop.f32.mrf.mxu0
      %v1010 = vadd.f32 %v969, %v1009
      %1011 = vmatmul.f32.gmra.mxu0 %v872
      %v1012 = vpop.f32.mrf.mxu0
      %v1013 = vadd.f32 %v972, %v1012
      %1014 = vmatmul.f32.gmra.mxu0 %v873
      %v1015 = vpop.f32.mrf.mxu0
      %v1016 = vadd.f32 %v975, %v1015
      %1017 = vmatmul.f32.gmra.mxu0 %v874
      %v1018 = vpop.f32.mrf.mxu0
      %v1019 = vadd.f32 %v978, %v1018
      %1020 = vdwg.mxu0
      %1021 = vmatpush.msra.mxu0 0.0
      %1022 = vmatpush.msra.mxu0 0.0
      %1023 = vmatpush.msra.mxu0 0.0
      %1024 = vmatpush.msra.mxu0 0.0
      %1025 = vmatpush.msra.mxu0 0.0
      %1026 = vmatpush.msra.mxu0 0.0
      %1027 = vmatpush.msra.mxu0 0.0
      %1028 = vmatpush.msra.mxu0 0.0
      %1029 = vmatpush.msra.mxu0 0.0
      %1030 = vmatpush.msra.mxu0 0.0
      %1031 = vmatpush.msra.mxu0 0.0
      %1032 = vmatpush.msra.mxu0 0.0
      %1033 = vmatpush.msra.mxu0 %v910
      %1034 = vmatpush.msra.mxu0 %v909
      %1035 = vmatpush.msra.mxu0 %v908
      %1036 = vmatpush.msra.mxu0 %v907
      %1037 = vmatmul.f32.gmra.mxu0 %v916
      %v1038 = vpop.f32.mrf.mxu0
      %v1039 = vadd.f32 %v998, %v1038
      %1040 = vmatmul.f32.gmra.mxu0 %v919
      %v1041 = vpop.f32.mrf.mxu0
      %v1042 = vadd.f32 %v1001, %v1041
      %1043 = vmatmul.f32.gmra.mxu0 %v922
      %v1044 = vpop.f32.mrf.mxu0
      %v1045 = vadd.f32 %v1004, %v1044
      %1046 = vmatmul.f32.gmra.mxu0 %v925
      %v1047 = vpop.f32.mrf.mxu0
      %v1048 = vadd.f32 %v1007, %v1047
      %1049 = vmatmul.f32.gmra.mxu0 %v928
      %v1050 = vpop.f32.mrf.mxu0
      %v1051 = vadd.f32 %v1010, %v1050
      %1052 = vmatmul.f32.gmra.mxu0 %v931
      %v1053 = vpop.f32.mrf.mxu0
      %v1054 = vadd.f32 %v1013, %v1053
      %1055 = vmatmul.f32.gmra.mxu0 %v934
      %v1056 = vpop.f32.mrf.mxu0
      %v1057 = vadd.f32 %v1016, %v1056
      %1058 = vmatmul.f32.gmra.mxu0 %v937
      %v1059 = vpop.f32.mrf.mxu0
      %v1060 = vadd.f32 %v1019, %v1059
      %1061 = vdwg.mxu0
      %v1062 = vmax.f32 %v1039, 0.0
      %v1063 = vmax.f32 %v1042, 0.0
      %v1064 = vmax.f32 %v1045, 0.0
      %v1065 = vmax.f32 %v1048, 0.0
      %v1066 = vmax.f32 %v1051, 0.0
      %v1067 = vmax.f32 %v1054, 0.0
      %v1068 = vmax.f32 %v1057, 0.0
      %v1069 = vmax.f32 %v1060, 0.0
      %v1070 = vld [vmem:[%s3] sm:$0xff]
      %v1071 = vld [vmem:[%s3 + $0x8] sm:$0xff]
      %v1072 = vld [vmem:[%s3 + $0x10] sm:$0xff]
      %v1073 = vld [vmem:[%s3 + $0x18] sm:$0xff]
      %v1074 = vld [vmem:[%s4] sm:$0x1]
      %v1076 = vperm.slane %v1074, 0
      %v1079 = vsel %vm441, %v1062, 0
      %v1082 = vsel %vm441, %v1063, 0
      %v1085 = vsel %vm441, %v1064, 0
      %v1088 = vsel %vm441, %v1065, 0
      %v1091 = vsel %vm441, %v1066, 0
      %v1094 = vsel %vm441, %v1067, 0
      %v1097 = vsel %vm441, %v1068, 0
      %v1100 = vsel %vm441, %v1069, 0
      %1102 = vmatpush.msra.mxu0 0.0
      %1103 = vmatpush.msra.mxu0 0.0
      %1104 = vmatpush.msra.mxu0 0.0
      %1105 = vmatpush.msra.mxu0 0.0
      %1106 = vmatpush.msra.mxu0 0.0
      %1107 = vmatpush.msra.mxu0 0.0
      %1108 = vmatpush.msra.mxu0 0.0
      %1109 = vmatpush.msra.mxu0 0.0
      %1110 = vmatpush.msra.mxu0 0.0
      %1111 = vmatpush.msra.mxu0 0.0
      %1112 = vmatpush.msra.mxu0 0.0
      %1113 = vmatpush.msra.mxu0 0.0
      %1114 = vmatpush.msra.mxu0 %v1073
      %1115 = vmatpush.msra.mxu0 %v1072
      %1116 = vmatpush.msra.mxu0 %v1071
      %1117 = vmatpush.msra.mxu0 %v1070
      %1118 = vmatmul.f32.gmra.mxu0 %v1079
      %v1119 = vpop.f32.mrf.mxu0
      %v1120 = vadd.f32 %v1076, %v1119
      %1121 = vmatmul.f32.gmra.mxu0 %v1082
      %v1122 = vpop.f32.mrf.mxu0
      %v1123 = vadd.f32 %v1076, %v1122
      %1124 = vmatmul.f32.gmra.mxu0 %v1085
      %v1125 = vpop.f32.mrf.mxu0
      %v1126 = vadd.f32 %v1076, %v1125
      %1127 = vmatmul.f32.gmra.mxu0 %v1088
      %v1128 = vpop.f32.mrf.mxu0
      %v1129 = vadd.f32 %v1076, %v1128
      %1130 = vmatmul.f32.gmra.mxu0 %v1091
      %v1131 = vpop.f32.mrf.mxu0
      %v1132 = vadd.f32 %v1076, %v1131
      %1133 = vmatmul.f32.gmra.mxu0 %v1094
      %v1134 = vpop.f32.mrf.mxu0
      %v1135 = vadd.f32 %v1076, %v1134
      %1136 = vmatmul.f32.gmra.mxu0 %v1097
      %v1137 = vpop.f32.mrf.mxu0
      %v1138 = vadd.f32 %v1076, %v1137
      %1139 = vmatmul.f32.gmra.mxu0 %v1100
      %v1140 = vpop.f32.mrf.mxu0
      %v1141 = vadd.f32 %v1076, %v1140
      %1142 = vdwg.mxu0
      %v1143 = vadd.f32 %v1120, %v543
      %v1144 = vadd.f32 %v1123, %v544
      %v1145 = vadd.f32 %v1126, %v545
      %v1146 = vadd.f32 %v1129, %v546
      %v1147 = vadd.f32 %v1132, %v547
      %v1148 = vadd.f32 %v1135, %v548
      %v1149 = vadd.f32 %v1138, %v549
      %v1150 = vadd.f32 %v1141, %v550
      %v1151 = vmax.f32 %v1143, 0.0
      %v1152 = vmax.f32 %v1144, 0.0
      %v1153 = vmax.f32 %v1145, 0.0
      %v1154 = vmax.f32 %v1146, 0.0
      %v1155 = vmax.f32 %v1147, 0.0
      %v1156 = vmax.f32 %v1148, 0.0
      %v1157 = vmax.f32 %v1149, 0.0
      %v1158 = vmax.f32 %v1150, 0.0
      %1159 = vst.msk [vmem:[%s551 + $0x1] sm:$0xff] %vm441, %v1151
      %1160 = vst.msk [vmem:[%s551 + $0x11] sm:$0xff] %vm441, %v1152
      %1161 = vst.msk [vmem:[%s551 + $0x21] sm:$0xff] %vm441, %v1153
      %1162 = vst.msk [vmem:[%s551 + $0x31] sm:$0xff] %vm441, %v1154
      %1163 = vst.msk [vmem:[%s551 + $0x41] sm:$0xff] %vm441, %v1155
      %1164 = vst.msk [vmem:[%s551 + $0x51] sm:$0xff] %vm441, %v1156
      %1165 = vst.msk [vmem:[%s551 + $0x61] sm:$0xff] %vm441, %v1157
      %1166 = vst.msk [vmem:[%s551 + $0x71] sm:$0xff] %vm441, %v1158
      %v1167 = vld [vmem:[#allocation2] sm:$0xff]
      %v1168 = vld [vmem:[#allocation2 + $0x10] sm:$0xff]
      %v1169 = vld [vmem:[#allocation2 + $0x20] sm:$0xff]
      %v1170 = vld [vmem:[#allocation2 + $0x30] sm:$0xff]
      %v1171 = vld [vmem:[#allocation2 + $0x40] sm:$0xff]
      %v1172 = vld [vmem:[#allocation2 + $0x50] sm:$0xff]
      %v1173 = vld [vmem:[#allocation2 + $0x60] sm:$0xff]
      %v1174 = vld [vmem:[#allocation2 + $0x70] sm:$0xff]
      %v1175 = vld [vmem:[#allocation2 + $0x1] sm:$0xff]
      %v1176 = vld [vmem:[#allocation2 + $0x11] sm:$0xff]
      %v1177 = vld [vmem:[#allocation2 + $0x21] sm:$0xff]
      %v1178 = vld [vmem:[#allocation2 + $0x31] sm:$0xff]
      %v1179 = vld [vmem:[#allocation2 + $0x41] sm:$0xff]
      %v1180 = vld [vmem:[#allocation2 + $0x51] sm:$0xff]
      %v1181 = vld [vmem:[#allocation2 + $0x61] sm:$0xff]
      %v1182 = vld [vmem:[#allocation2 + $0x71] sm:$0xff]
      %v1183 = vld [vmem:[#allocation2 + $0x2] sm:$0xff]
      %v1184 = vld [vmem:[#allocation2 + $0x12] sm:$0xff]
      %v1185 = vld [vmem:[#allocation2 + $0x22] sm:$0xff]
      %v1186 = vld [vmem:[#allocation2 + $0x32] sm:$0xff]
      %v1187 = vld [vmem:[#allocation2 + $0x42] sm:$0xff]
      %v1188 = vld [vmem:[#allocation2 + $0x52] sm:$0xff]
      %v1189 = vld [vmem:[#allocation2 + $0x62] sm:$0xff]
      %v1190 = vld [vmem:[#allocation2 + $0x72] sm:$0xff]
      %v1191 = vld [vmem:[%s551] sm:$0xff]
      %v1192 = vld [vmem:[%s551 + $0x10] sm:$0xff]
      %v1193 = vld [vmem:[%s551 + $0x20] sm:$0xff]
      %v1194 = vld [vmem:[%s551 + $0x30] sm:$0xff]
      %v1195 = vld [vmem:[%s551 + $0x40] sm:$0xff]
      %v1196 = vld [vmem:[%s551 + $0x50] sm:$0xff]
      %v1197 = vld [vmem:[%s551 + $0x60] sm:$0xff]
      %v1198 = vld [vmem:[%s551 + $0x70] sm:$0xff]
      %v1199 = vld [vmem:[%s551 + $0x1] sm:$0xff]
      %v1200 = vld [vmem:[%s551 + $0x11] sm:$0xff]
      %v1201 = vld [vmem:[%s551 + $0x21] sm:$0xff]
      %v1202 = vld [vmem:[%s551 + $0x31] sm:$0xff]
      %v1203 = vld [vmem:[%s551 + $0x41] sm:$0xff]
      %v1204 = vld [vmem:[%s551 + $0x51] sm:$0xff]
      %v1205 = vld [vmem:[%s551 + $0x61] sm:$0xff]
      %v1206 = vld [vmem:[%s551 + $0x71] sm:$0xff]
      %v1207 = vld [vmem:[%s551 + $0x2] sm:$0xff]
      %v1208 = vld [vmem:[%s551 + $0x12] sm:$0xff]
      %v1209 = vld [vmem:[%s551 + $0x22] sm:$0xff]
      %v1210 = vld [vmem:[%s551 + $0x32] sm:$0xff]
      %v1211 = vld [vmem:[%s551 + $0x42] sm:$0xff]
      %v1212 = vld [vmem:[%s551 + $0x52] sm:$0xff]
      %v1213 = vld [vmem:[%s551 + $0x62] sm:$0xff]
      %v1214 = vld [vmem:[%s551 + $0x72] sm:$0xff]
      %v1215 = vld [vmem:[%s608] sm:$0xff]
      %v1216 = vld [vmem:[%s608 + $0x10] sm:$0xff]
      %v1217 = vld [vmem:[%s608 + $0x20] sm:$0xff]
      %v1218 = vld [vmem:[%s608 + $0x30] sm:$0xff]
      %v1219 = vld [vmem:[%s608 + $0x40] sm:$0xff]
      %v1220 = vld [vmem:[%s608 + $0x50] sm:$0xff]
      %v1221 = vld [vmem:[%s608 + $0x60] sm:$0xff]
      %v1222 = vld [vmem:[%s608 + $0x70] sm:$0xff]
      %v1223 = vld [vmem:[%s608 + $0x1] sm:$0xff]
      %v1224 = vld [vmem:[%s608 + $0x11] sm:$0xff]
      %v1225 = vld [vmem:[%s608 + $0x21] sm:$0xff]
      %v1226 = vld [vmem:[%s608 + $0x31] sm:$0xff]
      %v1227 = vld [vmem:[%s608 + $0x41] sm:$0xff]
      %v1228 = vld [vmem:[%s608 + $0x51] sm:$0xff]
      %v1229 = vld [vmem:[%s608 + $0x61] sm:$0xff]
      %v1230 = vld [vmem:[%s608 + $0x71] sm:$0xff]
      %v1231 = vld [vmem:[%s608 + $0x2] sm:$0xff]
      %v1232 = vld [vmem:[%s608 + $0x12] sm:$0xff]
      %v1233 = vld [vmem:[%s608 + $0x22] sm:$0xff]
      %v1234 = vld [vmem:[%s608 + $0x32] sm:$0xff]
      %v1235 = vld [vmem:[%s608 + $0x42] sm:$0xff]
      %v1236 = vld [vmem:[%s608 + $0x52] sm:$0xff]
      %v1237 = vld [vmem:[%s608 + $0x62] sm:$0xff]
      %v1238 = vld [vmem:[%s608 + $0x72] sm:$0xff]
      %1247 = vrot.lane.b32.xlu0 %v1175, 32
      %v1248 = vpop.permute.xlu0 %1247
      %1249 = vrot.lane.b32.xlu0 %v1176, 32
      %v1250 = vpop.permute.xlu0 %1249
      %1251 = vrot.lane.b32.xlu0 %v1177, 32
      %v1252 = vpop.permute.xlu0 %1251
      %1253 = vrot.lane.b32.xlu0 %v1178, 32
      %v1254 = vpop.permute.xlu0 %1253
      %1255 = vrot.lane.b32.xlu0 %v1179, 32
      %v1256 = vpop.permute.xlu0 %1255
      %1257 = vrot.lane.b32.xlu0 %v1180, 32
      %v1258 = vpop.permute.xlu0 %1257
      %1259 = vrot.lane.b32.xlu0 %v1181, 32
      %v1260 = vpop.permute.xlu0 %1259
      %1261 = vrot.lane.b32.xlu0 %v1182, 32
      %v1262 = vpop.permute.xlu0 %1261
      %1279 = vrot.lane.b32.xlu0 %v1183, 64
      %v1280 = vpop.permute.xlu0 %1279
      %1281 = vrot.lane.b32.xlu0 %v1184, 64
      %v1282 = vpop.permute.xlu0 %1281
      %1283 = vrot.lane.b32.xlu0 %v1185, 64
      %v1284 = vpop.permute.xlu0 %1283
      %1285 = vrot.lane.b32.xlu0 %v1186, 64
      %v1286 = vpop.permute.xlu0 %1285
      %1287 = vrot.lane.b32.xlu0 %v1187, 64
      %v1288 = vpop.permute.xlu0 %1287
      %1289 = vrot.lane.b32.xlu0 %v1188, 64
      %v1290 = vpop.permute.xlu0 %1289
      %1291 = vrot.lane.b32.xlu0 %v1189, 64
      %v1292 = vpop.permute.xlu0 %1291
      %1293 = vrot.lane.b32.xlu0 %v1190, 64
      %v1294 = vpop.permute.xlu0 %1293
      %1311 = vrot.lane.b32.xlu0 %v1191, 96
      %v1312 = vpop.permute.xlu0 %1311
      %1313 = vrot.lane.b32.xlu0 %v1192, 96
      %v1314 = vpop.permute.xlu0 %1313
      %1315 = vrot.lane.b32.xlu0 %v1193, 96
      %v1316 = vpop.permute.xlu0 %1315
      %1317 = vrot.lane.b32.xlu0 %v1194, 96
      %v1318 = vpop.permute.xlu0 %1317
      %1319 = vrot.lane.b32.xlu0 %v1195, 96
      %v1320 = vpop.permute.xlu0 %1319
      %1321 = vrot.lane.b32.xlu0 %v1196, 96
      %v1322 = vpop.permute.xlu0 %1321
      %1323 = vrot.lane.b32.xlu0 %v1197, 96
      %v1324 = vpop.permute.xlu0 %1323
      %1325 = vrot.lane.b32.xlu0 %v1198, 96
      %v1326 = vpop.permute.xlu0 %1325
      %1343 = vrot.lane.b32.xlu0 %v1207, 32
      %v1344 = vpop.permute.xlu0 %1343
      %1345 = vrot.lane.b32.xlu0 %v1208, 32
      %v1346 = vpop.permute.xlu0 %1345
      %1347 = vrot.lane.b32.xlu0 %v1209, 32
      %v1348 = vpop.permute.xlu0 %1347
      %1349 = vrot.lane.b32.xlu0 %v1210, 32
      %v1350 = vpop.permute.xlu0 %1349
      %1351 = vrot.lane.b32.xlu0 %v1211, 32
      %v1352 = vpop.permute.xlu0 %1351
      %1353 = vrot.lane.b32.xlu0 %v1212, 32
      %v1354 = vpop.permute.xlu0 %1353
      %1355 = vrot.lane.b32.xlu0 %v1213, 32
      %v1356 = vpop.permute.xlu0 %1355
      %1357 = vrot.lane.b32.xlu0 %v1214, 32
      %v1358 = vpop.permute.xlu0 %1357
      %1375 = vrot.lane.b32.xlu0 %v1215, 64
      %v1376 = vpop.permute.xlu0 %1375
      %1377 = vrot.lane.b32.xlu0 %v1216, 64
      %v1378 = vpop.permute.xlu0 %1377
      %1379 = vrot.lane.b32.xlu0 %v1217, 64
      %v1380 = vpop.permute.xlu0 %1379
      %1381 = vrot.lane.b32.xlu0 %v1218, 64
      %v1382 = vpop.permute.xlu0 %1381
      %1383 = vrot.lane.b32.xlu0 %v1219, 64
      %v1384 = vpop.permute.xlu0 %1383
      %1385 = vrot.lane.b32.xlu0 %v1220, 64
      %v1386 = vpop.permute.xlu0 %1385
      %1387 = vrot.lane.b32.xlu0 %v1221, 64
      %v1388 = vpop.permute.xlu0 %1387
      %1389 = vrot.lane.b32.xlu0 %v1222, 64
      %v1390 = vpop.permute.xlu0 %1389
      %1407 = vrot.lane.b32.xlu0 %v1223, 96
      %v1408 = vpop.permute.xlu0 %1407
      %1409 = vrot.lane.b32.xlu0 %v1224, 96
      %v1410 = vpop.permute.xlu0 %1409
      %1411 = vrot.lane.b32.xlu0 %v1225, 96
      %v1412 = vpop.permute.xlu0 %1411
      %1413 = vrot.lane.b32.xlu0 %v1226, 96
      %v1414 = vpop.permute.xlu0 %1413
      %1415 = vrot.lane.b32.xlu0 %v1227, 96
      %v1416 = vpop.permute.xlu0 %1415
      %1417 = vrot.lane.b32.xlu0 %v1228, 96
      %v1418 = vpop.permute.xlu0 %1417
      %1419 = vrot.lane.b32.xlu0 %v1229, 96
      %v1420 = vpop.permute.xlu0 %1419
      %1421 = vrot.lane.b32.xlu0 %v1230, 96
      %v1422 = vpop.permute.xlu0 %1421
      %v1431 = vsel %vm441, %v1167, %v1248
      %v1432 = vsel %vm441, %v1168, %v1250
      %v1433 = vsel %vm441, %v1169, %v1252
      %v1434 = vsel %vm441, %v1170, %v1254
      %v1435 = vsel %vm441, %v1171, %v1256
      %v1436 = vsel %vm441, %v1172, %v1258
      %v1437 = vsel %vm441, %v1173, %v1260
      %v1438 = vsel %vm441, %v1174, %v1262
      %v1439 = vsel %vm833, %v1431, %v1280
      %v1440 = vsel %vm833, %v1432, %v1282
      %v1441 = vsel %vm833, %v1433, %v1284
      %v1442 = vsel %vm833, %v1434, %v1286
      %v1443 = vsel %vm833, %v1435, %v1288
      %v1444 = vsel %vm833, %v1436, %v1290
      %v1445 = vsel %vm833, %v1437, %v1292
      %v1446 = vsel %vm833, %v1438, %v1294
      %v1447 = vsel %vm842, %v1439, %v1312
      %v1448 = vsel %vm842, %v1440, %v1314
      %v1449 = vsel %vm842, %v1441, %v1316
      %v1450 = vsel %vm842, %v1442, %v1318
      %v1451 = vsel %vm842, %v1443, %v1320
      %v1452 = vsel %vm842, %v1444, %v1322
      %v1453 = vsel %vm842, %v1445, %v1324
      %v1454 = vsel %vm842, %v1446, %v1326
      %v1455 = vsel %vm441, %v1199, %v1344
      %v1456 = vsel %vm441, %v1200, %v1346
      %v1457 = vsel %vm441, %v1201, %v1348
      %v1458 = vsel %vm441, %v1202, %v1350
      %v1459 = vsel %vm441, %v1203, %v1352
      %v1460 = vsel %vm441, %v1204, %v1354
      %v1461 = vsel %vm441, %v1205, %v1356
      %v1462 = vsel %vm441, %v1206, %v1358
      %v1463 = vsel %vm833, %v1455, %v1376
      %v1464 = vsel %vm833, %v1456, %v1378
      %v1465 = vsel %vm833, %v1457, %v1380
      %v1466 = vsel %vm833, %v1458, %v1382
      %v1467 = vsel %vm833, %v1459, %v1384
      %v1468 = vsel %vm833, %v1460, %v1386
      %v1469 = vsel %vm833, %v1461, %v1388
      %v1470 = vsel %vm833, %v1462, %v1390
      %v1471 = vsel %vm842, %v1463, %v1408
      %v1472 = vsel %vm842, %v1464, %v1410
      %v1473 = vsel %vm842, %v1465, %v1412
      %v1474 = vsel %vm842, %v1466, %v1414
      %v1475 = vsel %vm842, %v1467, %v1416
      %v1476 = vsel %vm842, %v1468, %v1418
      %v1477 = vsel %vm842, %v1469, %v1420
      %v1478 = vsel %vm842, %v1470, %v1422
      %v1479 = vld [vmem:[%s5] sm:$0xff]
      %v1480 = vld [vmem:[%s5 + $0x8] sm:$0xff]
      %v1481 = vld [vmem:[%s5 + $0x10] sm:$0xff]
      %v1482 = vld [vmem:[%s5 + $0x18] sm:$0xff]
      %v1483 = vld [vmem:[%s5 + $0x20] sm:$0xff]
      %v1484 = vld [vmem:[%s5 + $0x28] sm:$0xff]
      %v1485 = vld [vmem:[%s5 + $0x30] sm:$0xff]
      %v1486 = vld [vmem:[%s5 + $0x38] sm:$0xff]
      %v1487 = vld [vmem:[%s5 + $0x40] sm:$0xff]
      %v1488 = vld [vmem:[%s5 + $0x48] sm:$0xff]
      %v1489 = vld [vmem:[%s5 + $0x50] sm:$0xff]
      %v1490 = vld [vmem:[%s5 + $0x58] sm:$0xff]
      %v1491 = vld [vmem:[%s5 + $0x60] sm:$0xff]
      %v1492 = vld [vmem:[%s5 + $0x68] sm:$0xff]
      %v1493 = vld [vmem:[%s5 + $0x70] sm:$0xff]
      %v1494 = vld [vmem:[%s5 + $0x78] sm:$0xff]
      %v1495 = vld [vmem:[%s5 + $0x80] sm:$0xff]
      %v1496 = vld [vmem:[%s5 + $0x88] sm:$0xff]
      %v1497 = vld [vmem:[%s5 + $0x90] sm:$0xff]
      %v1498 = vld [vmem:[%s5 + $0x98] sm:$0xff]
      %v1499 = vld [vmem:[%s5 + $0xa0] sm:$0xff]
      %v1500 = vld [vmem:[%s5 + $0xa8] sm:$0xff]
      %v1501 = vld [vmem:[%s5 + $0xb0] sm:$0xff]
      %v1502 = vld [vmem:[%s5 + $0xb8] sm:$0xff]
      %v1503 = vld [vmem:[%s5 + $0xc0] sm:$0xff]
      %v1504 = vld [vmem:[%s5 + $0xc8] sm:$0xff]
      %v1505 = vld [vmem:[%s5 + $0xd0] sm:$0xff]
      %v1506 = vld [vmem:[%s5 + $0xd8] sm:$0xff]
      %v1507 = vld [vmem:[%s5 + $0xe0] sm:$0xff]
      %v1508 = vld [vmem:[%s5 + $0xe8] sm:$0xff]
      %v1509 = vld [vmem:[%s5 + $0xf0] sm:$0xff]
      %v1510 = vld [vmem:[%s5 + $0xf8] sm:$0xff]
      %v1511 = vld [vmem:[%s5 + $0x100] sm:$0xff]
      %v1512 = vld [vmem:[%s5 + $0x108] sm:$0xff]
      %v1513 = vld [vmem:[%s5 + $0x110] sm:$0xff]
      %v1514 = vld [vmem:[%s5 + $0x118] sm:$0xff]
      %v1515 = vld [vmem:[%s6] sm:$0x1]
      %v1517 = vperm.slane %v1515, 0
      %v1520 = vsel %vm441, %v1231, 0
      %v1523 = vsel %vm441, %v1232, 0
      %v1526 = vsel %vm441, %v1233, 0
      %v1529 = vsel %vm441, %v1234, 0
      %v1532 = vsel %vm441, %v1235, 0
      %v1535 = vsel %vm441, %v1236, 0
      %v1538 = vsel %vm441, %v1237, 0
      %v1541 = vsel %vm441, %v1238, 0
      %1543 = vmatpush.msra.mxu0 %v1494
      %1544 = vmatpush.msra.mxu0 %v1493
      %1545 = vmatpush.msra.mxu0 %v1492
      %1546 = vmatpush.msra.mxu0 %v1491
      %1547 = vmatpush.msra.mxu0 %v1490
      %1548 = vmatpush.msra.mxu0 %v1489
      %1549 = vmatpush.msra.mxu0 %v1488
      %1550 = vmatpush.msra.mxu0 %v1487
      %1551 = vmatpush.msra.mxu0 %v1486
      %1552 = vmatpush.msra.mxu0 %v1485
      %1553 = vmatpush.msra.mxu0 %v1484
      %1554 = vmatpush.msra.mxu0 %v1483
      %1555 = vmatpush.msra.mxu0 %v1482
      %1556 = vmatpush.msra.mxu0 %v1481
      %1557 = vmatpush.msra.mxu0 %v1480
      %1558 = vmatpush.msra.mxu0 %v1479
      %1559 = vmatmul.f32.gmra.mxu0 %v1447
      %v1560 = vpop.f32.mrf.mxu0
      %v1561 = vadd.f32 %v1517, %v1560
      %1562 = vmatmul.f32.gmra.mxu0 %v1448
      %v1563 = vpop.f32.mrf.mxu0
      %v1564 = vadd.f32 %v1517, %v1563
      %1565 = vmatmul.f32.gmra.mxu0 %v1449
      %v1566 = vpop.f32.mrf.mxu0
      %v1567 = vadd.f32 %v1517, %v1566
      %1568 = vmatmul.f32.gmra.mxu0 %v1450
      %v1569 = vpop.f32.mrf.mxu0
      %v1570 = vadd.f32 %v1517, %v1569
      %1571 = vmatmul.f32.gmra.mxu0 %v1451
      %v1572 = vpop.f32.mrf.mxu0
      %v1573 = vadd.f32 %v1517, %v1572
      %1574 = vmatmul.f32.gmra.mxu0 %v1452
      %v1575 = vpop.f32.mrf.mxu0
      %v1576 = vadd.f32 %v1517, %v1575
      %1577 = vmatmul.f32.gmra.mxu0 %v1453
      %v1578 = vpop.f32.mrf.mxu0
      %v1579 = vadd.f32 %v1517, %v1578
      %1580 = vmatmul.f32.gmra.mxu0 %v1454
      %v1581 = vpop.f32.mrf.mxu0
      %v1582 = vadd.f32 %v1517, %v1581
      %1583 = vdwg.mxu0
      %1584 = vmatpush.msra.mxu0 %v1510
      %1585 = vmatpush.msra.mxu0 %v1509
      %1586 = vmatpush.msra.mxu0 %v1508
      %1587 = vmatpush.msra.mxu0 %v1507
      %1588 = vmatpush.msra.mxu0 %v1506
      %1589 = vmatpush.msra.mxu0 %v1505
      %1590 = vmatpush.msra.mxu0 %v1504
      %1591 = vmatpush.msra.mxu0 %v1503
      %1592 = vmatpush.msra.mxu0 %v1502
      %1593 = vmatpush.msra.mxu0 %v1501
      %1594 = vmatpush.msra.mxu0 %v1500
      %1595 = vmatpush.msra.mxu0 %v1499
      %1596 = vmatpush.msra.mxu0 %v1498
      %1597 = vmatpush.msra.mxu0 %v1497
      %1598 = vmatpush.msra.mxu0 %v1496
      %1599 = vmatpush.msra.mxu0 %v1495
      %1600 = vmatmul.f32.gmra.mxu0 %v1471
      %v1601 = vpop.f32.mrf.mxu0
      %v1602 = vadd.f32 %v1561, %v1601
      %1603 = vmatmul.f32.gmra.mxu0 %v1472
      %v1604 = vpop.f32.mrf.mxu0
      %v1605 = vadd.f32 %v1564, %v1604
      %1606 = vmatmul.f32.gmra.mxu0 %v1473
      %v1607 = vpop.f32.mrf.mxu0
      %v1608 = vadd.f32 %v1567, %v1607
      %1609 = vmatmul.f32.gmra.mxu0 %v1474
      %v1610 = vpop.f32.mrf.mxu0
      %v1611 = vadd.f32 %v1570, %v1610
      %1612 = vmatmul.f32.gmra.mxu0 %v1475
      %v1613 = vpop.f32.mrf.mxu0
      %v1614 = vadd.f32 %v1573, %v1613
      %1615 = vmatmul.f32.gmra.mxu0 %v1476
      %v1616 = vpop.f32.mrf.mxu0
      %v1617 = vadd.f32 %v1576, %v1616
      %1618 = vmatmul.f32.gmra.mxu0 %v1477
      %v1619 = vpop.f32.mrf.mxu0
      %v1620 = vadd.f32 %v1579, %v1619
      %1621 = vmatmul.f32.gmra.mxu0 %v1478
      %v1622 = vpop.f32.mrf.mxu0
      %v1623 = vadd.f32 %v1582, %v1622
      %1624 = vdwg.mxu0
      %1625 = vmatpush.msra.mxu0 0.0
      %1626 = vmatpush.msra.mxu0 0.0
      %1627 = vmatpush.msra.mxu0 0.0
      %1628 = vmatpush.msra.mxu0 0.0
      %1629 = vmatpush.msra.mxu0 0.0
      %1630 = vmatpush.msra.mxu0 0.0
      %1631 = vmatpush.msra.mxu0 0.0
      %1632 = vmatpush.msra.mxu0 0.0
      %1633 = vmatpush.msra.mxu0 0.0
      %1634 = vmatpush.msra.mxu0 0.0
      %1635 = vmatpush.msra.mxu0 0.0
      %1636 = vmatpush.msra.mxu0 0.0
      %1637 = vmatpush.msra.mxu0 %v1514
      %1638 = vmatpush.msra.mxu0 %v1513
      %1639 = vmatpush.msra.mxu0 %v1512
      %1640 = vmatpush.msra.mxu0 %v1511
      %1641 = vmatmul.f32.gmra.mxu0 %v1520
      %v1642 = vpop.f32.mrf.mxu0
      %v1643 = vadd.f32 %v1602, %v1642
      %1644 = vmatmul.f32.gmra.mxu0 %v1523
      %v1645 = vpop.f32.mrf.mxu0
      %v1646 = vadd.f32 %v1605, %v1645
      %1647 = vmatmul.f32.gmra.mxu0 %v1526
      %v1648 = vpop.f32.mrf.mxu0
      %v1649 = vadd.f32 %v1608, %v1648
      %1650 = vmatmul.f32.gmra.mxu0 %v1529
      %v1651 = vpop.f32.mrf.mxu0
      %v1652 = vadd.f32 %v1611, %v1651
      %1653 = vmatmul.f32.gmra.mxu0 %v1532
      %v1654 = vpop.f32.mrf.mxu0
      %v1655 = vadd.f32 %v1614, %v1654
      %1656 = vmatmul.f32.gmra.mxu0 %v1535
      %v1657 = vpop.f32.mrf.mxu0
      %v1658 = vadd.f32 %v1617, %v1657
      %1659 = vmatmul.f32.gmra.mxu0 %v1538
      %v1660 = vpop.f32.mrf.mxu0
      %v1661 = vadd.f32 %v1620, %v1660
      %1662 = vmatmul.f32.gmra.mxu0 %v1541
      %v1663 = vpop.f32.mrf.mxu0
      %v1664 = vadd.f32 %v1623, %v1663
      %1665 = vdwg.mxu0
      %v1666 = vmax.f32 %v1643, 0.0
      %v1667 = vmax.f32 %v1646, 0.0
      %v1668 = vmax.f32 %v1649, 0.0
      %v1669 = vmax.f32 %v1652, 0.0
      %v1670 = vmax.f32 %v1655, 0.0
      %v1671 = vmax.f32 %v1658, 0.0
      %v1672 = vmax.f32 %v1661, 0.0
      %v1673 = vmax.f32 %v1664, 0.0
      %v1674 = vld [vmem:[%s7] sm:$0xff]
      %v1675 = vld [vmem:[%s7 + $0x8] sm:$0xff]
      %v1676 = vld [vmem:[%s7 + $0x10] sm:$0xff]
      %v1677 = vld [vmem:[%s7 + $0x18] sm:$0xff]
      %v1678 = vld [vmem:[%s8] sm:$0x1]
      %v1680 = vperm.slane %v1678, 0
      %v1683 = vsel %vm441, %v1666, 0
      %v1686 = vsel %vm441, %v1667, 0
      %v1689 = vsel %vm441, %v1668, 0
      %v1692 = vsel %vm441, %v1669, 0
      %v1695 = vsel %vm441, %v1670, 0
      %v1698 = vsel %vm441, %v1671, 0
      %v1701 = vsel %vm441, %v1672, 0
      %v1704 = vsel %vm441, %v1673, 0
      %1706 = vmatpush.msra.mxu0 0.0
      %1707 = vmatpush.msra.mxu0 0.0
      %1708 = vmatpush.msra.mxu0 0.0
      %1709 = vmatpush.msra.mxu0 0.0
      %1710 = vmatpush.msra.mxu0 0.0
      %1711 = vmatpush.msra.mxu0 0.0
      %1712 = vmatpush.msra.mxu0 0.0
      %1713 = vmatpush.msra.mxu0 0.0
      %1714 = vmatpush.msra.mxu0 0.0
      %1715 = vmatpush.msra.mxu0 0.0
      %1716 = vmatpush.msra.mxu0 0.0
      %1717 = vmatpush.msra.mxu0 0.0
      %1718 = vmatpush.msra.mxu0 %v1677
      %1719 = vmatpush.msra.mxu0 %v1676
      %1720 = vmatpush.msra.mxu0 %v1675
      %1721 = vmatpush.msra.mxu0 %v1674
      %1722 = vmatmul.f32.gmra.mxu0 %v1683
      %v1723 = vpop.f32.mrf.mxu0
      %v1724 = vadd.f32 %v1680, %v1723
      %1725 = vmatmul.f32.gmra.mxu0 %v1686
      %v1726 = vpop.f32.mrf.mxu0
      %v1727 = vadd.f32 %v1680, %v1726
      %1728 = vmatmul.f32.gmra.mxu0 %v1689
      %v1729 = vpop.f32.mrf.mxu0
      %v1730 = vadd.f32 %v1680, %v1729
      %1731 = vmatmul.f32.gmra.mxu0 %v1692
      %v1732 = vpop.f32.mrf.mxu0
      %v1733 = vadd.f32 %v1680, %v1732
      %1734 = vmatmul.f32.gmra.mxu0 %v1695
      %v1735 = vpop.f32.mrf.mxu0
      %v1736 = vadd.f32 %v1680, %v1735
      %1737 = vmatmul.f32.gmra.mxu0 %v1698
      %v1738 = vpop.f32.mrf.mxu0
      %v1739 = vadd.f32 %v1680, %v1738
      %1740 = vmatmul.f32.gmra.mxu0 %v1701
      %v1741 = vpop.f32.mrf.mxu0
      %v1742 = vadd.f32 %v1680, %v1741
      %1743 = vmatmul.f32.gmra.mxu0 %v1704
      %v1744 = vpop.f32.mrf.mxu0
      %v1745 = vadd.f32 %v1680, %v1744
      %1746 = vdwg.mxu0
      %v1747 = vadd.f32 %v1724, %v1151
      %v1748 = vadd.f32 %v1727, %v1152
      %v1749 = vadd.f32 %v1730, %v1153
      %v1750 = vadd.f32 %v1733, %v1154
      %v1751 = vadd.f32 %v1736, %v1155
      %v1752 = vadd.f32 %v1739, %v1156
      %v1753 = vadd.f32 %v1742, %v1157
      %v1754 = vadd.f32 %v1745, %v1158
      %v1755 = vmax.f32 %v1747, 0.0
      %v1756 = vmax.f32 %v1748, 0.0
      %v1757 = vmax.f32 %v1749, 0.0
      %v1758 = vmax.f32 %v1750, 0.0
      %v1759 = vmax.f32 %v1751, 0.0
      %v1760 = vmax.f32 %v1752, 0.0
      %v1761 = vmax.f32 %v1753, 0.0
      %v1762 = vmax.f32 %v1754, 0.0
      %1763 = vst.msk [vmem:[%s551 + $0x1] sm:$0xff] %vm441, %v1755
      %1764 = vst.msk [vmem:[%s551 + $0x11] sm:$0xff] %vm441, %v1756
      %1765 = vst.msk [vmem:[%s551 + $0x21] sm:$0xff] %vm441, %v1757
      %1766 = vst.msk [vmem:[%s551 + $0x31] sm:$0xff] %vm441, %v1758
      %1767 = vst.msk [vmem:[%s551 + $0x41] sm:$0xff] %vm441, %v1759
      %1768 = vst.msk [vmem:[%s551 + $0x51] sm:$0xff] %vm441, %v1760
      %1769 = vst.msk [vmem:[%s551 + $0x61] sm:$0xff] %vm441, %v1761
      %1770 = vst.msk [vmem:[%s551 + $0x71] sm:$0xff] %vm441, %v1762
      %v1771 = vld [vmem:[#allocation2] sm:$0xff]
      %v1772 = vld [vmem:[#allocation2 + $0x10] sm:$0xff]
      %v1773 = vld [vmem:[#allocation2 + $0x20] sm:$0xff]
      %v1774 = vld [vmem:[#allocation2 + $0x30] sm:$0xff]
      %v1775 = vld [vmem:[#allocation2 + $0x40] sm:$0xff]
      %v1776 = vld [vmem:[#allocation2 + $0x50] sm:$0xff]
      %v1777 = vld [vmem:[#allocation2 + $0x60] sm:$0xff]
      %v1778 = vld [vmem:[#allocation2 + $0x70] sm:$0xff]
      %v1779 = vld [vmem:[#allocation2 + $0x1] sm:$0xff]
      %v1780 = vld [vmem:[#allocation2 + $0x11] sm:$0xff]
      %v1781 = vld [vmem:[#allocation2 + $0x21] sm:$0xff]
      %v1782 = vld [vmem:[#allocation2 + $0x31] sm:$0xff]
      %v1783 = vld [vmem:[#allocation2 + $0x41] sm:$0xff]
      %v1784 = vld [vmem:[#allocation2 + $0x51] sm:$0xff]
      %v1785 = vld [vmem:[#allocation2 + $0x61] sm:$0xff]
      %v1786 = vld [vmem:[#allocation2 + $0x71] sm:$0xff]
      %v1787 = vld [vmem:[#allocation2 + $0x2] sm:$0xff]
      %v1788 = vld [vmem:[#allocation2 + $0x12] sm:$0xff]
      %v1789 = vld [vmem:[#allocation2 + $0x22] sm:$0xff]
      %v1790 = vld [vmem:[#allocation2 + $0x32] sm:$0xff]
      %v1791 = vld [vmem:[#allocation2 + $0x42] sm:$0xff]
      %v1792 = vld [vmem:[#allocation2 + $0x52] sm:$0xff]
      %v1793 = vld [vmem:[#allocation2 + $0x62] sm:$0xff]
      %v1794 = vld [vmem:[#allocation2 + $0x72] sm:$0xff]
      %v1795 = vld [vmem:[%s551] sm:$0xff]
      %v1796 = vld [vmem:[%s551 + $0x10] sm:$0xff]
      %v1797 = vld [vmem:[%s551 + $0x20] sm:$0xff]
      %v1798 = vld [vmem:[%s551 + $0x30] sm:$0xff]
      %v1799 = vld [vmem:[%s551 + $0x40] sm:$0xff]
      %v1800 = vld [vmem:[%s551 + $0x50] sm:$0xff]
      %v1801 = vld [vmem:[%s551 + $0x60] sm:$0xff]
      %v1802 = vld [vmem:[%s551 + $0x70] sm:$0xff]
      %v1803 = vld [vmem:[%s551 + $0x1] sm:$0xff]
      %v1804 = vld [vmem:[%s551 + $0x11] sm:$0xff]
      %v1805 = vld [vmem:[%s551 + $0x21] sm:$0xff]
      %v1806 = vld [vmem:[%s551 + $0x31] sm:$0xff]
      %v1807 = vld [vmem:[%s551 + $0x41] sm:$0xff]
      %v1808 = vld [vmem:[%s551 + $0x51] sm:$0xff]
      %v1809 = vld [vmem:[%s551 + $0x61] sm:$0xff]
      %v1810 = vld [vmem:[%s551 + $0x71] sm:$0xff]
      %v1811 = vld [vmem:[%s551 + $0x2] sm:$0xff]
      %v1812 = vld [vmem:[%s551 + $0x12] sm:$0xff]
      %v1813 = vld [vmem:[%s551 + $0x22] sm:$0xff]
      %v1814 = vld [vmem:[%s551 + $0x32] sm:$0xff]
      %v1815 = vld [vmem:[%s551 + $0x42] sm:$0xff]
      %v1816 = vld [vmem:[%s551 + $0x52] sm:$0xff]
      %v1817 = vld [vmem:[%s551 + $0x62] sm:$0xff]
      %v1818 = vld [vmem:[%s551 + $0x72] sm:$0xff]
      %v1819 = vld [vmem:[%s608] sm:$0xff]
      %v1820 = vld [vmem:[%s608 + $0x10] sm:$0xff]
      %v1821 = vld [vmem:[%s608 + $0x20] sm:$0xff]
      %v1822 = vld [vmem:[%s608 + $0x30] sm:$0xff]
      %v1823 = vld [vmem:[%s608 + $0x40] sm:$0xff]
      %v1824 = vld [vmem:[%s608 + $0x50] sm:$0xff]
      %v1825 = vld [vmem:[%s608 + $0x60] sm:$0xff]
      %v1826 = vld [vmem:[%s608 + $0x70] sm:$0xff]
      %v1827 = vld [vmem:[%s608 + $0x1] sm:$0xff]
      %v1828 = vld [vmem:[%s608 + $0x11] sm:$0xff]
      %v1829 = vld [vmem:[%s608 + $0x21] sm:$0xff]
      %v1830 = vld [vmem:[%s608 + $0x31] sm:$0xff]
      %v1831 = vld [vmem:[%s608 + $0x41] sm:$0xff]
      %v1832 = vld [vmem:[%s608 + $0x51] sm:$0xff]
      %v1833 = vld [vmem:[%s608 + $0x61] sm:$0xff]
      %v1834 = vld [vmem:[%s608 + $0x71] sm:$0xff]
      %v1835 = vld [vmem:[%s608 + $0x2] sm:$0xff]
      %v1836 = vld [vmem:[%s608 + $0x12] sm:$0xff]
      %v1837 = vld [vmem:[%s608 + $0x22] sm:$0xff]
      %v1838 = vld [vmem:[%s608 + $0x32] sm:$0xff]
      %v1839 = vld [vmem:[%s608 + $0x42] sm:$0xff]
      %v1840 = vld [vmem:[%s608 + $0x52] sm:$0xff]
      %v1841 = vld [vmem:[%s608 + $0x62] sm:$0xff]
      %v1842 = vld [vmem:[%s608 + $0x72] sm:$0xff]
      %1851 = vrot.lane.b32.xlu0 %v1779, 32
      %v1852 = vpop.permute.xlu0 %1851
      %1853 = vrot.lane.b32.xlu0 %v1780, 32
      %v1854 = vpop.permute.xlu0 %1853
      %1855 = vrot.lane.b32.xlu0 %v1781, 32
      %v1856 = vpop.permute.xlu0 %1855
      %1857 = vrot.lane.b32.xlu0 %v1782, 32
      %v1858 = vpop.permute.xlu0 %1857
      %1859 = vrot.lane.b32.xlu0 %v1783, 32
      %v1860 = vpop.permute.xlu0 %1859
      %1861 = vrot.lane.b32.xlu0 %v1784, 32
      %v1862 = vpop.permute.xlu0 %1861
      %1863 = vrot.lane.b32.xlu0 %v1785, 32
      %v1864 = vpop.permute.xlu0 %1863
      %1865 = vrot.lane.b32.xlu0 %v1786, 32
      %v1866 = vpop.permute.xlu0 %1865
      %1883 = vrot.lane.b32.xlu0 %v1787, 64
      %v1884 = vpop.permute.xlu0 %1883
      %1885 = vrot.lane.b32.xlu0 %v1788, 64
      %v1886 = vpop.permute.xlu0 %1885
      %1887 = vrot.lane.b32.xlu0 %v1789, 64
      %v1888 = vpop.permute.xlu0 %1887
      %1889 = vrot.lane.b32.xlu0 %v1790, 64
      %v1890 = vpop.permute.xlu0 %1889
      %1891 = vrot.lane.b32.xlu0 %v1791, 64
      %v1892 = vpop.permute.xlu0 %1891
      %1893 = vrot.lane.b32.xlu0 %v1792, 64
      %v1894 = vpop.permute.xlu0 %1893
      %1895 = vrot.lane.b32.xlu0 %v1793, 64
      %v1896 = vpop.permute.xlu0 %1895
      %1897 = vrot.lane.b32.xlu0 %v1794, 64
      %v1898 = vpop.permute.xlu0 %1897
      %1915 = vrot.lane.b32.xlu0 %v1795, 96
      %v1916 = vpop.permute.xlu0 %1915
      %1917 = vrot.lane.b32.xlu0 %v1796, 96
      %v1918 = vpop.permute.xlu0 %1917
      %1919 = vrot.lane.b32.xlu0 %v1797, 96
      %v1920 = vpop.permute.xlu0 %1919
      %1921 = vrot.lane.b32.xlu0 %v1798, 96
      %v1922 = vpop.permute.xlu0 %1921
      %1923 = vrot.lane.b32.xlu0 %v1799, 96
      %v1924 = vpop.permute.xlu0 %1923
      %1925 = vrot.lane.b32.xlu0 %v1800, 96
      %v1926 = vpop.permute.xlu0 %1925
      %1927 = vrot.lane.b32.xlu0 %v1801, 96
      %v1928 = vpop.permute.xlu0 %1927
      %1929 = vrot.lane.b32.xlu0 %v1802, 96
      %v1930 = vpop.permute.xlu0 %1929
      %1947 = vrot.lane.b32.xlu0 %v1811, 32
      %v1948 = vpop.permute.xlu0 %1947
      %1949 = vrot.lane.b32.xlu0 %v1812, 32
      %v1950 = vpop.permute.xlu0 %1949
      %1951 = vrot.lane.b32.xlu0 %v1813, 32
      %v1952 = vpop.permute.xlu0 %1951
      %1953 = vrot.lane.b32.xlu0 %v1814, 32
      %v1954 = vpop.permute.xlu0 %1953
      %1955 = vrot.lane.b32.xlu0 %v1815, 32
      %v1956 = vpop.permute.xlu0 %1955
      %1957 = vrot.lane.b32.xlu0 %v1816, 32
      %v1958 = vpop.permute.xlu0 %1957
      %1959 = vrot.lane.b32.xlu0 %v1817, 32
      %v1960 = vpop.permute.xlu0 %1959
      %1961 = vrot.lane.b32.xlu0 %v1818, 32
      %v1962 = vpop.permute.xlu0 %1961
      %1979 = vrot.lane.b32.xlu0 %v1819, 64
      %v1980 = vpop.permute.xlu0 %1979
      %1981 = vrot.lane.b32.xlu0 %v1820, 64
      %v1982 = vpop.permute.xlu0 %1981
      %1983 = vrot.lane.b32.xlu0 %v1821, 64
      %v1984 = vpop.permute.xlu0 %1983
      %1985 = vrot.lane.b32.xlu0 %v1822, 64
      %v1986 = vpop.permute.xlu0 %1985
      %1987 = vrot.lane.b32.xlu0 %v1823, 64
      %v1988 = vpop.permute.xlu0 %1987
      %1989 = vrot.lane.b32.xlu0 %v1824, 64
      %v1990 = vpop.permute.xlu0 %1989
      %1991 = vrot.lane.b32.xlu0 %v1825, 64
      %v1992 = vpop.permute.xlu0 %1991
      %1993 = vrot.lane.b32.xlu0 %v1826, 64
      %v1994 = vpop.permute.xlu0 %1993
      %2011 = vrot.lane.b32.xlu0 %v1827, 96
      %v2012 = vpop.permute.xlu0 %2011
      %2013 = vrot.lane.b32.xlu0 %v1828, 96
      %v2014 = vpop.permute.xlu0 %2013
      %2015 = vrot.lane.b32.xlu0 %v1829, 96
      %v2016 = vpop.permute.xlu0 %2015
      %2017 = vrot.lane.b32.xlu0 %v1830, 96
      %v2018 = vpop.permute.xlu0 %2017
      %2019 = vrot.lane.b32.xlu0 %v1831, 96
      %v2020 = vpop.permute.xlu0 %2019
      %2021 = vrot.lane.b32.xlu0 %v1832, 96
      %v2022 = vpop.permute.xlu0 %2021
      %2023 = vrot.lane.b32.xlu0 %v1833, 96
      %v2024 = vpop.permute.xlu0 %2023
      %2025 = vrot.lane.b32.xlu0 %v1834, 96
      %v2026 = vpop.permute.xlu0 %2025
      %v2035 = vsel %vm441, %v1771, %v1852
      %v2036 = vsel %vm441, %v1772, %v1854
      %v2037 = vsel %vm441, %v1773, %v1856
      %v2038 = vsel %vm441, %v1774, %v1858
      %v2039 = vsel %vm441, %v1775, %v1860
      %v2040 = vsel %vm441, %v1776, %v1862
      %v2041 = vsel %vm441, %v1777, %v1864
      %v2042 = vsel %vm441, %v1778, %v1866
      %v2043 = vsel %vm833, %v2035, %v1884
      %v2044 = vsel %vm833, %v2036, %v1886
      %v2045 = vsel %vm833, %v2037, %v1888
      %v2046 = vsel %vm833, %v2038, %v1890
      %v2047 = vsel %vm833, %v2039, %v1892
      %v2048 = vsel %vm833, %v2040, %v1894
      %v2049 = vsel %vm833, %v2041, %v1896
      %v2050 = vsel %vm833, %v2042, %v1898
      %v2051 = vsel %vm842, %v2043, %v1916
      %v2052 = vsel %vm842, %v2044, %v1918
      %v2053 = vsel %vm842, %v2045, %v1920
      %v2054 = vsel %vm842, %v2046, %v1922
      %v2055 = vsel %vm842, %v2047, %v1924
      %v2056 = vsel %vm842, %v2048, %v1926
      %v2057 = vsel %vm842, %v2049, %v1928
      %v2058 = vsel %vm842, %v2050, %v1930
      %v2059 = vsel %vm441, %v1803, %v1948
      %v2060 = vsel %vm441, %v1804, %v1950
      %v2061 = vsel %vm441, %v1805, %v1952
      %v2062 = vsel %vm441, %v1806, %v1954
      %v2063 = vsel %vm441, %v1807, %v1956
      %v2064 = vsel %vm441, %v1808, %v1958
      %v2065 = vsel %vm441, %v1809, %v1960
      %v2066 = vsel %vm441, %v1810, %v1962
      %v2067 = vsel %vm833, %v2059, %v1980
      %v2068 = vsel %vm833, %v2060, %v1982
      %v2069 = vsel %vm833, %v2061, %v1984
      %v2070 = vsel %vm833, %v2062, %v1986
      %v2071 = vsel %vm833, %v2063, %v1988
      %v2072 = vsel %vm833, %v2064, %v1990
      %v2073 = vsel %vm833, %v2065, %v1992
      %v2074 = vsel %vm833, %v2066, %v1994
      %v2075 = vsel %vm842, %v2067, %v2012
      %v2076 = vsel %vm842, %v2068, %v2014
      %v2077 = vsel %vm842, %v2069, %v2016
      %v2078 = vsel %vm842, %v2070, %v2018
      %v2079 = vsel %vm842, %v2071, %v2020
      %v2080 = vsel %vm842, %v2072, %v2022
      %v2081 = vsel %vm842, %v2073, %v2024
      %v2082 = vsel %vm842, %v2074, %v2026
      %v2083 = vld [vmem:[%s9] sm:$0xff]
      %v2084 = vld [vmem:[%s9 + $0x8] sm:$0xff]
      %v2085 = vld [vmem:[%s9 + $0x10] sm:$0xff]
      %v2086 = vld [vmem:[%s9 + $0x18] sm:$0xff]
      %v2087 = vld [vmem:[%s9 + $0x20] sm:$0xff]
      %v2088 = vld [vmem:[%s9 + $0x28] sm:$0xff]
      %v2089 = vld [vmem:[%s9 + $0x30] sm:$0xff]
      %v2090 = vld [vmem:[%s9 + $0x38] sm:$0xff]
      %v2091 = vld [vmem:[%s9 + $0x40] sm:$0xff]
      %v2092 = vld [vmem:[%s9 + $0x48] sm:$0xff]
      %v2093 = vld [vmem:[%s9 + $0x50] sm:$0xff]
      %v2094 = vld [vmem:[%s9 + $0x58] sm:$0xff]
      %v2095 = vld [vmem:[%s9 + $0x60] sm:$0xff]
      %v2096 = vld [vmem:[%s9 + $0x68] sm:$0xff]
      %v2097 = vld [vmem:[%s9 + $0x70] sm:$0xff]
      %v2098 = vld [vmem:[%s9 + $0x78] sm:$0xff]
      %v2099 = vld [vmem:[%s9 + $0x80] sm:$0xff]
      %v2100 = vld [vmem:[%s9 + $0x88] sm:$0xff]
      %v2101 = vld [vmem:[%s9 + $0x90] sm:$0xff]
      %v2102 = vld [vmem:[%s9 + $0x98] sm:$0xff]
      %v2103 = vld [vmem:[%s9 + $0xa0] sm:$0xff]
      %v2104 = vld [vmem:[%s9 + $0xa8] sm:$0xff]
      %v2105 = vld [vmem:[%s9 + $0xb0] sm:$0xff]
      %v2106 = vld [vmem:[%s9 + $0xb8] sm:$0xff]
      %v2107 = vld [vmem:[%s9 + $0xc0] sm:$0xff]
      %v2108 = vld [vmem:[%s9 + $0xc8] sm:$0xff]
      %v2109 = vld [vmem:[%s9 + $0xd0] sm:$0xff]
      %v2110 = vld [vmem:[%s9 + $0xd8] sm:$0xff]
      %v2111 = vld [vmem:[%s9 + $0xe0] sm:$0xff]
      %v2112 = vld [vmem:[%s9 + $0xe8] sm:$0xff]
      %v2113 = vld [vmem:[%s9 + $0xf0] sm:$0xff]
      %v2114 = vld [vmem:[%s9 + $0xf8] sm:$0xff]
      %v2115 = vld [vmem:[%s9 + $0x100] sm:$0xff]
      %v2116 = vld [vmem:[%s9 + $0x108] sm:$0xff]
      %v2117 = vld [vmem:[%s9 + $0x110] sm:$0xff]
      %v2118 = vld [vmem:[%s9 + $0x118] sm:$0xff]
      %v2119 = vld [vmem:[%s10] sm:$0x1]
      %v2121 = vperm.slane %v2119, 0
      %v2124 = vsel %vm441, %v1835, 0
      %v2127 = vsel %vm441, %v1836, 0
      %v2130 = vsel %vm441, %v1837, 0
      %v2133 = vsel %vm441, %v1838, 0
      %v2136 = vsel %vm441, %v1839, 0
      %v2139 = vsel %vm441, %v1840, 0
      %v2142 = vsel %vm441, %v1841, 0
      %v2145 = vsel %vm441, %v1842, 0
      %2147 = vmatpush.msra.mxu0 %v2098
      %2148 = vmatpush.msra.mxu0 %v2097
      %2149 = vmatpush.msra.mxu0 %v2096
      %2150 = vmatpush.msra.mxu0 %v2095
      %2151 = vmatpush.msra.mxu0 %v2094
      %2152 = vmatpush.msra.mxu0 %v2093
      %2153 = vmatpush.msra.mxu0 %v2092
      %2154 = vmatpush.msra.mxu0 %v2091
      %2155 = vmatpush.msra.mxu0 %v2090
      %2156 = vmatpush.msra.mxu0 %v2089
      %2157 = vmatpush.msra.mxu0 %v2088
      %2158 = vmatpush.msra.mxu0 %v2087
      %2159 = vmatpush.msra.mxu0 %v2086
      %2160 = vmatpush.msra.mxu0 %v2085
      %2161 = vmatpush.msra.mxu0 %v2084
      %2162 = vmatpush.msra.mxu0 %v2083
      %2163 = vmatmul.f32.gmra.mxu0 %v2051
      %v2164 = vpop.f32.mrf.mxu0
      %v2165 = vadd.f32 %v2121, %v2164
      %2166 = vmatmul.f32.gmra.mxu0 %v2052
      %v2167 = vpop.f32.mrf.mxu0
      %v2168 = vadd.f32 %v2121, %v2167
      %2169 = vmatmul.f32.gmra.mxu0 %v2053
      %v2170 = vpop.f32.mrf.mxu0
      %v2171 = vadd.f32 %v2121, %v2170
      %2172 = vmatmul.f32.gmra.mxu0 %v2054
      %v2173 = vpop.f32.mrf.mxu0
      %v2174 = vadd.f32 %v2121, %v2173
      %2175 = vmatmul.f32.gmra.mxu0 %v2055
      %v2176 = vpop.f32.mrf.mxu0
      %v2177 = vadd.f32 %v2121, %v2176
      %2178 = vmatmul.f32.gmra.mxu0 %v2056
      %v2179 = vpop.f32.mrf.mxu0
      %v2180 = vadd.f32 %v2121, %v2179
      %2181 = vmatmul.f32.gmra.mxu0 %v2057
      %v2182 = vpop.f32.mrf.mxu0
      %v2183 = vadd.f32 %v2121, %v2182
      %2184 = vmatmul.f32.gmra.mxu0 %v2058
      %v2185 = vpop.f32.mrf.mxu0
      %v2186 = vadd.f32 %v2121, %v2185
      %2187 = vdwg.mxu0
      %2188 = vmatpush.msra.mxu0 %v2114
      %2189 = vmatpush.msra.mxu0 %v2113
      %2190 = vmatpush.msra.mxu0 %v2112
      %2191 = vmatpush.msra.mxu0 %v2111
      %2192 = vmatpush.msra.mxu0 %v2110
      %2193 = vmatpush.msra.mxu0 %v2109
      %2194 = vmatpush.msra.mxu0 %v2108
      %2195 = vmatpush.msra.mxu0 %v2107
      %2196 = vmatpush.msra.mxu0 %v2106
      %2197 = vmatpush.msra.mxu0 %v2105
      %2198 = vmatpush.msra.mxu0 %v2104
      %2199 = vmatpush.msra.mxu0 %v2103
      %2200 = vmatpush.msra.mxu0 %v2102
      %2201 = vmatpush.msra.mxu0 %v2101
      %2202 = vmatpush.msra.mxu0 %v2100
      %2203 = vmatpush.msra.mxu0 %v2099
      %2204 = vmatmul.f32.gmra.mxu0 %v2075
      %v2205 = vpop.f32.mrf.mxu0
      %v2206 = vadd.f32 %v2165, %v2205
      %2207 = vmatmul.f32.gmra.mxu0 %v2076
      %v2208 = vpop.f32.mrf.mxu0
      %v2209 = vadd.f32 %v2168, %v2208
      %2210 = vmatmul.f32.gmra.mxu0 %v2077
      %v2211 = vpop.f32.mrf.mxu0
      %v2212 = vadd.f32 %v2171, %v2211
      %2213 = vmatmul.f32.gmra.mxu0 %v2078
      %v2214 = vpop.f32.mrf.mxu0
      %v2215 = vadd.f32 %v2174, %v2214
      %2216 = vmatmul.f32.gmra.mxu0 %v2079
      %v2217 = vpop.f32.mrf.mxu0
      %v2218 = vadd.f32 %v2177, %v2217
      %2219 = vmatmul.f32.gmra.mxu0 %v2080
      %v2220 = vpop.f32.mrf.mxu0
      %v2221 = vadd.f32 %v2180, %v2220
      %2222 = vmatmul.f32.gmra.mxu0 %v2081
      %v2223 = vpop.f32.mrf.mxu0
      %v2224 = vadd.f32 %v2183, %v2223
      %2225 = vmatmul.f32.gmra.mxu0 %v2082
      %v2226 = vpop.f32.mrf.mxu0
      %v2227 = vadd.f32 %v2186, %v2226
      %2228 = vdwg.mxu0
      %2229 = vmatpush.msra.mxu0 0.0
      %2230 = vmatpush.msra.mxu0 0.0
      %2231 = vmatpush.msra.mxu0 0.0
      %2232 = vmatpush.msra.mxu0 0.0
      %2233 = vmatpush.msra.mxu0 0.0
      %2234 = vmatpush.msra.mxu0 0.0
      %2235 = vmatpush.msra.mxu0 0.0
      %2236 = vmatpush.msra.mxu0 0.0
      %2237 = vmatpush.msra.mxu0 0.0
      %2238 = vmatpush.msra.mxu0 0.0
      %2239 = vmatpush.msra.mxu0 0.0
      %2240 = vmatpush.msra.mxu0 0.0
      %2241 = vmatpush.msra.mxu0 %v2118
      %2242 = vmatpush.msra.mxu0 %v2117
      %2243 = vmatpush.msra.mxu0 %v2116
      %2244 = vmatpush.msra.mxu0 %v2115
      %2245 = vmatmul.f32.gmra.mxu0 %v2124
      %v2246 = vpop.f32.mrf.mxu0
      %v2247 = vadd.f32 %v2206, %v2246
      %2248 = vmatmul.f32.gmra.mxu0 %v2127
      %v2249 = vpop.f32.mrf.mxu0
      %v2250 = vadd.f32 %v2209, %v2249
      %2251 = vmatmul.f32.gmra.mxu0 %v2130
      %v2252 = vpop.f32.mrf.mxu0
      %v2253 = vadd.f32 %v2212, %v2252
      %2254 = vmatmul.f32.gmra.mxu0 %v2133
      %v2255 = vpop.f32.mrf.mxu0
      %v2256 = vadd.f32 %v2215, %v2255
      %2257 = vmatmul.f32.gmra.mxu0 %v2136
      %v2258 = vpop.f32.mrf.mxu0
      %v2259 = vadd.f32 %v2218, %v2258
      %2260 = vmatmul.f32.gmra.mxu0 %v2139
      %v2261 = vpop.f32.mrf.mxu0
      %v2262 = vadd.f32 %v2221, %v2261
      %2263 = vmatmul.f32.gmra.mxu0 %v2142
      %v2264 = vpop.f32.mrf.mxu0
      %v2265 = vadd.f32 %v2224, %v2264
      %2266 = vmatmul.f32.gmra.mxu0 %v2145
      %v2267 = vpop.f32.mrf.mxu0
      %v2268 = vadd.f32 %v2227, %v2267
      %2269 = vdwg.mxu0
      %v2270 = vmax.f32 %v2247, 0.0
      %v2271 = vmax.f32 %v2250, 0.0
      %v2272 = vmax.f32 %v2253, 0.0
      %v2273 = vmax.f32 %v2256, 0.0
      %v2274 = vmax.f32 %v2259, 0.0
      %v2275 = vmax.f32 %v2262, 0.0
      %v2276 = vmax.f32 %v2265, 0.0
      %v2277 = vmax.f32 %v2268, 0.0
      %s2278 = scalar_lea.vmem [#allocation3], 16
      %2279 = vst.msk [vmem:[%s2278 + $0x1] sm:$0xff] %vm441, %v2270
      %2280 = vst.msk [vmem:[%s2278 + $0x11] sm:$0xff] %vm441, %v2271
      %2281 = vst.msk [vmem:[%s2278 + $0x21] sm:$0xff] %vm441, %v2272
      %2282 = vst.msk [vmem:[%s2278 + $0x31] sm:$0xff] %vm441, %v2273
      %2283 = vst.msk [vmem:[%s2278 + $0x41] sm:$0xff] %vm441, %v2274
      %2284 = vst.msk [vmem:[%s2278 + $0x51] sm:$0xff] %vm441, %v2275
      %2285 = vst.msk [vmem:[%s2278 + $0x61] sm:$0xff] %vm441, %v2276
      %2286 = vst.msk [vmem:[%s2278 + $0x71] sm:$0xff] %vm441, %v2277
      %s2287 = scalar_lea.vmem %s9, 288
      %v2288 = vld [vmem:[%s2287] sm:$0xff]
      %v2289 = vld [vmem:[%s2287 + $0x8] sm:$0xff]
      %v2290 = vld [vmem:[%s2287 + $0x10] sm:$0xff]
      %v2291 = vld [vmem:[%s2287 + $0x18] sm:$0xff]
      %v2292 = vld [vmem:[%s2287 + $0x20] sm:$0xff]
      %v2293 = vld [vmem:[%s2287 + $0x28] sm:$0xff]
      %v2294 = vld [vmem:[%s2287 + $0x30] sm:$0xff]
      %v2295 = vld [vmem:[%s2287 + $0x38] sm:$0xff]
      %v2296 = vld [vmem:[%s2287 + $0x40] sm:$0xff]
      %v2297 = vld [vmem:[%s2287 + $0x48] sm:$0xff]
      %v2298 = vld [vmem:[%s2287 + $0x50] sm:$0xff]
      %v2299 = vld [vmem:[%s2287 + $0x58] sm:$0xff]
      %v2300 = vld [vmem:[%s2287 + $0x60] sm:$0xff]
      %v2301 = vld [vmem:[%s2287 + $0x68] sm:$0xff]
      %v2302 = vld [vmem:[%s2287 + $0x70] sm:$0xff]
      %v2303 = vld [vmem:[%s2287 + $0x78] sm:$0xff]
      %v2304 = vld [vmem:[%s2287 + $0x80] sm:$0xff]
      %v2305 = vld [vmem:[%s2287 + $0x88] sm:$0xff]
      %v2306 = vld [vmem:[%s2287 + $0x90] sm:$0xff]
      %v2307 = vld [vmem:[%s2287 + $0x98] sm:$0xff]
      %v2308 = vld [vmem:[%s2287 + $0xa0] sm:$0xff]
      %v2309 = vld [vmem:[%s2287 + $0xa8] sm:$0xff]
      %v2310 = vld [vmem:[%s2287 + $0xb0] sm:$0xff]
      %v2311 = vld [vmem:[%s2287 + $0xb8] sm:$0xff]
      %v2312 = vld [vmem:[%s2287 + $0xc0] sm:$0xff]
      %v2313 = vld [vmem:[%s2287 + $0xc8] sm:$0xff]
      %v2314 = vld [vmem:[%s2287 + $0xd0] sm:$0xff]
      %v2315 = vld [vmem:[%s2287 + $0xd8] sm:$0xff]
      %v2316 = vld [vmem:[%s2287 + $0xe0] sm:$0xff]
      %v2317 = vld [vmem:[%s2287 + $0xe8] sm:$0xff]
      %v2318 = vld [vmem:[%s2287 + $0xf0] sm:$0xff]
      %v2319 = vld [vmem:[%s2287 + $0xf8] sm:$0xff]
      %v2320 = vld [vmem:[%s2287 + $0x100] sm:$0xff]
      %v2321 = vld [vmem:[%s2287 + $0x108] sm:$0xff]
      %v2322 = vld [vmem:[%s2287 + $0x110] sm:$0xff]
      %v2323 = vld [vmem:[%s2287 + $0x118] sm:$0xff]
      %v2324 = vld [vmem:[%s10] sm:$0x1]
      %v2326 = vperm.slane %v2324, 0
      %2328 = vmatpush.msra.mxu0 %v2303
      %2329 = vmatpush.msra.mxu0 %v2302
      %2330 = vmatpush.msra.mxu0 %v2301
      %2331 = vmatpush.msra.mxu0 %v2300
      %2332 = vmatpush.msra.mxu0 %v2299
      %2333 = vmatpush.msra.mxu0 %v2298
      %2334 = vmatpush.msra.mxu0 %v2297
      %2335 = vmatpush.msra.mxu0 %v2296
      %2336 = vmatpush.msra.mxu0 %v2295
      %2337 = vmatpush.msra.mxu0 %v2294
      %2338 = vmatpush.msra.mxu0 %v2293
      %2339 = vmatpush.msra.mxu0 %v2292
      %2340 = vmatpush.msra.mxu0 %v2291
      %2341 = vmatpush.msra.mxu0 %v2290
      %2342 = vmatpush.msra.mxu0 %v2289
      %2343 = vmatpush.msra.mxu0 %v2288
      %2344 = vmatmul.f32.gmra.mxu0 %v2051
      %v2345 = vpop.f32.mrf.mxu0
      %v2346 = vadd.f32 %v2326, %v2345
      %2347 = vmatmul.f32.gmra.mxu0 %v2052
      %v2348 = vpop.f32.mrf.mxu0
      %v2349 = vadd.f32 %v2326, %v2348
      %2350 = vmatmul.f32.gmra.mxu0 %v2053
      %v2351 = vpop.f32.mrf.mxu0
      %v2352 = vadd.f32 %v2326, %v2351
      %2353 = vmatmul.f32.gmra.mxu0 %v2054
      %v2354 = vpop.f32.mrf.mxu0
      %v2355 = vadd.f32 %v2326, %v2354
      %2356 = vmatmul.f32.gmra.mxu0 %v2055
      %v2357 = vpop.f32.mrf.mxu0
      %v2358 = vadd.f32 %v2326, %v2357
      %2359 = vmatmul.f32.gmra.mxu0 %v2056
      %v2360 = vpop.f32.mrf.mxu0
      %v2361 = vadd.f32 %v2326, %v2360
      %2362 = vmatmul.f32.gmra.mxu0 %v2057
      %v2363 = vpop.f32.mrf.mxu0
      %v2364 = vadd.f32 %v2326, %v2363
      %2365 = vmatmul.f32.gmra.mxu0 %v2058
      %v2366 = vpop.f32.mrf.mxu0
      %v2367 = vadd.f32 %v2326, %v2366
      %2368 = vdwg.mxu0
      %2369 = vmatpush.msra.mxu0 %v2319
      %2370 = vmatpush.msra.mxu0 %v2318
      %2371 = vmatpush.msra.mxu0 %v2317
      %2372 = vmatpush.msra.mxu0 %v2316
      %2373 = vmatpush.msra.mxu0 %v2315
      %2374 = vmatpush.msra.mxu0 %v2314
      %2375 = vmatpush.msra.mxu0 %v2313
      %2376 = vmatpush.msra.mxu0 %v2312
      %2377 = vmatpush.msra.mxu0 %v2311
      %2378 = vmatpush.msra.mxu0 %v2310
      %2379 = vmatpush.msra.mxu0 %v2309
      %2380 = vmatpush.msra.mxu0 %v2308
      %2381 = vmatpush.msra.mxu0 %v2307
      %2382 = vmatpush.msra.mxu0 %v2306
      %2383 = vmatpush.msra.mxu0 %v2305
      %2384 = vmatpush.msra.mxu0 %v2304
      %2385 = vmatmul.f32.gmra.mxu0 %v2075
      %v2386 = vpop.f32.mrf.mxu0
      %v2387 = vadd.f32 %v2346, %v2386
      %2388 = vmatmul.f32.gmra.mxu0 %v2076
      %v2389 = vpop.f32.mrf.mxu0
      %v2390 = vadd.f32 %v2349, %v2389
      %2391 = vmatmul.f32.gmra.mxu0 %v2077
      %v2392 = vpop.f32.mrf.mxu0
      %v2393 = vadd.f32 %v2352, %v2392
      %2394 = vmatmul.f32.gmra.mxu0 %v2078
      %v2395 = vpop.f32.mrf.mxu0
      %v2396 = vadd.f32 %v2355, %v2395
      %2397 = vmatmul.f32.gmra.mxu0 %v2079
      %v2398 = vpop.f32.mrf.mxu0
      %v2399 = vadd.f32 %v2358, %v2398
      %2400 = vmatmul.f32.gmra.mxu0 %v2080
      %v2401 = vpop.f32.mrf.mxu0
      %v2402 = vadd.f32 %v2361, %v2401
      %2403 = vmatmul.f32.gmra.mxu0 %v2081
      %v2404 = vpop.f32.mrf.mxu0
      %v2405 = vadd.f32 %v2364, %v2404
      %2406 = vmatmul.f32.gmra.mxu0 %v2082
      %v2407 = vpop.f32.mrf.mxu0
      %v2408 = vadd.f32 %v2367, %v2407
      %2409 = vdwg.mxu0
      %2410 = vmatpush.msra.mxu0 0.0
      %2411 = vmatpush.msra.mxu0 0.0
      %2412 = vmatpush.msra.mxu0 0.0
      %2413 = vmatpush.msra.mxu0 0.0
      %2414 = vmatpush.msra.mxu0 0.0
      %2415 = vmatpush.msra.mxu0 0.0
      %2416 = vmatpush.msra.mxu0 0.0
      %2417 = vmatpush.msra.mxu0 0.0
      %2418 = vmatpush.msra.mxu0 0.0
      %2419 = vmatpush.msra.mxu0 0.0
      %2420 = vmatpush.msra.mxu0 0.0
      %2421 = vmatpush.msra.mxu0 0.0
      %2422 = vmatpush.msra.mxu0 %v2323
      %2423 = vmatpush.msra.mxu0 %v2322
      %2424 = vmatpush.msra.mxu0 %v2321
      %2425 = vmatpush.msra.mxu0 %v2320
      %2426 = vmatmul.f32.gmra.mxu0 %v2124
      %v2427 = vpop.f32.mrf.mxu0
      %v2428 = vadd.f32 %v2387, %v2427
      %2429 = vmatmul.f32.gmra.mxu0 %v2127
      %v2430 = vpop.f32.mrf.mxu0
      %v2431 = vadd.f32 %v2390, %v2430
      %2432 = vmatmul.f32.gmra.mxu0 %v2130
      %v2433 = vpop.f32.mrf.mxu0
      %v2434 = vadd.f32 %v2393, %v2433
      %2435 = vmatmul.f32.gmra.mxu0 %v2133
      %v2436 = vpop.f32.mrf.mxu0
      %v2437 = vadd.f32 %v2396, %v2436
      %2438 = vmatmul.f32.gmra.mxu0 %v2136
      %v2439 = vpop.f32.mrf.mxu0
      %v2440 = vadd.f32 %v2399, %v2439
      %2441 = vmatmul.f32.gmra.mxu0 %v2139
      %v2442 = vpop.f32.mrf.mxu0
      %v2443 = vadd.f32 %v2402, %v2442
      %2444 = vmatmul.f32.gmra.mxu0 %v2142
      %v2445 = vpop.f32.mrf.mxu0
      %v2446 = vadd.f32 %v2405, %v2445
      %2447 = vmatmul.f32.gmra.mxu0 %v2145
      %v2448 = vpop.f32.mrf.mxu0
      %v2449 = vadd.f32 %v2408, %v2448
      %2450 = vdwg.mxu0
      %v2451 = vmax.f32 %v2428, 0.0
      %v2452 = vmax.f32 %v2431, 0.0
      %v2453 = vmax.f32 %v2434, 0.0
      %v2454 = vmax.f32 %v2437, 0.0
      %v2455 = vmax.f32 %v2440, 0.0
      %v2456 = vmax.f32 %v2443, 0.0
      %v2457 = vmax.f32 %v2446, 0.0
      %v2458 = vmax.f32 %v2449, 0.0
      %s2459 = scalar_lea.vmem [#allocation3], 176
      %2460 = vst.msk [vmem:[%s2459 + $0x1] sm:$0xff] %vm441, %v2451
      %2461 = vst.msk [vmem:[%s2459 + $0x11] sm:$0xff] %vm441, %v2452
      %2462 = vst.msk [vmem:[%s2459 + $0x21] sm:$0xff] %vm441, %v2453
      %2463 = vst.msk [vmem:[%s2459 + $0x31] sm:$0xff] %vm441, %v2454
      %2464 = vst.msk [vmem:[%s2459 + $0x41] sm:$0xff] %vm441, %v2455
      %2465 = vst.msk [vmem:[%s2459 + $0x51] sm:$0xff] %vm441, %v2456
      %2466 = vst.msk [vmem:[%s2459 + $0x61] sm:$0xff] %vm441, %v2457
      %2467 = vst.msk [vmem:[%s2459 + $0x71] sm:$0xff] %vm441, %v2458
      %s2468 = scalar_lea.vmem %s9, 576
      %v2469 = vld [vmem:[%s2468] sm:$0xff]
      %v2470 = vld [vmem:[%s2468 + $0x8] sm:$0xff]
      %v2471 = vld [vmem:[%s2468 + $0x10] sm:$0xff]
      %v2472 = vld [vmem:[%s2468 + $0x18] sm:$0xff]
      %v2473 = vld [vmem:[%s2468 + $0x20] sm:$0xff]
      %v2474 = vld [vmem:[%s2468 + $0x28] sm:$0xff]
      %v2475 = vld [vmem:[%s2468 + $0x30] sm:$0xff]
      %v2476 = vld [vmem:[%s2468 + $0x38] sm:$0xff]
      %v2477 = vld [vmem:[%s2468 + $0x40] sm:$0xff]
      %v2478 = vld [vmem:[%s2468 + $0x48] sm:$0xff]
      %v2479 = vld [vmem:[%s2468 + $0x50] sm:$0xff]
      %v2480 = vld [vmem:[%s2468 + $0x58] sm:$0xff]
      %v2481 = vld [vmem:[%s2468 + $0x60] sm:$0xff]
      %v2482 = vld [vmem:[%s2468 + $0x68] sm:$0xff]
      %v2483 = vld [vmem:[%s2468 + $0x70] sm:$0xff]
      %v2484 = vld [vmem:[%s2468 + $0x78] sm:$0xff]
      %v2485 = vld [vmem:[%s2468 + $0x80] sm:$0xff]
      %v2486 = vld [vmem:[%s2468 + $0x88] sm:$0xff]
      %v2487 = vld [vmem:[%s2468 + $0x90] sm:$0xff]
      %v2488 = vld [vmem:[%s2468 + $0x98] sm:$0xff]
      %v2489 = vld [vmem:[%s2468 + $0xa0] sm:$0xff]
      %v2490 = vld [vmem:[%s2468 + $0xa8] sm:$0xff]
      %v2491 = vld [vmem:[%s2468 + $0xb0] sm:$0xff]
      %v2492 = vld [vmem:[%s2468 + $0xb8] sm:$0xff]
      %v2493 = vld [vmem:[%s2468 + $0xc0] sm:$0xff]
      %v2494 = vld [vmem:[%s2468 + $0xc8] sm:$0xff]
      %v2495 = vld [vmem:[%s2468 + $0xd0] sm:$0xff]
      %v2496 = vld [vmem:[%s2468 + $0xd8] sm:$0xff]
      %v2497 = vld [vmem:[%s2468 + $0xe0] sm:$0xff]
      %v2498 = vld [vmem:[%s2468 + $0xe8] sm:$0xff]
      %v2499 = vld [vmem:[%s2468 + $0xf0] sm:$0xff]
      %v2500 = vld [vmem:[%s2468 + $0xf8] sm:$0xff]
      %v2501 = vld [vmem:[%s2468 + $0x100] sm:$0xff]
      %v2502 = vld [vmem:[%s2468 + $0x108] sm:$0xff]
      %v2503 = vld [vmem:[%s2468 + $0x110] sm:$0xff]
      %v2504 = vld [vmem:[%s2468 + $0x118] sm:$0xff]
      %v2505 = vld [vmem:[%s10] sm:$0x1]
      %v2507 = vperm.slane %v2505, 0
      %2509 = vmatpush.msra.mxu0 %v2484
      %2510 = vmatpush.msra.mxu0 %v2483
      %2511 = vmatpush.msra.mxu0 %v2482
      %2512 = vmatpush.msra.mxu0 %v2481
      %2513 = vmatpush.msra.mxu0 %v2480
      %2514 = vmatpush.msra.mxu0 %v2479
      %2515 = vmatpush.msra.mxu0 %v2478
      %2516 = vmatpush.msra.mxu0 %v2477
      %2517 = vmatpush.msra.mxu0 %v2476
      %2518 = vmatpush.msra.mxu0 %v2475
      %2519 = vmatpush.msra.mxu0 %v2474
      %2520 = vmatpush.msra.mxu0 %v2473
      %2521 = vmatpush.msra.mxu0 %v2472
      %2522 = vmatpush.msra.mxu0 %v2471
      %2523 = vmatpush.msra.mxu0 %v2470
      %2524 = vmatpush.msra.mxu0 %v2469
      %2525 = vmatmul.f32.gmra.mxu0 %v2051
      %v2526 = vpop.f32.mrf.mxu0
      %v2527 = vadd.f32 %v2507, %v2526
      %2528 = vmatmul.f32.gmra.mxu0 %v2052
      %v2529 = vpop.f32.mrf.mxu0
      %v2530 = vadd.f32 %v2507, %v2529
      %2531 = vmatmul.f32.gmra.mxu0 %v2053
      %v2532 = vpop.f32.mrf.mxu0
      %v2533 = vadd.f32 %v2507, %v2532
      %2534 = vmatmul.f32.gmra.mxu0 %v2054
      %v2535 = vpop.f32.mrf.mxu0
      %v2536 = vadd.f32 %v2507, %v2535
      %2537 = vmatmul.f32.gmra.mxu0 %v2055
      %v2538 = vpop.f32.mrf.mxu0
      %v2539 = vadd.f32 %v2507, %v2538
      %2540 = vmatmul.f32.gmra.mxu0 %v2056
      %v2541 = vpop.f32.mrf.mxu0
      %v2542 = vadd.f32 %v2507, %v2541
      %2543 = vmatmul.f32.gmra.mxu0 %v2057
      %v2544 = vpop.f32.mrf.mxu0
      %v2545 = vadd.f32 %v2507, %v2544
      %2546 = vmatmul.f32.gmra.mxu0 %v2058
      %v2547 = vpop.f32.mrf.mxu0
      %v2548 = vadd.f32 %v2507, %v2547
      %2549 = vdwg.mxu0
      %2550 = vmatpush.msra.mxu0 %v2500
      %2551 = vmatpush.msra.mxu0 %v2499
      %2552 = vmatpush.msra.mxu0 %v2498
      %2553 = vmatpush.msra.mxu0 %v2497
      %2554 = vmatpush.msra.mxu0 %v2496
      %2555 = vmatpush.msra.mxu0 %v2495
      %2556 = vmatpush.msra.mxu0 %v2494
      %2557 = vmatpush.msra.mxu0 %v2493
      %2558 = vmatpush.msra.mxu0 %v2492
      %2559 = vmatpush.msra.mxu0 %v2491
      %2560 = vmatpush.msra.mxu0 %v2490
      %2561 = vmatpush.msra.mxu0 %v2489
      %2562 = vmatpush.msra.mxu0 %v2488
      %2563 = vmatpush.msra.mxu0 %v2487
      %2564 = vmatpush.msra.mxu0 %v2486
      %2565 = vmatpush.msra.mxu0 %v2485
      %2566 = vmatmul.f32.gmra.mxu0 %v2075
      %v2567 = vpop.f32.mrf.mxu0
      %v2568 = vadd.f32 %v2527, %v2567
      %2569 = vmatmul.f32.gmra.mxu0 %v2076
      %v2570 = vpop.f32.mrf.mxu0
      %v2571 = vadd.f32 %v2530, %v2570
      %2572 = vmatmul.f32.gmra.mxu0 %v2077
      %v2573 = vpop.f32.mrf.mxu0
      %v2574 = vadd.f32 %v2533, %v2573
      %2575 = vmatmul.f32.gmra.mxu0 %v2078
      %v2576 = vpop.f32.mrf.mxu0
      %v2577 = vadd.f32 %v2536, %v2576
      %2578 = vmatmul.f32.gmra.mxu0 %v2079
      %v2579 = vpop.f32.mrf.mxu0
      %v2580 = vadd.f32 %v2539, %v2579
      %2581 = vmatmul.f32.gmra.mxu0 %v2080
      %v2582 = vpop.f32.mrf.mxu0
      %v2583 = vadd.f32 %v2542, %v2582
      %2584 = vmatmul.f32.gmra.mxu0 %v2081
      %v2585 = vpop.f32.mrf.mxu0
      %v2586 = vadd.f32 %v2545, %v2585
      %2587 = vmatmul.f32.gmra.mxu0 %v2082
      %v2588 = vpop.f32.mrf.mxu0
      %v2589 = vadd.f32 %v2548, %v2588
      %2590 = vdwg.mxu0
      %2591 = vmatpush.msra.mxu0 0.0
      %2592 = vmatpush.msra.mxu0 0.0
      %2593 = vmatpush.msra.mxu0 0.0
      %2594 = vmatpush.msra.mxu0 0.0
      %2595 = vmatpush.msra.mxu0 0.0
      %2596 = vmatpush.msra.mxu0 0.0
      %2597 = vmatpush.msra.mxu0 0.0
      %2598 = vmatpush.msra.mxu0 0.0
      %2599 = vmatpush.msra.mxu0 0.0
      %2600 = vmatpush.msra.mxu0 0.0
      %2601 = vmatpush.msra.mxu0 0.0
      %2602 = vmatpush.msra.mxu0 0.0
      %2603 = vmatpush.msra.mxu0 %v2504
      %2604 = vmatpush.msra.mxu0 %v2503
      %2605 = vmatpush.msra.mxu0 %v2502
      %2606 = vmatpush.msra.mxu0 %v2501
      %2607 = vmatmul.f32.gmra.mxu0 %v2124
      %v2608 = vpop.f32.mrf.mxu0
      %v2609 = vadd.f32 %v2568, %v2608
      %2610 = vmatmul.f32.gmra.mxu0 %v2127
      %v2611 = vpop.f32.mrf.mxu0
      %v2612 = vadd.f32 %v2571, %v2611
      %2613 = vmatmul.f32.gmra.mxu0 %v2130
      %v2614 = vpop.f32.mrf.mxu0
      %v2615 = vadd.f32 %v2574, %v2614
      %2616 = vmatmul.f32.gmra.mxu0 %v2133
      %v2617 = vpop.f32.mrf.mxu0
      %v2618 = vadd.f32 %v2577, %v2617
      %2619 = vmatmul.f32.gmra.mxu0 %v2136
      %v2620 = vpop.f32.mrf.mxu0
      %v2621 = vadd.f32 %v2580, %v2620
      %2622 = vmatmul.f32.gmra.mxu0 %v2139
      %v2623 = vpop.f32.mrf.mxu0
      %v2624 = vadd.f32 %v2583, %v2623
      %2625 = vmatmul.f32.gmra.mxu0 %v2142
      %v2626 = vpop.f32.mrf.mxu0
      %v2627 = vadd.f32 %v2586, %v2626
      %2628 = vmatmul.f32.gmra.mxu0 %v2145
      %v2629 = vpop.f32.mrf.mxu0
      %v2630 = vadd.f32 %v2589, %v2629
      %2631 = vdwg.mxu0
      %v2632 = vmax.f32 %v2609, 0.0
      %v2633 = vmax.f32 %v2612, 0.0
      %v2634 = vmax.f32 %v2615, 0.0
      %v2635 = vmax.f32 %v2618, 0.0
      %v2636 = vmax.f32 %v2621, 0.0
      %v2637 = vmax.f32 %v2624, 0.0
      %v2638 = vmax.f32 %v2627, 0.0
      %v2639 = vmax.f32 %v2630, 0.0
      %s2640 = scalar_lea.vmem [#allocation3], 336
      %2641 = vst.msk [vmem:[%s2640 + $0x1] sm:$0xff] %vm441, %v2632
      %2642 = vst.msk [vmem:[%s2640 + $0x11] sm:$0xff] %vm441, %v2633
      %2643 = vst.msk [vmem:[%s2640 + $0x21] sm:$0xff] %vm441, %v2634
      %2644 = vst.msk [vmem:[%s2640 + $0x31] sm:$0xff] %vm441, %v2635
      %2645 = vst.msk [vmem:[%s2640 + $0x41] sm:$0xff] %vm441, %v2636
      %2646 = vst.msk [vmem:[%s2640 + $0x51] sm:$0xff] %vm441, %v2637
      %2647 = vst.msk [vmem:[%s2640 + $0x61] sm:$0xff] %vm441, %v2638
      %2648 = vst.msk [vmem:[%s2640 + $0x71] sm:$0xff] %vm441, %v2639
      %s2649 = scalar_lea.vmem %s9, 864
      %v2650 = vld [vmem:[%s2649] sm:$0xff]
      %v2651 = vld [vmem:[%s2649 + $0x8] sm:$0xff]
      %v2652 = vld [vmem:[%s2649 + $0x10] sm:$0xff]
      %v2653 = vld [vmem:[%s2649 + $0x18] sm:$0xff]
      %v2654 = vld [vmem:[%s2649 + $0x20] sm:$0xff]
      %v2655 = vld [vmem:[%s2649 + $0x28] sm:$0xff]
      %v2656 = vld [vmem:[%s2649 + $0x30] sm:$0xff]
      %v2657 = vld [vmem:[%s2649 + $0x38] sm:$0xff]
      %v2658 = vld [vmem:[%s2649 + $0x40] sm:$0xff]
      %v2659 = vld [vmem:[%s2649 + $0x48] sm:$0xff]
      %v2660 = vld [vmem:[%s2649 + $0x50] sm:$0xff]
      %v2661 = vld [vmem:[%s2649 + $0x58] sm:$0xff]
      %v2662 = vld [vmem:[%s2649 + $0x60] sm:$0xff]
      %v2663 = vld [vmem:[%s2649 + $0x68] sm:$0xff]
      %v2664 = vld [vmem:[%s2649 + $0x70] sm:$0xff]
      %v2665 = vld [vmem:[%s2649 + $0x78] sm:$0xff]
      %v2666 = vld [vmem:[%s2649 + $0x80] sm:$0xff]
      %v2667 = vld [vmem:[%s2649 + $0x88] sm:$0xff]
      %v2668 = vld [vmem:[%s2649 + $0x90] sm:$0xff]
      %v2669 = vld [vmem:[%s2649 + $0x98] sm:$0xff]
      %v2670 = vld [vmem:[%s2649 + $0xa0] sm:$0xff]
      %v2671 = vld [vmem:[%s2649 + $0xa8] sm:$0xff]
      %v2672 = vld [vmem:[%s2649 + $0xb0] sm:$0xff]
      %v2673 = vld [vmem:[%s2649 + $0xb8] sm:$0xff]
      %v2674 = vld [vmem:[%s2649 + $0xc0] sm:$0xff]
      %v2675 = vld [vmem:[%s2649 + $0xc8] sm:$0xff]
      %v2676 = vld [vmem:[%s2649 + $0xd0] sm:$0xff]
      %v2677 = vld [vmem:[%s2649 + $0xd8] sm:$0xff]
      %v2678 = vld [vmem:[%s2649 + $0xe0] sm:$0xff]
      %v2679 = vld [vmem:[%s2649 + $0xe8] sm:$0xff]
      %v2680 = vld [vmem:[%s2649 + $0xf0] sm:$0xff]
      %v2681 = vld [vmem:[%s2649 + $0xf8] sm:$0xff]
      %v2682 = vld [vmem:[%s2649 + $0x100] sm:$0xff]
      %v2683 = vld [vmem:[%s2649 + $0x108] sm:$0xff]
      %v2684 = vld [vmem:[%s2649 + $0x110] sm:$0xff]
      %v2685 = vld [vmem:[%s2649 + $0x118] sm:$0xff]
      %v2686 = vld [vmem:[%s10] sm:$0x1]
      %v2688 = vperm.slane %v2686, 0
      %2690 = vmatpush.msra.mxu0 %v2665
      %2691 = vmatpush.msra.mxu0 %v2664
      %2692 = vmatpush.msra.mxu0 %v2663
      %2693 = vmatpush.msra.mxu0 %v2662
      %2694 = vmatpush.msra.mxu0 %v2661
      %2695 = vmatpush.msra.mxu0 %v2660
      %2696 = vmatpush.msra.mxu0 %v2659
      %2697 = vmatpush.msra.mxu0 %v2658
      %2698 = vmatpush.msra.mxu0 %v2657
      %2699 = vmatpush.msra.mxu0 %v2656
      %2700 = vmatpush.msra.mxu0 %v2655
      %2701 = vmatpush.msra.mxu0 %v2654
      %2702 = vmatpush.msra.mxu0 %v2653
      %2703 = vmatpush.msra.mxu0 %v2652
      %2704 = vmatpush.msra.mxu0 %v2651
      %2705 = vmatpush.msra.mxu0 %v2650
      %2706 = vmatmul.f32.gmra.mxu0 %v2051
      %v2707 = vpop.f32.mrf.mxu0
      %v2708 = vadd.f32 %v2688, %v2707
      %2709 = vmatmul.f32.gmra.mxu0 %v2052
      %v2710 = vpop.f32.mrf.mxu0
      %v2711 = vadd.f32 %v2688, %v2710
      %2712 = vmatmul.f32.gmra.mxu0 %v2053
      %v2713 = vpop.f32.mrf.mxu0
      %v2714 = vadd.f32 %v2688, %v2713
      %2715 = vmatmul.f32.gmra.mxu0 %v2054
      %v2716 = vpop.f32.mrf.mxu0
      %v2717 = vadd.f32 %v2688, %v2716
      %2718 = vmatmul.f32.gmra.mxu0 %v2055
      %v2719 = vpop.f32.mrf.mxu0
      %v2720 = vadd.f32 %v2688, %v2719
      %2721 = vmatmul.f32.gmra.mxu0 %v2056
      %v2722 = vpop.f32.mrf.mxu0
      %v2723 = vadd.f32 %v2688, %v2722
      %2724 = vmatmul.f32.gmra.mxu0 %v2057
      %v2725 = vpop.f32.mrf.mxu0
      %v2726 = vadd.f32 %v2688, %v2725
      %2727 = vmatmul.f32.gmra.mxu0 %v2058
      %v2728 = vpop.f32.mrf.mxu0
      %v2729 = vadd.f32 %v2688, %v2728
      %2730 = vdwg.mxu0
      %2731 = vmatpush.msra.mxu0 %v2681
      %2732 = vmatpush.msra.mxu0 %v2680
      %2733 = vmatpush.msra.mxu0 %v2679
      %2734 = vmatpush.msra.mxu0 %v2678
      %2735 = vmatpush.msra.mxu0 %v2677
      %2736 = vmatpush.msra.mxu0 %v2676
      %2737 = vmatpush.msra.mxu0 %v2675
      %2738 = vmatpush.msra.mxu0 %v2674
      %2739 = vmatpush.msra.mxu0 %v2673
      %2740 = vmatpush.msra.mxu0 %v2672
      %2741 = vmatpush.msra.mxu0 %v2671
      %2742 = vmatpush.msra.mxu0 %v2670
      %2743 = vmatpush.msra.mxu0 %v2669
      %2744 = vmatpush.msra.mxu0 %v2668
      %2745 = vmatpush.msra.mxu0 %v2667
      %2746 = vmatpush.msra.mxu0 %v2666
      %2747 = vmatmul.f32.gmra.mxu0 %v2075
      %v2748 = vpop.f32.mrf.mxu0
      %v2749 = vadd.f32 %v2708, %v2748
      %2750 = vmatmul.f32.gmra.mxu0 %v2076
      %v2751 = vpop.f32.mrf.mxu0
      %v2752 = vadd.f32 %v2711, %v2751
      %2753 = vmatmul.f32.gmra.mxu0 %v2077
      %v2754 = vpop.f32.mrf.mxu0
      %v2755 = vadd.f32 %v2714, %v2754
      %2756 = vmatmul.f32.gmra.mxu0 %v2078
      %v2757 = vpop.f32.mrf.mxu0
      %v2758 = vadd.f32 %v2717, %v2757
      %2759 = vmatmul.f32.gmra.mxu0 %v2079
      %v2760 = vpop.f32.mrf.mxu0
      %v2761 = vadd.f32 %v2720, %v2760
      %2762 = vmatmul.f32.gmra.mxu0 %v2080
      %v2763 = vpop.f32.mrf.mxu0
      %v2764 = vadd.f32 %v2723, %v2763
      %2765 = vmatmul.f32.gmra.mxu0 %v2081
      %v2766 = vpop.f32.mrf.mxu0
      %v2767 = vadd.f32 %v2726, %v2766
      %2768 = vmatmul.f32.gmra.mxu0 %v2082
      %v2769 = vpop.f32.mrf.mxu0
      %v2770 = vadd.f32 %v2729, %v2769
      %2771 = vdwg.mxu0
      %2772 = vmatpush.msra.mxu0 0.0
      %2773 = vmatpush.msra.mxu0 0.0
      %2774 = vmatpush.msra.mxu0 0.0
      %2775 = vmatpush.msra.mxu0 0.0
      %2776 = vmatpush.msra.mxu0 0.0
      %2777 = vmatpush.msra.mxu0 0.0
      %2778 = vmatpush.msra.mxu0 0.0
      %2779 = vmatpush.msra.mxu0 0.0
      %2780 = vmatpush.msra.mxu0 0.0
      %2781 = vmatpush.msra.mxu0 0.0
      %2782 = vmatpush.msra.mxu0 0.0
      %2783 = vmatpush.msra.mxu0 0.0
      %2784 = vmatpush.msra.mxu0 %v2685
      %2785 = vmatpush.msra.mxu0 %v2684
      %2786 = vmatpush.msra.mxu0 %v2683
      %2787 = vmatpush.msra.mxu0 %v2682
      %2788 = vmatmul.f32.gmra.mxu0 %v2124
      %v2789 = vpop.f32.mrf.mxu0
      %v2790 = vadd.f32 %v2749, %v2789
      %2791 = vmatmul.f32.gmra.mxu0 %v2127
      %v2792 = vpop.f32.mrf.mxu0
      %v2793 = vadd.f32 %v2752, %v2792
      %2794 = vmatmul.f32.gmra.mxu0 %v2130
      %v2795 = vpop.f32.mrf.mxu0
      %v2796 = vadd.f32 %v2755, %v2795
      %2797 = vmatmul.f32.gmra.mxu0 %v2133
      %v2798 = vpop.f32.mrf.mxu0
      %v2799 = vadd.f32 %v2758, %v2798
      %2800 = vmatmul.f32.gmra.mxu0 %v2136
      %v2801 = vpop.f32.mrf.mxu0
      %v2802 = vadd.f32 %v2761, %v2801
      %2803 = vmatmul.f32.gmra.mxu0 %v2139
      %v2804 = vpop.f32.mrf.mxu0
      %v2805 = vadd.f32 %v2764, %v2804
      %2806 = vmatmul.f32.gmra.mxu0 %v2142
      %v2807 = vpop.f32.mrf.mxu0
      %v2808 = vadd.f32 %v2767, %v2807
      %2809 = vmatmul.f32.gmra.mxu0 %v2145
      %v2810 = vpop.f32.mrf.mxu0
      %v2811 = vadd.f32 %v2770, %v2810
      %2812 = vdwg.mxu0
      %v2813 = vmax.f32 %v2790, 0.0
      %v2814 = vmax.f32 %v2793, 0.0
      %v2815 = vmax.f32 %v2796, 0.0
      %v2816 = vmax.f32 %v2799, 0.0
      %v2817 = vmax.f32 %v2802, 0.0
      %v2818 = vmax.f32 %v2805, 0.0
      %v2819 = vmax.f32 %v2808, 0.0
      %v2820 = vmax.f32 %v2811, 0.0
      %s2821 = scalar_lea.vmem [#allocation3], 496
      %2822 = vst.msk [vmem:[%s2821 + $0x1] sm:$0xff] %vm441, %v2813
      %2823 = vst.msk [vmem:[%s2821 + $0x11] sm:$0xff] %vm441, %v2814
      %2824 = vst.msk [vmem:[%s2821 + $0x21] sm:$0xff] %vm441, %v2815
      %2825 = vst.msk [vmem:[%s2821 + $0x31] sm:$0xff] %vm441, %v2816
      %2826 = vst.msk [vmem:[%s2821 + $0x41] sm:$0xff] %vm441, %v2817
      %2827 = vst.msk [vmem:[%s2821 + $0x51] sm:$0xff] %vm441, %v2818
      %2828 = vst.msk [vmem:[%s2821 + $0x61] sm:$0xff] %vm441, %v2819
      %2829 = vst.msk [vmem:[%s2821 + $0x71] sm:$0xff] %vm441, %v2820
      %s2830 = scalar_lea.vmem [#allocation3], 480
      %v2831 = vld [vmem:[%s2830] sm:$0xff]
      %v2832 = vld [vmem:[%s2830 + $0x10] sm:$0xff]
      %v2833 = vld [vmem:[%s2830 + $0x20] sm:$0xff]
      %v2834 = vld [vmem:[%s2830 + $0x30] sm:$0xff]
      %v2835 = vld [vmem:[%s2830 + $0x40] sm:$0xff]
      %v2836 = vld [vmem:[%s2830 + $0x50] sm:$0xff]
      %v2837 = vld [vmem:[%s2830 + $0x60] sm:$0xff]
      %v2838 = vld [vmem:[%s2830 + $0x70] sm:$0xff]
      %s2839 = scalar_lea.vmem [#allocation3], 320
      %v2840 = vld [vmem:[%s2839 + $0x1] sm:$0xff]
      %v2841 = vld [vmem:[%s2839 + $0x11] sm:$0xff]
      %v2842 = vld [vmem:[%s2839 + $0x21] sm:$0xff]
      %v2843 = vld [vmem:[%s2839 + $0x31] sm:$0xff]
      %v2844 = vld [vmem:[%s2839 + $0x41] sm:$0xff]
      %v2845 = vld [vmem:[%s2839 + $0x51] sm:$0xff]
      %v2846 = vld [vmem:[%s2839 + $0x61] sm:$0xff]
      %v2847 = vld [vmem:[%s2839 + $0x71] sm:$0xff]
      %v2848 = vld [vmem:[%s2830 + $0x1] sm:$0xff]
      %v2849 = vld [vmem:[%s2830 + $0x11] sm:$0xff]
      %v2850 = vld [vmem:[%s2830 + $0x21] sm:$0xff]
      %v2851 = vld [vmem:[%s2830 + $0x31] sm:$0xff]
      %v2852 = vld [vmem:[%s2830 + $0x41] sm:$0xff]
      %v2853 = vld [vmem:[%s2830 + $0x51] sm:$0xff]
      %v2854 = vld [vmem:[%s2830 + $0x61] sm:$0xff]
      %v2855 = vld [vmem:[%s2830 + $0x71] sm:$0xff]
      %v2856 = vld [vmem:[%s2459] sm:$0xff]
      %v2857 = vld [vmem:[%s2459 + $0x10] sm:$0xff]
      %v2858 = vld [vmem:[%s2459 + $0x20] sm:$0xff]
      %v2859 = vld [vmem:[%s2459 + $0x30] sm:$0xff]
      %v2860 = vld [vmem:[%s2459 + $0x40] sm:$0xff]
      %v2861 = vld [vmem:[%s2459 + $0x50] sm:$0xff]
      %v2862 = vld [vmem:[%s2459 + $0x60] sm:$0xff]
      %v2863 = vld [vmem:[%s2459 + $0x70] sm:$0xff]
      %v2864 = vld [vmem:[%s2278 + $0x1] sm:$0xff]
      %v2865 = vld [vmem:[%s2278 + $0x11] sm:$0xff]
      %v2866 = vld [vmem:[%s2278 + $0x21] sm:$0xff]
      %v2867 = vld [vmem:[%s2278 + $0x31] sm:$0xff]
      %v2868 = vld [vmem:[%s2278 + $0x41] sm:$0xff]
      %v2869 = vld [vmem:[%s2278 + $0x51] sm:$0xff]
      %v2870 = vld [vmem:[%s2278 + $0x61] sm:$0xff]
      %v2871 = vld [vmem:[%s2278 + $0x71] sm:$0xff]
      %v2872 = vld [vmem:[%s2459 + $0x1] sm:$0xff]
      %v2873 = vld [vmem:[%s2459 + $0x11] sm:$0xff]
      %v2874 = vld [vmem:[%s2459 + $0x21] sm:$0xff]
      %v2875 = vld [vmem:[%s2459 + $0x31] sm:$0xff]
      %v2876 = vld [vmem:[%s2459 + $0x41] sm:$0xff]
      %v2877 = vld [vmem:[%s2459 + $0x51] sm:$0xff]
      %v2878 = vld [vmem:[%s2459 + $0x61] sm:$0xff]
      %v2879 = vld [vmem:[%s2459 + $0x71] sm:$0xff]
      %v2880 = vld [vmem:[%s2821] sm:$0xff]
      %v2881 = vld [vmem:[%s2821 + $0x10] sm:$0xff]
      %v2882 = vld [vmem:[%s2821 + $0x20] sm:$0xff]
      %v2883 = vld [vmem:[%s2821 + $0x30] sm:$0xff]
      %v2884 = vld [vmem:[%s2821 + $0x40] sm:$0xff]
      %v2885 = vld [vmem:[%s2821 + $0x50] sm:$0xff]
      %v2886 = vld [vmem:[%s2821 + $0x60] sm:$0xff]
      %v2887 = vld [vmem:[%s2821 + $0x70] sm:$0xff]
      %v2888 = vld [vmem:[%s2640 + $0x1] sm:$0xff]
      %v2889 = vld [vmem:[%s2640 + $0x11] sm:$0xff]
      %v2890 = vld [vmem:[%s2640 + $0x21] sm:$0xff]
      %v2891 = vld [vmem:[%s2640 + $0x31] sm:$0xff]
      %v2892 = vld [vmem:[%s2640 + $0x41] sm:$0xff]
      %v2893 = vld [vmem:[%s2640 + $0x51] sm:$0xff]
      %v2894 = vld [vmem:[%s2640 + $0x61] sm:$0xff]
      %v2895 = vld [vmem:[%s2640 + $0x71] sm:$0xff]
      %v2896 = vld [vmem:[%s2821 + $0x1] sm:$0xff]
      %v2897 = vld [vmem:[%s2821 + $0x11] sm:$0xff]
      %v2898 = vld [vmem:[%s2821 + $0x21] sm:$0xff]
      %v2899 = vld [vmem:[%s2821 + $0x31] sm:$0xff]
      %v2900 = vld [vmem:[%s2821 + $0x41] sm:$0xff]
      %v2901 = vld [vmem:[%s2821 + $0x51] sm:$0xff]
      %v2902 = vld [vmem:[%s2821 + $0x61] sm:$0xff]
      %v2903 = vld [vmem:[%s2821 + $0x71] sm:$0xff]
      %2912 = vrot.lane.b32.xlu0 %v2840, 32
      %v2913 = vpop.permute.xlu0 %2912
      %2914 = vrot.lane.b32.xlu0 %v2841, 32
      %v2915 = vpop.permute.xlu0 %2914
      %2916 = vrot.lane.b32.xlu0 %v2842, 32
      %v2917 = vpop.permute.xlu0 %2916
      %2918 = vrot.lane.b32.xlu0 %v2843, 32
      %v2919 = vpop.permute.xlu0 %2918
      %2920 = vrot.lane.b32.xlu0 %v2844, 32
      %v2921 = vpop.permute.xlu0 %2920
      %2922 = vrot.lane.b32.xlu0 %v2845, 32
      %v2923 = vpop.permute.xlu0 %2922
      %2924 = vrot.lane.b32.xlu0 %v2846, 32
      %v2925 = vpop.permute.xlu0 %2924
      %2926 = vrot.lane.b32.xlu0 %v2847, 32
      %v2927 = vpop.permute.xlu0 %2926
      %2944 = vrot.lane.b32.xlu0 %v2848, 64
      %v2945 = vpop.permute.xlu0 %2944
      %2946 = vrot.lane.b32.xlu0 %v2849, 64
      %v2947 = vpop.permute.xlu0 %2946
      %2948 = vrot.lane.b32.xlu0 %v2850, 64
      %v2949 = vpop.permute.xlu0 %2948
      %2950 = vrot.lane.b32.xlu0 %v2851, 64
      %v2951 = vpop.permute.xlu0 %2950
      %2952 = vrot.lane.b32.xlu0 %v2852, 64
      %v2953 = vpop.permute.xlu0 %2952
      %2954 = vrot.lane.b32.xlu0 %v2853, 64
      %v2955 = vpop.permute.xlu0 %2954
      %2956 = vrot.lane.b32.xlu0 %v2854, 64
      %v2957 = vpop.permute.xlu0 %2956
      %2958 = vrot.lane.b32.xlu0 %v2855, 64
      %v2959 = vpop.permute.xlu0 %2958
      %2976 = vrot.lane.b32.xlu0 %v2856, 96
      %v2977 = vpop.permute.xlu0 %2976
      %2978 = vrot.lane.b32.xlu0 %v2857, 96
      %v2979 = vpop.permute.xlu0 %2978
      %2980 = vrot.lane.b32.xlu0 %v2858, 96
      %v2981 = vpop.permute.xlu0 %2980
      %2982 = vrot.lane.b32.xlu0 %v2859, 96
      %v2983 = vpop.permute.xlu0 %2982
      %2984 = vrot.lane.b32.xlu0 %v2860, 96
      %v2985 = vpop.permute.xlu0 %2984
      %2986 = vrot.lane.b32.xlu0 %v2861, 96
      %v2987 = vpop.permute.xlu0 %2986
      %2988 = vrot.lane.b32.xlu0 %v2862, 96
      %v2989 = vpop.permute.xlu0 %2988
      %2990 = vrot.lane.b32.xlu0 %v2863, 96
      %v2991 = vpop.permute.xlu0 %2990
      %3008 = vrot.lane.b32.xlu0 %v2872, 32
      %v3009 = vpop.permute.xlu0 %3008
      %3010 = vrot.lane.b32.xlu0 %v2873, 32
      %v3011 = vpop.permute.xlu0 %3010
      %3012 = vrot.lane.b32.xlu0 %v2874, 32
      %v3013 = vpop.permute.xlu0 %3012
      %3014 = vrot.lane.b32.xlu0 %v2875, 32
      %v3015 = vpop.permute.xlu0 %3014
      %3016 = vrot.lane.b32.xlu0 %v2876, 32
      %v3017 = vpop.permute.xlu0 %3016
      %3018 = vrot.lane.b32.xlu0 %v2877, 32
      %v3019 = vpop.permute.xlu0 %3018
      %3020 = vrot.lane.b32.xlu0 %v2878, 32
      %v3021 = vpop.permute.xlu0 %3020
      %3022 = vrot.lane.b32.xlu0 %v2879, 32
      %v3023 = vpop.permute.xlu0 %3022
      %3040 = vrot.lane.b32.xlu0 %v2880, 64
      %v3041 = vpop.permute.xlu0 %3040
      %3042 = vrot.lane.b32.xlu0 %v2881, 64
      %v3043 = vpop.permute.xlu0 %3042
      %3044 = vrot.lane.b32.xlu0 %v2882, 64
      %v3045 = vpop.permute.xlu0 %3044
      %3046 = vrot.lane.b32.xlu0 %v2883, 64
      %v3047 = vpop.permute.xlu0 %3046
      %3048 = vrot.lane.b32.xlu0 %v2884, 64
      %v3049 = vpop.permute.xlu0 %3048
      %3050 = vrot.lane.b32.xlu0 %v2885, 64
      %v3051 = vpop.permute.xlu0 %3050
      %3052 = vrot.lane.b32.xlu0 %v2886, 64
      %v3053 = vpop.permute.xlu0 %3052
      %3054 = vrot.lane.b32.xlu0 %v2887, 64
      %v3055 = vpop.permute.xlu0 %3054
      %3072 = vrot.lane.b32.xlu0 %v2888, 96
      %v3073 = vpop.permute.xlu0 %3072
      %3074 = vrot.lane.b32.xlu0 %v2889, 96
      %v3075 = vpop.permute.xlu0 %3074
      %3076 = vrot.lane.b32.xlu0 %v2890, 96
      %v3077 = vpop.permute.xlu0 %3076
      %3078 = vrot.lane.b32.xlu0 %v2891, 96
      %v3079 = vpop.permute.xlu0 %3078
      %3080 = vrot.lane.b32.xlu0 %v2892, 96
      %v3081 = vpop.permute.xlu0 %3080
      %3082 = vrot.lane.b32.xlu0 %v2893, 96
      %v3083 = vpop.permute.xlu0 %3082
      %3084 = vrot.lane.b32.xlu0 %v2894, 96
      %v3085 = vpop.permute.xlu0 %3084
      %3086 = vrot.lane.b32.xlu0 %v2895, 96
      %v3087 = vpop.permute.xlu0 %3086
      %v3096 = vsel %vm441, %v2831, %v2913
      %v3097 = vsel %vm441, %v2832, %v2915
      %v3098 = vsel %vm441, %v2833, %v2917
      %v3099 = vsel %vm441, %v2834, %v2919
      %v3100 = vsel %vm441, %v2835, %v2921
      %v3101 = vsel %vm441, %v2836, %v2923
      %v3102 = vsel %vm441, %v2837, %v2925
      %v3103 = vsel %vm441, %v2838, %v2927
      %v3104 = vsel %vm833, %v3096, %v2945
      %v3105 = vsel %vm833, %v3097, %v2947
      %v3106 = vsel %vm833, %v3098, %v2949
      %v3107 = vsel %vm833, %v3099, %v2951
      %v3108 = vsel %vm833, %v3100, %v2953
      %v3109 = vsel %vm833, %v3101, %v2955
      %v3110 = vsel %vm833, %v3102, %v2957
      %v3111 = vsel %vm833, %v3103, %v2959
      %v3112 = vsel %vm842, %v3104, %v2977
      %v3113 = vsel %vm842, %v3105, %v2979
      %v3114 = vsel %vm842, %v3106, %v2981
      %v3115 = vsel %vm842, %v3107, %v2983
      %v3116 = vsel %vm842, %v3108, %v2985
      %v3117 = vsel %vm842, %v3109, %v2987
      %v3118 = vsel %vm842, %v3110, %v2989
      %v3119 = vsel %vm842, %v3111, %v2991
      %v3120 = vsel %vm441, %v2864, %v3009
      %v3121 = vsel %vm441, %v2865, %v3011
      %v3122 = vsel %vm441, %v2866, %v3013
      %v3123 = vsel %vm441, %v2867, %v3015
      %v3124 = vsel %vm441, %v2868, %v3017
      %v3125 = vsel %vm441, %v2869, %v3019
      %v3126 = vsel %vm441, %v2870, %v3021
      %v3127 = vsel %vm441, %v2871, %v3023
      %v3128 = vsel %vm833, %v3120, %v3041
      %v3129 = vsel %vm833, %v3121, %v3043
      %v3130 = vsel %vm833, %v3122, %v3045
      %v3131 = vsel %vm833, %v3123, %v3047
      %v3132 = vsel %vm833, %v3124, %v3049
      %v3133 = vsel %vm833, %v3125, %v3051
      %v3134 = vsel %vm833, %v3126, %v3053
      %v3135 = vsel %vm833, %v3127, %v3055
      %v3136 = vsel %vm842, %v3128, %v3073
      %v3137 = vsel %vm842, %v3129, %v3075
      %v3138 = vsel %vm842, %v3130, %v3077
      %v3139 = vsel %vm842, %v3131, %v3079
      %v3140 = vsel %vm842, %v3132, %v3081
      %v3141 = vsel %vm842, %v3133, %v3083
      %v3142 = vsel %vm842, %v3134, %v3085
      %v3143 = vsel %vm842, %v3135, %v3087
      %v3144 = vld [vmem:[%s11] sm:$0xff]
      %v3145 = vld [vmem:[%s11 + $0x8] sm:$0xff]
      %v3146 = vld [vmem:[%s11 + $0x10] sm:$0xff]
      %v3147 = vld [vmem:[%s11 + $0x18] sm:$0xff]
      %v3148 = vld [vmem:[%s11 + $0x20] sm:$0xff]
      %v3149 = vld [vmem:[%s11 + $0x28] sm:$0xff]
      %v3150 = vld [vmem:[%s11 + $0x30] sm:$0xff]
      %v3151 = vld [vmem:[%s11 + $0x38] sm:$0xff]
      %v3152 = vld [vmem:[%s11 + $0x40] sm:$0xff]
      %v3153 = vld [vmem:[%s11 + $0x48] sm:$0xff]
      %v3154 = vld [vmem:[%s11 + $0x50] sm:$0xff]
      %v3155 = vld [vmem:[%s11 + $0x58] sm:$0xff]
      %v3156 = vld [vmem:[%s11 + $0x60] sm:$0xff]
      %v3157 = vld [vmem:[%s11 + $0x68] sm:$0xff]
      %v3158 = vld [vmem:[%s11 + $0x70] sm:$0xff]
      %v3159 = vld [vmem:[%s11 + $0x78] sm:$0xff]
      %v3160 = vld [vmem:[%s11 + $0x80] sm:$0xff]
      %v3161 = vld [vmem:[%s11 + $0x88] sm:$0xff]
      %v3162 = vld [vmem:[%s11 + $0x90] sm:$0xff]
      %v3163 = vld [vmem:[%s11 + $0x98] sm:$0xff]
      %v3164 = vld [vmem:[%s11 + $0xa0] sm:$0xff]
      %v3165 = vld [vmem:[%s11 + $0xa8] sm:$0xff]
      %v3166 = vld [vmem:[%s11 + $0xb0] sm:$0xff]
      %v3167 = vld [vmem:[%s11 + $0xb8] sm:$0xff]
      %v3168 = vld [vmem:[%s11 + $0xc0] sm:$0xff]
      %v3169 = vld [vmem:[%s11 + $0xc8] sm:$0xff]
      %v3170 = vld [vmem:[%s11 + $0xd0] sm:$0xff]
      %v3171 = vld [vmem:[%s11 + $0xd8] sm:$0xff]
      %v3172 = vld [vmem:[%s11 + $0xe0] sm:$0xff]
      %v3173 = vld [vmem:[%s11 + $0xe8] sm:$0xff]
      %v3174 = vld [vmem:[%s11 + $0xf0] sm:$0xff]
      %v3175 = vld [vmem:[%s11 + $0xf8] sm:$0xff]
      %v3176 = vld [vmem:[%s11 + $0x100] sm:$0xff]
      %v3177 = vld [vmem:[%s11 + $0x108] sm:$0xff]
      %v3178 = vld [vmem:[%s11 + $0x110] sm:$0xff]
      %v3179 = vld [vmem:[%s11 + $0x118] sm:$0xff]
      %v3180 = vld [vmem:[%s12] sm:$0x1]
      %v3182 = vperm.slane %v3180, 0
      %v3185 = vsel %vm441, %v2896, 0
      %v3188 = vsel %vm441, %v2897, 0
      %v3191 = vsel %vm441, %v2898, 0
      %v3194 = vsel %vm441, %v2899, 0
      %v3197 = vsel %vm441, %v2900, 0
      %v3200 = vsel %vm441, %v2901, 0
      %v3203 = vsel %vm441, %v2902, 0
      %v3206 = vsel %vm441, %v2903, 0
      %3208 = vmatpush.msra.mxu0 %v3159
      %3209 = vmatpush.msra.mxu0 %v3158
      %3210 = vmatpush.msra.mxu0 %v3157
      %3211 = vmatpush.msra.mxu0 %v3156
      %3212 = vmatpush.msra.mxu0 %v3155
      %3213 = vmatpush.msra.mxu0 %v3154
      %3214 = vmatpush.msra.mxu0 %v3153
      %3215 = vmatpush.msra.mxu0 %v3152
      %3216 = vmatpush.msra.mxu0 %v3151
      %3217 = vmatpush.msra.mxu0 %v3150
      %3218 = vmatpush.msra.mxu0 %v3149
      %3219 = vmatpush.msra.mxu0 %v3148
      %3220 = vmatpush.msra.mxu0 %v3147
      %3221 = vmatpush.msra.mxu0 %v3146
      %3222 = vmatpush.msra.mxu0 %v3145
      %3223 = vmatpush.msra.mxu0 %v3144
      %3224 = vmatmul.f32.gmra.mxu0 %v3112
      %v3225 = vpop.f32.mrf.mxu0
      %v3226 = vadd.f32 %v3182, %v3225
      %3227 = vmatmul.f32.gmra.mxu0 %v3113
      %v3228 = vpop.f32.mrf.mxu0
      %v3229 = vadd.f32 %v3182, %v3228
      %3230 = vmatmul.f32.gmra.mxu0 %v3114
      %v3231 = vpop.f32.mrf.mxu0
      %v3232 = vadd.f32 %v3182, %v3231
      %3233 = vmatmul.f32.gmra.mxu0 %v3115
      %v3234 = vpop.f32.mrf.mxu0
      %v3235 = vadd.f32 %v3182, %v3234
      %3236 = vmatmul.f32.gmra.mxu0 %v3116
      %v3237 = vpop.f32.mrf.mxu0
      %v3238 = vadd.f32 %v3182, %v3237
      %3239 = vmatmul.f32.gmra.mxu0 %v3117
      %v3240 = vpop.f32.mrf.mxu0
      %v3241 = vadd.f32 %v3182, %v3240
      %3242 = vmatmul.f32.gmra.mxu0 %v3118
      %v3243 = vpop.f32.mrf.mxu0
      %v3244 = vadd.f32 %v3182, %v3243
      %3245 = vmatmul.f32.gmra.mxu0 %v3119
      %v3246 = vpop.f32.mrf.mxu0
      %v3247 = vadd.f32 %v3182, %v3246
      %3248 = vdwg.mxu0
      %3249 = vmatpush.msra.mxu0 %v3175
      %3250 = vmatpush.msra.mxu0 %v3174
      %3251 = vmatpush.msra.mxu0 %v3173
      %3252 = vmatpush.msra.mxu0 %v3172
      %3253 = vmatpush.msra.mxu0 %v3171
      %3254 = vmatpush.msra.mxu0 %v3170
      %3255 = vmatpush.msra.mxu0 %v3169
      %3256 = vmatpush.msra.mxu0 %v3168
      %3257 = vmatpush.msra.mxu0 %v3167
      %3258 = vmatpush.msra.mxu0 %v3166
      %3259 = vmatpush.msra.mxu0 %v3165
      %3260 = vmatpush.msra.mxu0 %v3164
      %3261 = vmatpush.msra.mxu0 %v3163
      %3262 = vmatpush.msra.mxu0 %v3162
      %3263 = vmatpush.msra.mxu0 %v3161
      %3264 = vmatpush.msra.mxu0 %v3160
      %3265 = vmatmul.f32.gmra.mxu0 %v3136
      %v3266 = vpop.f32.mrf.mxu0
      %v3267 = vadd.f32 %v3226, %v3266
      %3268 = vmatmul.f32.gmra.mxu0 %v3137
      %v3269 = vpop.f32.mrf.mxu0
      %v3270 = vadd.f32 %v3229, %v3269
      %3271 = vmatmul.f32.gmra.mxu0 %v3138
      %v3272 = vpop.f32.mrf.mxu0
      %v3273 = vadd.f32 %v3232, %v3272
      %3274 = vmatmul.f32.gmra.mxu0 %v3139
      %v3275 = vpop.f32.mrf.mxu0
      %v3276 = vadd.f32 %v3235, %v3275
      %3277 = vmatmul.f32.gmra.mxu0 %v3140
      %v3278 = vpop.f32.mrf.mxu0
      %v3279 = vadd.f32 %v3238, %v3278
      %3280 = vmatmul.f32.gmra.mxu0 %v3141
      %v3281 = vpop.f32.mrf.mxu0
      %v3282 = vadd.f32 %v3241, %v3281
      %3283 = vmatmul.f32.gmra.mxu0 %v3142
      %v3284 = vpop.f32.mrf.mxu0
      %v3285 = vadd.f32 %v3244, %v3284
      %3286 = vmatmul.f32.gmra.mxu0 %v3143
      %v3287 = vpop.f32.mrf.mxu0
      %v3288 = vadd.f32 %v3247, %v3287
      %3289 = vdwg.mxu0
      %3290 = vmatpush.msra.mxu0 0.0
      %3291 = vmatpush.msra.mxu0 0.0
      %3292 = vmatpush.msra.mxu0 0.0
      %3293 = vmatpush.msra.mxu0 0.0
      %3294 = vmatpush.msra.mxu0 0.0
      %3295 = vmatpush.msra.mxu0 0.0
      %3296 = vmatpush.msra.mxu0 0.0
      %3297 = vmatpush.msra.mxu0 0.0
      %3298 = vmatpush.msra.mxu0 0.0
      %3299 = vmatpush.msra.mxu0 0.0
      %3300 = vmatpush.msra.mxu0 0.0
      %3301 = vmatpush.msra.mxu0 0.0
      %3302 = vmatpush.msra.mxu0 %v3179
      %3303 = vmatpush.msra.mxu0 %v3178
      %3304 = vmatpush.msra.mxu0 %v3177
      %3305 = vmatpush.msra.mxu0 %v3176
      %3306 = vmatmul.f32.gmra.mxu0 %v3185
      %v3307 = vpop.f32.mrf.mxu0
      %v3308 = vadd.f32 %v3267, %v3307
      %3309 = vmatmul.f32.gmra.mxu0 %v3188
      %v3310 = vpop.f32.mrf.mxu0
      %v3311 = vadd.f32 %v3270, %v3310
      %3312 = vmatmul.f32.gmra.mxu0 %v3191
      %v3313 = vpop.f32.mrf.mxu0
      %v3314 = vadd.f32 %v3273, %v3313
      %3315 = vmatmul.f32.gmra.mxu0 %v3194
      %v3316 = vpop.f32.mrf.mxu0
      %v3317 = vadd.f32 %v3276, %v3316
      %3318 = vmatmul.f32.gmra.mxu0 %v3197
      %v3319 = vpop.f32.mrf.mxu0
      %v3320 = vadd.f32 %v3279, %v3319
      %3321 = vmatmul.f32.gmra.mxu0 %v3200
      %v3322 = vpop.f32.mrf.mxu0
      %v3323 = vadd.f32 %v3282, %v3322
      %3324 = vmatmul.f32.gmra.mxu0 %v3203
      %v3325 = vpop.f32.mrf.mxu0
      %v3326 = vadd.f32 %v3285, %v3325
      %3327 = vmatmul.f32.gmra.mxu0 %v3206
      %v3328 = vpop.f32.mrf.mxu0
      %v3329 = vadd.f32 %v3288, %v3328
      %3330 = vdwg.mxu0
      %v3331 = vld [vmem:[%s2839 + $0x2] sm:$0xff]
      %v3332 = vld [vmem:[%s2839 + $0x12] sm:$0xff]
      %v3333 = vld [vmem:[%s2839 + $0x22] sm:$0xff]
      %v3334 = vld [vmem:[%s2839 + $0x32] sm:$0xff]
      %v3335 = vld [vmem:[%s2839 + $0x42] sm:$0xff]
      %v3336 = vld [vmem:[%s2839 + $0x52] sm:$0xff]
      %v3337 = vld [vmem:[%s2839 + $0x62] sm:$0xff]
      %v3338 = vld [vmem:[%s2839 + $0x72] sm:$0xff]
      %v3339 = vld [vmem:[%s2278 + $0x2] sm:$0xff]
      %v3340 = vld [vmem:[%s2278 + $0x12] sm:$0xff]
      %v3341 = vld [vmem:[%s2278 + $0x22] sm:$0xff]
      %v3342 = vld [vmem:[%s2278 + $0x32] sm:$0xff]
      %v3343 = vld [vmem:[%s2278 + $0x42] sm:$0xff]
      %v3344 = vld [vmem:[%s2278 + $0x52] sm:$0xff]
      %v3345 = vld [vmem:[%s2278 + $0x62] sm:$0xff]
      %v3346 = vld [vmem:[%s2278 + $0x72] sm:$0xff]
      %v3347 = vld [vmem:[%s2640 + $0x2] sm:$0xff]
      %v3348 = vld [vmem:[%s2640 + $0x12] sm:$0xff]
      %v3349 = vld [vmem:[%s2640 + $0x22] sm:$0xff]
      %v3350 = vld [vmem:[%s2640 + $0x32] sm:$0xff]
      %v3351 = vld [vmem:[%s2640 + $0x42] sm:$0xff]
      %v3352 = vld [vmem:[%s2640 + $0x52] sm:$0xff]
      %v3353 = vld [vmem:[%s2640 + $0x62] sm:$0xff]
      %v3354 = vld [vmem:[%s2640 + $0x72] sm:$0xff]
      %3355 = vrot.lane.b32.xlu0 %v2848, 32
      %v3356 = vpop.permute.xlu0 %3355
      %3357 = vrot.lane.b32.xlu0 %v2849, 32
      %v3358 = vpop.permute.xlu0 %3357
      %3359 = vrot.lane.b32.xlu0 %v2850, 32
      %v3360 = vpop.permute.xlu0 %3359
      %3361 = vrot.lane.b32.xlu0 %v2851, 32
      %v3362 = vpop.permute.xlu0 %3361
      %3363 = vrot.lane.b32.xlu0 %v2852, 32
      %v3364 = vpop.permute.xlu0 %3363
      %3365 = vrot.lane.b32.xlu0 %v2853, 32
      %v3366 = vpop.permute.xlu0 %3365
      %3367 = vrot.lane.b32.xlu0 %v2854, 32
      %v3368 = vpop.permute.xlu0 %3367
      %3369 = vrot.lane.b32.xlu0 %v2855, 32
      %v3370 = vpop.permute.xlu0 %3369
      %3387 = vrot.lane.b32.xlu0 %v3331, 64
      %v3388 = vpop.permute.xlu0 %3387
      %3389 = vrot.lane.b32.xlu0 %v3332, 64
      %v3390 = vpop.permute.xlu0 %3389
      %3391 = vrot.lane.b32.xlu0 %v3333, 64
      %v3392 = vpop.permute.xlu0 %3391
      %3393 = vrot.lane.b32.xlu0 %v3334, 64
      %v3394 = vpop.permute.xlu0 %3393
      %3395 = vrot.lane.b32.xlu0 %v3335, 64
      %v3396 = vpop.permute.xlu0 %3395
      %3397 = vrot.lane.b32.xlu0 %v3336, 64
      %v3398 = vpop.permute.xlu0 %3397
      %3399 = vrot.lane.b32.xlu0 %v3337, 64
      %v3400 = vpop.permute.xlu0 %3399
      %3401 = vrot.lane.b32.xlu0 %v3338, 64
      %v3402 = vpop.permute.xlu0 %3401
      %3419 = vrot.lane.b32.xlu0 %v2864, 96
      %v3420 = vpop.permute.xlu0 %3419
      %3421 = vrot.lane.b32.xlu0 %v2865, 96
      %v3422 = vpop.permute.xlu0 %3421
      %3423 = vrot.lane.b32.xlu0 %v2866, 96
      %v3424 = vpop.permute.xlu0 %3423
      %3425 = vrot.lane.b32.xlu0 %v2867, 96
      %v3426 = vpop.permute.xlu0 %3425
      %3427 = vrot.lane.b32.xlu0 %v2868, 96
      %v3428 = vpop.permute.xlu0 %3427
      %3429 = vrot.lane.b32.xlu0 %v2869, 96
      %v3430 = vpop.permute.xlu0 %3429
      %3431 = vrot.lane.b32.xlu0 %v2870, 96
      %v3432 = vpop.permute.xlu0 %3431
      %3433 = vrot.lane.b32.xlu0 %v2871, 96
      %v3434 = vpop.permute.xlu0 %3433
      %3451 = vrot.lane.b32.xlu0 %v3339, 32
      %v3452 = vpop.permute.xlu0 %3451
      %3453 = vrot.lane.b32.xlu0 %v3340, 32
      %v3454 = vpop.permute.xlu0 %3453
      %3455 = vrot.lane.b32.xlu0 %v3341, 32
      %v3456 = vpop.permute.xlu0 %3455
      %3457 = vrot.lane.b32.xlu0 %v3342, 32
      %v3458 = vpop.permute.xlu0 %3457
      %3459 = vrot.lane.b32.xlu0 %v3343, 32
      %v3460 = vpop.permute.xlu0 %3459
      %3461 = vrot.lane.b32.xlu0 %v3344, 32
      %v3462 = vpop.permute.xlu0 %3461
      %3463 = vrot.lane.b32.xlu0 %v3345, 32
      %v3464 = vpop.permute.xlu0 %3463
      %3465 = vrot.lane.b32.xlu0 %v3346, 32
      %v3466 = vpop.permute.xlu0 %3465
      %3475 = vrot.lane.b32.xlu0 %v2888, 64
      %v3476 = vpop.permute.xlu0 %3475
      %3477 = vrot.lane.b32.xlu0 %v2889, 64
      %v3478 = vpop.permute.xlu0 %3477
      %3479 = vrot.lane.b32.xlu0 %v2890, 64
      %v3480 = vpop.permute.xlu0 %3479
      %3481 = vrot.lane.b32.xlu0 %v2891, 64
      %v3482 = vpop.permute.xlu0 %3481
      %3483 = vrot.lane.b32.xlu0 %v2892, 64
      %v3484 = vpop.permute.xlu0 %3483
      %3485 = vrot.lane.b32.xlu0 %v2893, 64
      %v3486 = vpop.permute.xlu0 %3485
      %3487 = vrot.lane.b32.xlu0 %v2894, 64
      %v3488 = vpop.permute.xlu0 %3487
      %3489 = vrot.lane.b32.xlu0 %v2895, 64
      %v3490 = vpop.permute.xlu0 %3489
      %3499 = vrot.lane.b32.xlu0 %v2896, 96
      %v3500 = vpop.permute.xlu0 %3499
      %3501 = vrot.lane.b32.xlu0 %v2897, 96
      %v3502 = vpop.permute.xlu0 %3501
      %3503 = vrot.lane.b32.xlu0 %v2898, 96
      %v3504 = vpop.permute.xlu0 %3503
      %3505 = vrot.lane.b32.xlu0 %v2899, 96
      %v3506 = vpop.permute.xlu0 %3505
      %3507 = vrot.lane.b32.xlu0 %v2900, 96
      %v3508 = vpop.permute.xlu0 %3507
      %3509 = vrot.lane.b32.xlu0 %v2901, 96
      %v3510 = vpop.permute.xlu0 %3509
      %3511 = vrot.lane.b32.xlu0 %v2902, 96
      %v3512 = vpop.permute.xlu0 %3511
      %3513 = vrot.lane.b32.xlu0 %v2903, 96
      %v3514 = vpop.permute.xlu0 %3513
      %v3523 = vsel %vm441, %v2840, %v3356
      %v3524 = vsel %vm441, %v2841, %v3358
      %v3525 = vsel %vm441, %v2842, %v3360
      %v3526 = vsel %vm441, %v2843, %v3362
      %v3527 = vsel %vm441, %v2844, %v3364
      %v3528 = vsel %vm441, %v2845, %v3366
      %v3529 = vsel %vm441, %v2846, %v3368
      %v3530 = vsel %vm441, %v2847, %v3370
      %v3531 = vsel %vm833, %v3523, %v3388
      %v3532 = vsel %vm833, %v3524, %v3390
      %v3533 = vsel %vm833, %v3525, %v3392
      %v3534 = vsel %vm833, %v3526, %v3394
      %v3535 = vsel %vm833, %v3527, %v3396
      %v3536 = vsel %vm833, %v3528, %v3398
      %v3537 = vsel %vm833, %v3529, %v3400
      %v3538 = vsel %vm833, %v3530, %v3402
      %v3539 = vsel %vm842, %v3531, %v3420
      %v3540 = vsel %vm842, %v3532, %v3422
      %v3541 = vsel %vm842, %v3533, %v3424
      %v3542 = vsel %vm842, %v3534, %v3426
      %v3543 = vsel %vm842, %v3535, %v3428
      %v3544 = vsel %vm842, %v3536, %v3430
      %v3545 = vsel %vm842, %v3537, %v3432
      %v3546 = vsel %vm842, %v3538, %v3434
      %v3547 = vsel %vm441, %v2872, %v3452
      %v3548 = vsel %vm441, %v2873, %v3454
      %v3549 = vsel %vm441, %v2874, %v3456
      %v3550 = vsel %vm441, %v2875, %v3458
      %v3551 = vsel %vm441, %v2876, %v3460
      %v3552 = vsel %vm441, %v2877, %v3462
      %v3553 = vsel %vm441, %v2878, %v3464
      %v3554 = vsel %vm441, %v2879, %v3466
      %v3555 = vsel %vm833, %v3547, %v3476
      %v3556 = vsel %vm833, %v3548, %v3478
      %v3557 = vsel %vm833, %v3549, %v3480
      %v3558 = vsel %vm833, %v3550, %v3482
      %v3559 = vsel %vm833, %v3551, %v3484
      %v3560 = vsel %vm833, %v3552, %v3486
      %v3561 = vsel %vm833, %v3553, %v3488
      %v3562 = vsel %vm833, %v3554, %v3490
      %v3563 = vsel %vm842, %v3555, %v3500
      %v3564 = vsel %vm842, %v3556, %v3502
      %v3565 = vsel %vm842, %v3557, %v3504
      %v3566 = vsel %vm842, %v3558, %v3506
      %v3567 = vsel %vm842, %v3559, %v3508
      %v3568 = vsel %vm842, %v3560, %v3510
      %v3569 = vsel %vm842, %v3561, %v3512
      %v3570 = vsel %vm842, %v3562, %v3514
      %v3572 = vsel %vm441, %v3347, 0
      %v3575 = vsel %vm441, %v3348, 0
      %v3578 = vsel %vm441, %v3349, 0
      %v3581 = vsel %vm441, %v3350, 0
      %v3584 = vsel %vm441, %v3351, 0
      %v3587 = vsel %vm441, %v3352, 0
      %v3590 = vsel %vm441, %v3353, 0
      %v3593 = vsel %vm441, %v3354, 0
      %3595 = vmatpush.msra.mxu0 %v3159
      %3596 = vmatpush.msra.mxu0 %v3158
      %3597 = vmatpush.msra.mxu0 %v3157
      %3598 = vmatpush.msra.mxu0 %v3156
      %3599 = vmatpush.msra.mxu0 %v3155
      %3600 = vmatpush.msra.mxu0 %v3154
      %3601 = vmatpush.msra.mxu0 %v3153
      %3602 = vmatpush.msra.mxu0 %v3152
      %3603 = vmatpush.msra.mxu0 %v3151
      %3604 = vmatpush.msra.mxu0 %v3150
      %3605 = vmatpush.msra.mxu0 %v3149
      %3606 = vmatpush.msra.mxu0 %v3148
      %3607 = vmatpush.msra.mxu0 %v3147
      %3608 = vmatpush.msra.mxu0 %v3146
      %3609 = vmatpush.msra.mxu0 %v3145
      %3610 = vmatpush.msra.mxu0 %v3144
      %3611 = vmatmul.f32.gmra.mxu0 %v3539
      %v3612 = vpop.f32.mrf.mxu0
      %v3613 = vadd.f32 %v3182, %v3612
      %3614 = vmatmul.f32.gmra.mxu0 %v3540
      %v3615 = vpop.f32.mrf.mxu0
      %v3616 = vadd.f32 %v3182, %v3615
      %3617 = vmatmul.f32.gmra.mxu0 %v3541
      %v3618 = vpop.f32.mrf.mxu0
      %v3619 = vadd.f32 %v3182, %v3618
      %3620 = vmatmul.f32.gmra.mxu0 %v3542
      %v3621 = vpop.f32.mrf.mxu0
      %v3622 = vadd.f32 %v3182, %v3621
      %3623 = vmatmul.f32.gmra.mxu0 %v3543
      %v3624 = vpop.f32.mrf.mxu0
      %v3625 = vadd.f32 %v3182, %v3624
      %3626 = vmatmul.f32.gmra.mxu0 %v3544
      %v3627 = vpop.f32.mrf.mxu0
      %v3628 = vadd.f32 %v3182, %v3627
      %3629 = vmatmul.f32.gmra.mxu0 %v3545
      %v3630 = vpop.f32.mrf.mxu0
      %v3631 = vadd.f32 %v3182, %v3630
      %3632 = vmatmul.f32.gmra.mxu0 %v3546
      %v3633 = vpop.f32.mrf.mxu0
      %v3634 = vadd.f32 %v3182, %v3633
      %3635 = vdwg.mxu0
      %3636 = vmatpush.msra.mxu0 %v3175
      %3637 = vmatpush.msra.mxu0 %v3174
      %3638 = vmatpush.msra.mxu0 %v3173
      %3639 = vmatpush.msra.mxu0 %v3172
      %3640 = vmatpush.msra.mxu0 %v3171
      %3641 = vmatpush.msra.mxu0 %v3170
      %3642 = vmatpush.msra.mxu0 %v3169
      %3643 = vmatpush.msra.mxu0 %v3168
      %3644 = vmatpush.msra.mxu0 %v3167
      %3645 = vmatpush.msra.mxu0 %v3166
      %3646 = vmatpush.msra.mxu0 %v3165
      %3647 = vmatpush.msra.mxu0 %v3164
      %3648 = vmatpush.msra.mxu0 %v3163
      %3649 = vmatpush.msra.mxu0 %v3162
      %3650 = vmatpush.msra.mxu0 %v3161
      %3651 = vmatpush.msra.mxu0 %v3160
      %3652 = vmatmul.f32.gmra.mxu0 %v3563
      %v3653 = vpop.f32.mrf.mxu0
      %v3654 = vadd.f32 %v3613, %v3653
      %3655 = vmatmul.f32.gmra.mxu0 %v3564
      %v3656 = vpop.f32.mrf.mxu0
      %v3657 = vadd.f32 %v3616, %v3656
      %3658 = vmatmul.f32.gmra.mxu0 %v3565
      %v3659 = vpop.f32.mrf.mxu0
      %v3660 = vadd.f32 %v3619, %v3659
      %3661 = vmatmul.f32.gmra.mxu0 %v3566
      %v3662 = vpop.f32.mrf.mxu0
      %v3663 = vadd.f32 %v3622, %v3662
      %3664 = vmatmul.f32.gmra.mxu0 %v3567
      %v3665 = vpop.f32.mrf.mxu0
      %v3666 = vadd.f32 %v3625, %v3665
      %3667 = vmatmul.f32.gmra.mxu0 %v3568
      %v3668 = vpop.f32.mrf.mxu0
      %v3669 = vadd.f32 %v3628, %v3668
      %3670 = vmatmul.f32.gmra.mxu0 %v3569
      %v3671 = vpop.f32.mrf.mxu0
      %v3672 = vadd.f32 %v3631, %v3671
      %3673 = vmatmul.f32.gmra.mxu0 %v3570
      %v3674 = vpop.f32.mrf.mxu0
      %v3675 = vadd.f32 %v3634, %v3674
      %3676 = vdwg.mxu0
      %3677 = vmatpush.msra.mxu0 0.0
      %3678 = vmatpush.msra.mxu0 0.0
      %3679 = vmatpush.msra.mxu0 0.0
      %3680 = vmatpush.msra.mxu0 0.0
      %3681 = vmatpush.msra.mxu0 0.0
      %3682 = vmatpush.msra.mxu0 0.0
      %3683 = vmatpush.msra.mxu0 0.0
      %3684 = vmatpush.msra.mxu0 0.0
      %3685 = vmatpush.msra.mxu0 0.0
      %3686 = vmatpush.msra.mxu0 0.0
      %3687 = vmatpush.msra.mxu0 0.0
      %3688 = vmatpush.msra.mxu0 0.0
      %3689 = vmatpush.msra.mxu0 %v3179
      %3690 = vmatpush.msra.mxu0 %v3178
      %3691 = vmatpush.msra.mxu0 %v3177
      %3692 = vmatpush.msra.mxu0 %v3176
      %3693 = vmatmul.f32.gmra.mxu0 %v3572
      %v3694 = vpop.f32.mrf.mxu0
      %v3695 = vadd.f32 %v3654, %v3694
      %3696 = vmatmul.f32.gmra.mxu0 %v3575
      %v3697 = vpop.f32.mrf.mxu0
      %v3698 = vadd.f32 %v3657, %v3697
      %3699 = vmatmul.f32.gmra.mxu0 %v3578
      %v3700 = vpop.f32.mrf.mxu0
      %v3701 = vadd.f32 %v3660, %v3700
      %3702 = vmatmul.f32.gmra.mxu0 %v3581
      %v3703 = vpop.f32.mrf.mxu0
      %v3704 = vadd.f32 %v3663, %v3703
      %3705 = vmatmul.f32.gmra.mxu0 %v3584
      %v3706 = vpop.f32.mrf.mxu0
      %v3707 = vadd.f32 %v3666, %v3706
      %3708 = vmatmul.f32.gmra.mxu0 %v3587
      %v3709 = vpop.f32.mrf.mxu0
      %v3710 = vadd.f32 %v3669, %v3709
      %3711 = vmatmul.f32.gmra.mxu0 %v3590
      %v3712 = vpop.f32.mrf.mxu0
      %v3713 = vadd.f32 %v3672, %v3712
      %3714 = vmatmul.f32.gmra.mxu0 %v3593
      %v3715 = vpop.f32.mrf.mxu0
      %v3716 = vadd.f32 %v3675, %v3715
      %3717 = vdwg.mxu0
      %s3718 = scalar_lea.vmem [#allocation3], 192
      %v3719 = vld [vmem:[%s3718] sm:$0xff]
      %v3720 = vld [vmem:[%s3718 + $0x10] sm:$0xff]
      %v3721 = vld [vmem:[%s3718 + $0x20] sm:$0xff]
      %v3722 = vld [vmem:[%s3718 + $0x30] sm:$0xff]
      %v3723 = vld [vmem:[%s3718 + $0x40] sm:$0xff]
      %v3724 = vld [vmem:[%s3718 + $0x50] sm:$0xff]
      %v3725 = vld [vmem:[%s3718 + $0x60] sm:$0xff]
      %v3726 = vld [vmem:[%s3718 + $0x70] sm:$0xff]
      %s3727 = scalar_lea.vmem [#allocation3], 32
      %v3728 = vld [vmem:[%s3727 + $0x1] sm:$0xff]
      %v3729 = vld [vmem:[%s3727 + $0x11] sm:$0xff]
      %v3730 = vld [vmem:[%s3727 + $0x21] sm:$0xff]
      %v3731 = vld [vmem:[%s3727 + $0x31] sm:$0xff]
      %v3732 = vld [vmem:[%s3727 + $0x41] sm:$0xff]
      %v3733 = vld [vmem:[%s3727 + $0x51] sm:$0xff]
      %v3734 = vld [vmem:[%s3727 + $0x61] sm:$0xff]
      %v3735 = vld [vmem:[%s3727 + $0x71] sm:$0xff]
      %v3736 = vld [vmem:[%s3718 + $0x1] sm:$0xff]
      %v3737 = vld [vmem:[%s3718 + $0x11] sm:$0xff]
      %v3738 = vld [vmem:[%s3718 + $0x21] sm:$0xff]
      %v3739 = vld [vmem:[%s3718 + $0x31] sm:$0xff]
      %v3740 = vld [vmem:[%s3718 + $0x41] sm:$0xff]
      %v3741 = vld [vmem:[%s3718 + $0x51] sm:$0xff]
      %v3742 = vld [vmem:[%s3718 + $0x61] sm:$0xff]
      %v3743 = vld [vmem:[%s3718 + $0x71] sm:$0xff]
      %3744 = vrot.lane.b32.xlu0 %v2864, 32
      %v3745 = vpop.permute.xlu0 %3744
      %3746 = vrot.lane.b32.xlu0 %v2865, 32
      %v3747 = vpop.permute.xlu0 %3746
      %3748 = vrot.lane.b32.xlu0 %v2866, 32
      %v3749 = vpop.permute.xlu0 %3748
      %3750 = vrot.lane.b32.xlu0 %v2867, 32
      %v3751 = vpop.permute.xlu0 %3750
      %3752 = vrot.lane.b32.xlu0 %v2868, 32
      %v3753 = vpop.permute.xlu0 %3752
      %3754 = vrot.lane.b32.xlu0 %v2869, 32
      %v3755 = vpop.permute.xlu0 %3754
      %3756 = vrot.lane.b32.xlu0 %v2870, 32
      %v3757 = vpop.permute.xlu0 %3756
      %3758 = vrot.lane.b32.xlu0 %v2871, 32
      %v3759 = vpop.permute.xlu0 %3758
      %3768 = vrot.lane.b32.xlu0 %v2872, 64
      %v3769 = vpop.permute.xlu0 %3768
      %3770 = vrot.lane.b32.xlu0 %v2873, 64
      %v3771 = vpop.permute.xlu0 %3770
      %3772 = vrot.lane.b32.xlu0 %v2874, 64
      %v3773 = vpop.permute.xlu0 %3772
      %3774 = vrot.lane.b32.xlu0 %v2875, 64
      %v3775 = vpop.permute.xlu0 %3774
      %3776 = vrot.lane.b32.xlu0 %v2876, 64
      %v3777 = vpop.permute.xlu0 %3776
      %3778 = vrot.lane.b32.xlu0 %v2877, 64
      %v3779 = vpop.permute.xlu0 %3778
      %3780 = vrot.lane.b32.xlu0 %v2878, 64
      %v3781 = vpop.permute.xlu0 %3780
      %3782 = vrot.lane.b32.xlu0 %v2879, 64
      %v3783 = vpop.permute.xlu0 %3782
      %3792 = vrot.lane.b32.xlu0 %v2880, 96
      %v3793 = vpop.permute.xlu0 %3792
      %3794 = vrot.lane.b32.xlu0 %v2881, 96
      %v3795 = vpop.permute.xlu0 %3794
      %3796 = vrot.lane.b32.xlu0 %v2882, 96
      %v3797 = vpop.permute.xlu0 %3796
      %3798 = vrot.lane.b32.xlu0 %v2883, 96
      %v3799 = vpop.permute.xlu0 %3798
      %3800 = vrot.lane.b32.xlu0 %v2884, 96
      %v3801 = vpop.permute.xlu0 %3800
      %3802 = vrot.lane.b32.xlu0 %v2885, 96
      %v3803 = vpop.permute.xlu0 %3802
      %3804 = vrot.lane.b32.xlu0 %v2886, 96
      %v3805 = vpop.permute.xlu0 %3804
      %3806 = vrot.lane.b32.xlu0 %v2887, 96
      %v3807 = vpop.permute.xlu0 %3806
      %3816 = vrot.lane.b32.xlu0 %v2896, 32
      %v3817 = vpop.permute.xlu0 %3816
      %3818 = vrot.lane.b32.xlu0 %v2897, 32
      %v3819 = vpop.permute.xlu0 %3818
      %3820 = vrot.lane.b32.xlu0 %v2898, 32
      %v3821 = vpop.permute.xlu0 %3820
      %3822 = vrot.lane.b32.xlu0 %v2899, 32
      %v3823 = vpop.permute.xlu0 %3822
      %3824 = vrot.lane.b32.xlu0 %v2900, 32
      %v3825 = vpop.permute.xlu0 %3824
      %3826 = vrot.lane.b32.xlu0 %v2901, 32
      %v3827 = vpop.permute.xlu0 %3826
      %3828 = vrot.lane.b32.xlu0 %v2902, 32
      %v3829 = vpop.permute.xlu0 %3828
      %3830 = vrot.lane.b32.xlu0 %v2903, 32
      %v3831 = vpop.permute.xlu0 %3830
      %3848 = vrot.lane.b32.xlu0 %v3719, 64
      %v3849 = vpop.permute.xlu0 %3848
      %3850 = vrot.lane.b32.xlu0 %v3720, 64
      %v3851 = vpop.permute.xlu0 %3850
      %3852 = vrot.lane.b32.xlu0 %v3721, 64
      %v3853 = vpop.permute.xlu0 %3852
      %3854 = vrot.lane.b32.xlu0 %v3722, 64
      %v3855 = vpop.permute.xlu0 %3854
      %3856 = vrot.lane.b32.xlu0 %v3723, 64
      %v3857 = vpop.permute.xlu0 %3856
      %3858 = vrot.lane.b32.xlu0 %v3724, 64
      %v3859 = vpop.permute.xlu0 %3858
      %3860 = vrot.lane.b32.xlu0 %v3725, 64
      %v3861 = vpop.permute.xlu0 %3860
      %3862 = vrot.lane.b32.xlu0 %v3726, 64
      %v3863 = vpop.permute.xlu0 %3862
      %3880 = vrot.lane.b32.xlu0 %v3728, 96
      %v3881 = vpop.permute.xlu0 %3880
      %3882 = vrot.lane.b32.xlu0 %v3729, 96
      %v3883 = vpop.permute.xlu0 %3882
      %3884 = vrot.lane.b32.xlu0 %v3730, 96
      %v3885 = vpop.permute.xlu0 %3884
      %3886 = vrot.lane.b32.xlu0 %v3731, 96
      %v3887 = vpop.permute.xlu0 %3886
      %3888 = vrot.lane.b32.xlu0 %v3732, 96
      %v3889 = vpop.permute.xlu0 %3888
      %3890 = vrot.lane.b32.xlu0 %v3733, 96
      %v3891 = vpop.permute.xlu0 %3890
      %3892 = vrot.lane.b32.xlu0 %v3734, 96
      %v3893 = vpop.permute.xlu0 %3892
      %3894 = vrot.lane.b32.xlu0 %v3735, 96
      %v3895 = vpop.permute.xlu0 %3894
      %v3904 = vsel %vm441, %v2856, %v3745
      %v3905 = vsel %vm441, %v2857, %v3747
      %v3906 = vsel %vm441, %v2858, %v3749
      %v3907 = vsel %vm441, %v2859, %v3751
      %v3908 = vsel %vm441, %v2860, %v3753
      %v3909 = vsel %vm441, %v2861, %v3755
      %v3910 = vsel %vm441, %v2862, %v3757
      %v3911 = vsel %vm441, %v2863, %v3759
      %v3912 = vsel %vm833, %v3904, %v3769
      %v3913 = vsel %vm833, %v3905, %v3771
      %v3914 = vsel %vm833, %v3906, %v3773
      %v3915 = vsel %vm833, %v3907, %v3775
      %v3916 = vsel %vm833, %v3908, %v3777
      %v3917 = vsel %vm833, %v3909, %v3779
      %v3918 = vsel %vm833, %v3910, %v3781
      %v3919 = vsel %vm833, %v3911, %v3783
      %v3920 = vsel %vm842, %v3912, %v3793
      %v3921 = vsel %vm842, %v3913, %v3795
      %v3922 = vsel %vm842, %v3914, %v3797
      %v3923 = vsel %vm842, %v3915, %v3799
      %v3924 = vsel %vm842, %v3916, %v3801
      %v3925 = vsel %vm842, %v3917, %v3803
      %v3926 = vsel %vm842, %v3918, %v3805
      %v3927 = vsel %vm842, %v3919, %v3807
      %v3928 = vsel %vm441, %v2888, %v3817
      %v3929 = vsel %vm441, %v2889, %v3819
      %v3930 = vsel %vm441, %v2890, %v3821
      %v3931 = vsel %vm441, %v2891, %v3823
      %v3932 = vsel %vm441, %v2892, %v3825
      %v3933 = vsel %vm441, %v2893, %v3827
      %v3934 = vsel %vm441, %v2894, %v3829
      %v3935 = vsel %vm441, %v2895, %v3831
      %v3936 = vsel %vm833, %v3928, %v3849
      %v3937 = vsel %vm833, %v3929, %v3851
      %v3938 = vsel %vm833, %v3930, %v3853
      %v3939 = vsel %vm833, %v3931, %v3855
      %v3940 = vsel %vm833, %v3932, %v3857
      %v3941 = vsel %vm833, %v3933, %v3859
      %v3942 = vsel %vm833, %v3934, %v3861
      %v3943 = vsel %vm833, %v3935, %v3863
      %v3944 = vsel %vm842, %v3936, %v3881
      %v3945 = vsel %vm842, %v3937, %v3883
      %v3946 = vsel %vm842, %v3938, %v3885
      %v3947 = vsel %vm842, %v3939, %v3887
      %v3948 = vsel %vm842, %v3940, %v3889
      %v3949 = vsel %vm842, %v3941, %v3891
      %v3950 = vsel %vm842, %v3942, %v3893
      %v3951 = vsel %vm842, %v3943, %v3895
      %v3953 = vsel %vm441, %v3736, 0
      %v3956 = vsel %vm441, %v3737, 0
      %v3959 = vsel %vm441, %v3738, 0
      %v3962 = vsel %vm441, %v3739, 0
      %v3965 = vsel %vm441, %v3740, 0
      %v3968 = vsel %vm441, %v3741, 0
      %v3971 = vsel %vm441, %v3742, 0
      %v3974 = vsel %vm441, %v3743, 0
      %3976 = vmatpush.msra.mxu0 %v3159
      %3977 = vmatpush.msra.mxu0 %v3158
      %3978 = vmatpush.msra.mxu0 %v3157
      %3979 = vmatpush.msra.mxu0 %v3156
      %3980 = vmatpush.msra.mxu0 %v3155
      %3981 = vmatpush.msra.mxu0 %v3154
      %3982 = vmatpush.msra.mxu0 %v3153
      %3983 = vmatpush.msra.mxu0 %v3152
      %3984 = vmatpush.msra.mxu0 %v3151
      %3985 = vmatpush.msra.mxu0 %v3150
      %3986 = vmatpush.msra.mxu0 %v3149
      %3987 = vmatpush.msra.mxu0 %v3148
      %3988 = vmatpush.msra.mxu0 %v3147
      %3989 = vmatpush.msra.mxu0 %v3146
      %3990 = vmatpush.msra.mxu0 %v3145
      %3991 = vmatpush.msra.mxu0 %v3144
      %3992 = vmatmul.f32.gmra.mxu0 %v3920
      %v3993 = vpop.f32.mrf.mxu0
      %v3994 = vadd.f32 %v3182, %v3993
      %3995 = vmatmul.f32.gmra.mxu0 %v3921
      %v3996 = vpop.f32.mrf.mxu0
      %v3997 = vadd.f32 %v3182, %v3996
      %3998 = vmatmul.f32.gmra.mxu0 %v3922
      %v3999 = vpop.f32.mrf.mxu0
      %v4000 = vadd.f32 %v3182, %v3999
      %4001 = vmatmul.f32.gmra.mxu0 %v3923
      %v4002 = vpop.f32.mrf.mxu0
      %v4003 = vadd.f32 %v3182, %v4002
      %4004 = vmatmul.f32.gmra.mxu0 %v3924
      %v4005 = vpop.f32.mrf.mxu0
      %v4006 = vadd.f32 %v3182, %v4005
      %4007 = vmatmul.f32.gmra.mxu0 %v3925
      %v4008 = vpop.f32.mrf.mxu0
      %v4009 = vadd.f32 %v3182, %v4008
      %4010 = vmatmul.f32.gmra.mxu0 %v3926
      %v4011 = vpop.f32.mrf.mxu0
      %v4012 = vadd.f32 %v3182, %v4011
      %4013 = vmatmul.f32.gmra.mxu0 %v3927
      %v4014 = vpop.f32.mrf.mxu0
      %v4015 = vadd.f32 %v3182, %v4014
      %4016 = vdwg.mxu0
      %4017 = vmatpush.msra.mxu0 %v3175
      %4018 = vmatpush.msra.mxu0 %v3174
      %4019 = vmatpush.msra.mxu0 %v3173
      %4020 = vmatpush.msra.mxu0 %v3172
      %4021 = vmatpush.msra.mxu0 %v3171
      %4022 = vmatpush.msra.mxu0 %v3170
      %4023 = vmatpush.msra.mxu0 %v3169
      %4024 = vmatpush.msra.mxu0 %v3168
      %4025 = vmatpush.msra.mxu0 %v3167
      %4026 = vmatpush.msra.mxu0 %v3166
      %4027 = vmatpush.msra.mxu0 %v3165
      %4028 = vmatpush.msra.mxu0 %v3164
      %4029 = vmatpush.msra.mxu0 %v3163
      %4030 = vmatpush.msra.mxu0 %v3162
      %4031 = vmatpush.msra.mxu0 %v3161
      %4032 = vmatpush.msra.mxu0 %v3160
      %4033 = vmatmul.f32.gmra.mxu0 %v3944
      %v4034 = vpop.f32.mrf.mxu0
      %v4035 = vadd.f32 %v3994, %v4034
      %4036 = vmatmul.f32.gmra.mxu0 %v3945
      %v4037 = vpop.f32.mrf.mxu0
      %v4038 = vadd.f32 %v3997, %v4037
      %4039 = vmatmul.f32.gmra.mxu0 %v3946
      %v4040 = vpop.f32.mrf.mxu0
      %v4041 = vadd.f32 %v4000, %v4040
      %4042 = vmatmul.f32.gmra.mxu0 %v3947
      %v4043 = vpop.f32.mrf.mxu0
      %v4044 = vadd.f32 %v4003, %v4043
      %4045 = vmatmul.f32.gmra.mxu0 %v3948
      %v4046 = vpop.f32.mrf.mxu0
      %v4047 = vadd.f32 %v4006, %v4046
      %4048 = vmatmul.f32.gmra.mxu0 %v3949
      %v4049 = vpop.f32.mrf.mxu0
      %v4050 = vadd.f32 %v4009, %v4049
      %4051 = vmatmul.f32.gmra.mxu0 %v3950
      %v4052 = vpop.f32.mrf.mxu0
      %v4053 = vadd.f32 %v4012, %v4052
      %4054 = vmatmul.f32.gmra.mxu0 %v3951
      %v4055 = vpop.f32.mrf.mxu0
      %v4056 = vadd.f32 %v4015, %v4055
      %4057 = vdwg.mxu0
      %4058 = vmatpush.msra.mxu0 0.0
      %4059 = vmatpush.msra.mxu0 0.0
      %4060 = vmatpush.msra.mxu0 0.0
      %4061 = vmatpush.msra.mxu0 0.0
      %4062 = vmatpush.msra.mxu0 0.0
      %4063 = vmatpush.msra.mxu0 0.0
      %4064 = vmatpush.msra.mxu0 0.0
      %4065 = vmatpush.msra.mxu0 0.0
      %4066 = vmatpush.msra.mxu0 0.0
      %4067 = vmatpush.msra.mxu0 0.0
      %4068 = vmatpush.msra.mxu0 0.0
      %4069 = vmatpush.msra.mxu0 0.0
      %4070 = vmatpush.msra.mxu0 %v3179
      %4071 = vmatpush.msra.mxu0 %v3178
      %4072 = vmatpush.msra.mxu0 %v3177
      %4073 = vmatpush.msra.mxu0 %v3176
      %4074 = vmatmul.f32.gmra.mxu0 %v3953
      %v4075 = vpop.f32.mrf.mxu0
      %v4076 = vadd.f32 %v4035, %v4075
      %4077 = vmatmul.f32.gmra.mxu0 %v3956
      %v4078 = vpop.f32.mrf.mxu0
      %v4079 = vadd.f32 %v4038, %v4078
      %4080 = vmatmul.f32.gmra.mxu0 %v3959
      %v4081 = vpop.f32.mrf.mxu0
      %v4082 = vadd.f32 %v4041, %v4081
      %4083 = vmatmul.f32.gmra.mxu0 %v3962
      %v4084 = vpop.f32.mrf.mxu0
      %v4085 = vadd.f32 %v4044, %v4084
      %4086 = vmatmul.f32.gmra.mxu0 %v3965
      %v4087 = vpop.f32.mrf.mxu0
      %v4088 = vadd.f32 %v4047, %v4087
      %4089 = vmatmul.f32.gmra.mxu0 %v3968
      %v4090 = vpop.f32.mrf.mxu0
      %v4091 = vadd.f32 %v4050, %v4090
      %4092 = vmatmul.f32.gmra.mxu0 %v3971
      %v4093 = vpop.f32.mrf.mxu0
      %v4094 = vadd.f32 %v4053, %v4093
      %4095 = vmatmul.f32.gmra.mxu0 %v3974
      %v4096 = vpop.f32.mrf.mxu0
      %v4097 = vadd.f32 %v4056, %v4096
      %4098 = vdwg.mxu0
      %v4099 = vld [vmem:[%s3727 + $0x2] sm:$0xff]
      %v4100 = vld [vmem:[%s3727 + $0x12] sm:$0xff]
      %v4101 = vld [vmem:[%s3727 + $0x22] sm:$0xff]
      %v4102 = vld [vmem:[%s3727 + $0x32] sm:$0xff]
      %v4103 = vld [vmem:[%s3727 + $0x42] sm:$0xff]
      %v4104 = vld [vmem:[%s3727 + $0x52] sm:$0xff]
      %v4105 = vld [vmem:[%s3727 + $0x62] sm:$0xff]
      %v4106 = vld [vmem:[%s3727 + $0x72] sm:$0xff]
      %4107 = vrot.lane.b32.xlu0 %v3339, 64
      %v4108 = vpop.permute.xlu0 %4107
      %4109 = vrot.lane.b32.xlu0 %v3340, 64
      %v4110 = vpop.permute.xlu0 %4109
      %4111 = vrot.lane.b32.xlu0 %v3341, 64
      %v4112 = vpop.permute.xlu0 %4111
      %4113 = vrot.lane.b32.xlu0 %v3342, 64
      %v4114 = vpop.permute.xlu0 %4113
      %4115 = vrot.lane.b32.xlu0 %v3343, 64
      %v4116 = vpop.permute.xlu0 %4115
      %4117 = vrot.lane.b32.xlu0 %v3344, 64
      %v4118 = vpop.permute.xlu0 %4117
      %4119 = vrot.lane.b32.xlu0 %v3345, 64
      %v4120 = vpop.permute.xlu0 %4119
      %4121 = vrot.lane.b32.xlu0 %v3346, 64
      %v4122 = vpop.permute.xlu0 %4121
      %4131 = vrot.lane.b32.xlu0 %v3347, 32
      %v4132 = vpop.permute.xlu0 %4131
      %4133 = vrot.lane.b32.xlu0 %v3348, 32
      %v4134 = vpop.permute.xlu0 %4133
      %4135 = vrot.lane.b32.xlu0 %v3349, 32
      %v4136 = vpop.permute.xlu0 %4135
      %4137 = vrot.lane.b32.xlu0 %v3350, 32
      %v4138 = vpop.permute.xlu0 %4137
      %4139 = vrot.lane.b32.xlu0 %v3351, 32
      %v4140 = vpop.permute.xlu0 %4139
      %4141 = vrot.lane.b32.xlu0 %v3352, 32
      %v4142 = vpop.permute.xlu0 %4141
      %4143 = vrot.lane.b32.xlu0 %v3353, 32
      %v4144 = vpop.permute.xlu0 %4143
      %4145 = vrot.lane.b32.xlu0 %v3354, 32
      %v4146 = vpop.permute.xlu0 %4145
      %4155 = vrot.lane.b32.xlu0 %v3728, 64
      %v4156 = vpop.permute.xlu0 %4155
      %4157 = vrot.lane.b32.xlu0 %v3729, 64
      %v4158 = vpop.permute.xlu0 %4157
      %4159 = vrot.lane.b32.xlu0 %v3730, 64
      %v4160 = vpop.permute.xlu0 %4159
      %4161 = vrot.lane.b32.xlu0 %v3731, 64
      %v4162 = vpop.permute.xlu0 %4161
      %4163 = vrot.lane.b32.xlu0 %v3732, 64
      %v4164 = vpop.permute.xlu0 %4163
      %4165 = vrot.lane.b32.xlu0 %v3733, 64
      %v4166 = vpop.permute.xlu0 %4165
      %4167 = vrot.lane.b32.xlu0 %v3734, 64
      %v4168 = vpop.permute.xlu0 %4167
      %4169 = vrot.lane.b32.xlu0 %v3735, 64
      %v4170 = vpop.permute.xlu0 %4169
      %4179 = vrot.lane.b32.xlu0 %v3736, 96
      %v4180 = vpop.permute.xlu0 %4179
      %4181 = vrot.lane.b32.xlu0 %v3737, 96
      %v4182 = vpop.permute.xlu0 %4181
      %4183 = vrot.lane.b32.xlu0 %v3738, 96
      %v4184 = vpop.permute.xlu0 %4183
      %4185 = vrot.lane.b32.xlu0 %v3739, 96
      %v4186 = vpop.permute.xlu0 %4185
      %4187 = vrot.lane.b32.xlu0 %v3740, 96
      %v4188 = vpop.permute.xlu0 %4187
      %4189 = vrot.lane.b32.xlu0 %v3741, 96
      %v4190 = vpop.permute.xlu0 %4189
      %4191 = vrot.lane.b32.xlu0 %v3742, 96
      %v4192 = vpop.permute.xlu0 %4191
      %4193 = vrot.lane.b32.xlu0 %v3743, 96
      %v4194 = vpop.permute.xlu0 %4193
      %v4203 = vsel %vm833, %v3120, %v4108
      %v4204 = vsel %vm833, %v3121, %v4110
      %v4205 = vsel %vm833, %v3122, %v4112
      %v4206 = vsel %vm833, %v3123, %v4114
      %v4207 = vsel %vm833, %v3124, %v4116
      %v4208 = vsel %vm833, %v3125, %v4118
      %v4209 = vsel %vm833, %v3126, %v4120
      %v4210 = vsel %vm833, %v3127, %v4122
      %v4211 = vsel %vm842, %v4203, %v3073
      %v4212 = vsel %vm842, %v4204, %v3075
      %v4213 = vsel %vm842, %v4205, %v3077
      %v4214 = vsel %vm842, %v4206, %v3079
      %v4215 = vsel %vm842, %v4207, %v3081
      %v4216 = vsel %vm842, %v4208, %v3083
      %v4217 = vsel %vm842, %v4209, %v3085
      %v4218 = vsel %vm842, %v4210, %v3087
      %v4219 = vsel %vm441, %v2896, %v4132
      %v4220 = vsel %vm441, %v2897, %v4134
      %v4221 = vsel %vm441, %v2898, %v4136
      %v4222 = vsel %vm441, %v2899, %v4138
      %v4223 = vsel %vm441, %v2900, %v4140
      %v4224 = vsel %vm441, %v2901, %v4142
      %v4225 = vsel %vm441, %v2902, %v4144
      %v4226 = vsel %vm441, %v2903, %v4146
      %v4227 = vsel %vm833, %v4219, %v4156
      %v4228 = vsel %vm833, %v4220, %v4158
      %v4229 = vsel %vm833, %v4221, %v4160
      %v4230 = vsel %vm833, %v4222, %v4162
      %v4231 = vsel %vm833, %v4223, %v4164
      %v4232 = vsel %vm833, %v4224, %v4166
      %v4233 = vsel %vm833, %v4225, %v4168
      %v4234 = vsel %vm833, %v4226, %v4170
      %v4235 = vsel %vm842, %v4227, %v4180
      %v4236 = vsel %vm842, %v4228, %v4182
      %v4237 = vsel %vm842, %v4229, %v4184
      %v4238 = vsel %vm842, %v4230, %v4186
      %v4239 = vsel %vm842, %v4231, %v4188
      %v4240 = vsel %vm842, %v4232, %v4190
      %v4241 = vsel %vm842, %v4233, %v4192
      %v4242 = vsel %vm842, %v4234, %v4194
      %v4244 = vsel %vm441, %v4099, 0
      %v4247 = vsel %vm441, %v4100, 0
      %v4250 = vsel %vm441, %v4101, 0
      %v4253 = vsel %vm441, %v4102, 0
      %v4256 = vsel %vm441, %v4103, 0
      %v4259 = vsel %vm441, %v4104, 0
      %v4262 = vsel %vm441, %v4105, 0
      %v4265 = vsel %vm441, %v4106, 0
      %4267 = vmatpush.msra.mxu0 %v3159
      %4268 = vmatpush.msra.mxu0 %v3158
      %4269 = vmatpush.msra.mxu0 %v3157
      %4270 = vmatpush.msra.mxu0 %v3156
      %4271 = vmatpush.msra.mxu0 %v3155
      %4272 = vmatpush.msra.mxu0 %v3154
      %4273 = vmatpush.msra.mxu0 %v3153
      %4274 = vmatpush.msra.mxu0 %v3152
      %4275 = vmatpush.msra.mxu0 %v3151
      %4276 = vmatpush.msra.mxu0 %v3150
      %4277 = vmatpush.msra.mxu0 %v3149
      %4278 = vmatpush.msra.mxu0 %v3148
      %4279 = vmatpush.msra.mxu0 %v3147
      %4280 = vmatpush.msra.mxu0 %v3146
      %4281 = vmatpush.msra.mxu0 %v3145
      %4282 = vmatpush.msra.mxu0 %v3144
      %4283 = vmatmul.f32.gmra.mxu0 %v4211
      %v4284 = vpop.f32.mrf.mxu0
      %v4285 = vadd.f32 %v3182, %v4284
      %4286 = vmatmul.f32.gmra.mxu0 %v4212
      %v4287 = vpop.f32.mrf.mxu0
      %v4288 = vadd.f32 %v3182, %v4287
      %4289 = vmatmul.f32.gmra.mxu0 %v4213
      %v4290 = vpop.f32.mrf.mxu0
      %v4291 = vadd.f32 %v3182, %v4290
      %4292 = vmatmul.f32.gmra.mxu0 %v4214
      %v4293 = vpop.f32.mrf.mxu0
      %v4294 = vadd.f32 %v3182, %v4293
      %4295 = vmatmul.f32.gmra.mxu0 %v4215
      %v4296 = vpop.f32.mrf.mxu0
      %v4297 = vadd.f32 %v3182, %v4296
      %4298 = vmatmul.f32.gmra.mxu0 %v4216
      %v4299 = vpop.f32.mrf.mxu0
      %v4300 = vadd.f32 %v3182, %v4299
      %4301 = vmatmul.f32.gmra.mxu0 %v4217
      %v4302 = vpop.f32.mrf.mxu0
      %v4303 = vadd.f32 %v3182, %v4302
      %4304 = vmatmul.f32.gmra.mxu0 %v4218
      %v4305 = vpop.f32.mrf.mxu0
      %v4306 = vadd.f32 %v3182, %v4305
      %4307 = vdwg.mxu0
      %4308 = vmatpush.msra.mxu0 %v3175
      %4309 = vmatpush.msra.mxu0 %v3174
      %4310 = vmatpush.msra.mxu0 %v3173
      %4311 = vmatpush.msra.mxu0 %v3172
      %4312 = vmatpush.msra.mxu0 %v3171
      %4313 = vmatpush.msra.mxu0 %v3170
      %4314 = vmatpush.msra.mxu0 %v3169
      %4315 = vmatpush.msra.mxu0 %v3168
      %4316 = vmatpush.msra.mxu0 %v3167
      %4317 = vmatpush.msra.mxu0 %v3166
      %4318 = vmatpush.msra.mxu0 %v3165
      %4319 = vmatpush.msra.mxu0 %v3164
      %4320 = vmatpush.msra.mxu0 %v3163
      %4321 = vmatpush.msra.mxu0 %v3162
      %4322 = vmatpush.msra.mxu0 %v3161
      %4323 = vmatpush.msra.mxu0 %v3160
      %4324 = vmatmul.f32.gmra.mxu0 %v4235
      %v4325 = vpop.f32.mrf.mxu0
      %v4326 = vadd.f32 %v4285, %v4325
      %4327 = vmatmul.f32.gmra.mxu0 %v4236
      %v4328 = vpop.f32.mrf.mxu0
      %v4329 = vadd.f32 %v4288, %v4328
      %4330 = vmatmul.f32.gmra.mxu0 %v4237
      %v4331 = vpop.f32.mrf.mxu0
      %v4332 = vadd.f32 %v4291, %v4331
      %4333 = vmatmul.f32.gmra.mxu0 %v4238
      %v4334 = vpop.f32.mrf.mxu0
      %v4335 = vadd.f32 %v4294, %v4334
      %4336 = vmatmul.f32.gmra.mxu0 %v4239
      %v4337 = vpop.f32.mrf.mxu0
      %v4338 = vadd.f32 %v4297, %v4337
      %4339 = vmatmul.f32.gmra.mxu0 %v4240
      %v4340 = vpop.f32.mrf.mxu0
      %v4341 = vadd.f32 %v4300, %v4340
      %4342 = vmatmul.f32.gmra.mxu0 %v4241
      %v4343 = vpop.f32.mrf.mxu0
      %v4344 = vadd.f32 %v4303, %v4343
      %4345 = vmatmul.f32.gmra.mxu0 %v4242
      %v4346 = vpop.f32.mrf.mxu0
      %v4347 = vadd.f32 %v4306, %v4346
      %4348 = vdwg.mxu0
      %4349 = vmatpush.msra.mxu0 0.0
      %4350 = vmatpush.msra.mxu0 0.0
      %4351 = vmatpush.msra.mxu0 0.0
      %4352 = vmatpush.msra.mxu0 0.0
      %4353 = vmatpush.msra.mxu0 0.0
      %4354 = vmatpush.msra.mxu0 0.0
      %4355 = vmatpush.msra.mxu0 0.0
      %4356 = vmatpush.msra.mxu0 0.0
      %4357 = vmatpush.msra.mxu0 0.0
      %4358 = vmatpush.msra.mxu0 0.0
      %4359 = vmatpush.msra.mxu0 0.0
      %4360 = vmatpush.msra.mxu0 0.0
      %4361 = vmatpush.msra.mxu0 %v3179
      %4362 = vmatpush.msra.mxu0 %v3178
      %4363 = vmatpush.msra.mxu0 %v3177
      %4364 = vmatpush.msra.mxu0 %v3176
      %4365 = vmatmul.f32.gmra.mxu0 %v4244
      %v4366 = vpop.f32.mrf.mxu0
      %v4367 = vadd.f32 %v4326, %v4366
      %4368 = vmatmul.f32.gmra.mxu0 %v4247
      %v4369 = vpop.f32.mrf.mxu0
      %v4370 = vadd.f32 %v4329, %v4369
      %4371 = vmatmul.f32.gmra.mxu0 %v4250
      %v4372 = vpop.f32.mrf.mxu0
      %v4373 = vadd.f32 %v4332, %v4372
      %4374 = vmatmul.f32.gmra.mxu0 %v4253
      %v4375 = vpop.f32.mrf.mxu0
      %v4376 = vadd.f32 %v4335, %v4375
      %4377 = vmatmul.f32.gmra.mxu0 %v4256
      %v4378 = vpop.f32.mrf.mxu0
      %v4379 = vadd.f32 %v4338, %v4378
      %4380 = vmatmul.f32.gmra.mxu0 %v4259
      %v4381 = vpop.f32.mrf.mxu0
      %v4382 = vadd.f32 %v4341, %v4381
      %4383 = vmatmul.f32.gmra.mxu0 %v4262
      %v4384 = vpop.f32.mrf.mxu0
      %v4385 = vadd.f32 %v4344, %v4384
      %4386 = vmatmul.f32.gmra.mxu0 %v4265
      %v4387 = vpop.f32.mrf.mxu0
      %v4388 = vadd.f32 %v4347, %v4387
      %4389 = vdwg.mxu0
      %4398 = vrot.lane.b32.xlu0 %v3695, 16
      %v4399 = vpop.permute.xlu0 %4398
      %4400 = vrot.lane.b32.xlu0 %v3698, 16
      %v4401 = vpop.permute.xlu0 %4400
      %4402 = vrot.lane.b32.xlu0 %v3701, 16
      %v4403 = vpop.permute.xlu0 %4402
      %4404 = vrot.lane.b32.xlu0 %v3704, 16
      %v4405 = vpop.permute.xlu0 %4404
      %4406 = vrot.lane.b32.xlu0 %v3707, 16
      %v4407 = vpop.permute.xlu0 %4406
      %4408 = vrot.lane.b32.xlu0 %v3710, 16
      %v4409 = vpop.permute.xlu0 %4408
      %4410 = vrot.lane.b32.xlu0 %v3713, 16
      %v4411 = vpop.permute.xlu0 %4410
      %4412 = vrot.lane.b32.xlu0 %v3716, 16
      %v4413 = vpop.permute.xlu0 %4412
      %4430 = vrot.lane.b32.xlu0 %v4076, 32
      %v4431 = vpop.permute.xlu0 %4430
      %4432 = vrot.lane.b32.xlu0 %v4079, 32
      %v4433 = vpop.permute.xlu0 %4432
      %4434 = vrot.lane.b32.xlu0 %v4082, 32
      %v4435 = vpop.permute.xlu0 %4434
      %4436 = vrot.lane.b32.xlu0 %v4085, 32
      %v4437 = vpop.permute.xlu0 %4436
      %4438 = vrot.lane.b32.xlu0 %v4088, 32
      %v4439 = vpop.permute.xlu0 %4438
      %4440 = vrot.lane.b32.xlu0 %v4091, 32
      %v4441 = vpop.permute.xlu0 %4440
      %4442 = vrot.lane.b32.xlu0 %v4094, 32
      %v4443 = vpop.permute.xlu0 %4442
      %4444 = vrot.lane.b32.xlu0 %v4097, 32
      %v4445 = vpop.permute.xlu0 %4444
      %4462 = vrot.lane.b32.xlu0 %v4367, 48
      %v4463 = vpop.permute.xlu0 %4462
      %4464 = vrot.lane.b32.xlu0 %v4370, 48
      %v4465 = vpop.permute.xlu0 %4464
      %4466 = vrot.lane.b32.xlu0 %v4373, 48
      %v4467 = vpop.permute.xlu0 %4466
      %4468 = vrot.lane.b32.xlu0 %v4376, 48
      %v4469 = vpop.permute.xlu0 %4468
      %4470 = vrot.lane.b32.xlu0 %v4379, 48
      %v4471 = vpop.permute.xlu0 %4470
      %4472 = vrot.lane.b32.xlu0 %v4382, 48
      %v4473 = vpop.permute.xlu0 %4472
      %4474 = vrot.lane.b32.xlu0 %v4385, 48
      %v4475 = vpop.permute.xlu0 %4474
      %4476 = vrot.lane.b32.xlu0 %v4388, 48
      %v4477 = vpop.permute.xlu0 %4476
      %vm4486 = vcmask 130048
      %v4487 = vsel %vm4486, %v3308, %v4399
      %v4488 = vsel %vm4486, %v3311, %v4401
      %v4489 = vsel %vm4486, %v3314, %v4403
      %v4490 = vsel %vm4486, %v3317, %v4405
      %v4491 = vsel %vm4486, %v3320, %v4407
      %v4492 = vsel %vm4486, %v3323, %v4409
      %v4493 = vsel %vm4486, %v3326, %v4411
      %v4494 = vsel %vm4486, %v3329, %v4413
      %v4495 = vsel %vm441, %v4487, %v4431
      %v4496 = vsel %vm441, %v4488, %v4433
      %v4497 = vsel %vm441, %v4489, %v4435
      %v4498 = vsel %vm441, %v4490, %v4437
      %v4499 = vsel %vm441, %v4491, %v4439
      %v4500 = vsel %vm441, %v4492, %v4441
      %v4501 = vsel %vm441, %v4493, %v4443
      %v4502 = vsel %vm441, %v4494, %v4445
      %vm4503 = vcmask 392192
      %v4504 = vsel %vm4503, %v4495, %v4463
      %v4505 = vsel %vm4503, %v4496, %v4465
      %v4506 = vsel %vm4503, %v4497, %v4467
      %v4507 = vsel %vm4503, %v4498, %v4469
      %v4508 = vsel %vm4503, %v4499, %v4471
      %v4509 = vsel %vm4503, %v4500, %v4473
      %v4510 = vsel %vm4503, %v4501, %v4475
      %v4511 = vsel %vm4503, %v4502, %v4477
      %4512 = vst.msk [vmem:[%s440] sm:$0xff] %vm833, %v4504
      %4513 = vst.msk [vmem:[%s440 + $0x8] sm:$0xff] %vm833, %v4505
      %4514 = vst.msk [vmem:[%s440 + $0x10] sm:$0xff] %vm833, %v4506
      %4515 = vst.msk [vmem:[%s440 + $0x18] sm:$0xff] %vm833, %v4507
      %4516 = vst.msk [vmem:[%s440 + $0x20] sm:$0xff] %vm833, %v4508
      %4517 = vst.msk [vmem:[%s440 + $0x28] sm:$0xff] %vm833, %v4509
      %4518 = vst.msk [vmem:[%s440 + $0x30] sm:$0xff] %vm833, %v4510
      %4519 = vst.msk [vmem:[%s440 + $0x38] sm:$0xff] %vm833, %v4511
      %p4520 = scmp.lt.s32.totalorder %s24, 1
      %s4521 = scalar_select %p4520, %s24, 1
      %s4522 = smul.addr %s4521, 8
      %s4523 = smul.addr %s4522, 8
      %s4524 = scalar_lea.vmem %s13, %s4523
      // Predicated region
      $region73: #{decoder_forward.1} parent=71 // pred_check
        %p4525 = pneg %p320
      $region74: #{decoder_forward.1} parent=71 // pred_check_branch
        %4527 = sbr.rel (%p4525) target = $region76
      $region75: #{decoder_forward.1} parent=71 // pred_region
        _
      $region76: #{decoder_forward.1} parent=71 // pred_fallthru
        _
    $region72: #{decoder_forward.1} parent=5 // pred_fallthru
      _
    %p4528 = scmp.le.s32.totalorder 2, %s19
    // Predicated region
    $region77: #{decoder_forward.1} parent=5 // pred_check
      %p4529 = pneg %p4528
    $region78: #{decoder_forward.1} parent=5 // pred_check_branch
      %4531 = sbr.rel (%p4529) target = $region80
    $region79: #{decoder_forward.1} parent=5 // pred_region
      %s4532 = ssub.s32 %s19, 2
      // Predicated region
      $region81: #{decoder_forward.1} parent=79 // pred_check
        %p4533 = pneg %p326
      $region82: #{decoder_forward.1} parent=79 // pred_check_branch
        %4535 = sbr.rel (%p4533) target = $region84
      $region83: #{decoder_forward.1} parent=79 // pred_region
        %p4536 = scmp.lt.s32.totalorder %s25, 1
        %s4537 = scalar_select %p4536, %s25, 1
        %s4538 = smul.addr %s4537, 8
        %s4539 = smul.addr %s4538, 8
        %s4540 = scalar_lea.vmem %s13, %s4539
      $region84: #{decoder_forward.1} parent=79 // pred_fallthru
        _
    $region80: #{decoder_forward.1} parent=5 // pred_fallthru
      _
  $region6: #{decoder_forward.1} parent=0 // loop_footer
    %s23 = sadd.s32 1, %s19
  $region7: #{decoder_forward.1} parent=0 // loop_footer_branch
    %18 = sbr.rel target = $region3
  $region8: #{decoder_forward.1} parent=0 // loop_exit
    _

</llo_original>
